<compile_context>
chip_gen: v7x
topology: tpu7x:2x2x1
jax: 0.10.0
libtpu: 0.0.40
codegen_flags: <defaults>
</compile_context>

<pallas_src>
import functools
import math

import jax
import jax.numpy as jnp
from jax.experimental import pallas as pl
from jax.experimental.pallas import tpu as pltpu


# ---------------------------------------------------------------------------
# Kernel
# ---------------------------------------------------------------------------
def _pairwise_mlp_kernel(ph_ref, pm_ref, b1_ref, g_ref, bt_ref, w2_ref, b2_ref,
                         out_ref, *, eps, compute_dtype, lane_dense):
    # ph_ref: (TI, P)  head tile of proj = x @ W1
    # pm_ref: (TJ, P)  mod tile of the same projection
    # b1_ref/g_ref/bt_ref: (1, P)   first-linear bias, LayerNorm gamma / beta
    # w2_ref: (P, L), b2_ref: (1, L)
    # out_ref: (TI, TJ*L) if lane_dense else (TI, TJ, L)
    f32 = jnp.float32
    head = ph_ref[...] + b1_ref[...]                  # fold b1 once, (TI, P) f32
    pm = pm_ref[...]                                  # (TJ, P) f32
    ti, p = head.shape
    tj = pm.shape[0]
    inv_p = 1.0 / p

    # --- closed-form LayerNorm statistics (all f32, no per-pair reductions) ---
    mh = jnp.sum(head, axis=-1, keepdims=True) * inv_p           # (TI, 1)
    sh = jnp.sum(head * head, axis=-1, keepdims=True) * inv_p    # (TI, 1)
    dim_nums = (((1,), (1,)), ((), ()))                          # contract on P
    ones_row = jnp.ones((1, p), f32)
    # Mod-side moments computed lane-major via tiny MXU matmuls (no relayout).
    mm = jax.lax.dot_general(ones_row, pm, dim_nums,
                             preferred_element_type=f32) * inv_p         # (1, TJ)
    sm = jax.lax.dot_general(ones_row, pm * pm, dim_nums,
                             preferred_element_type=f32) * inv_p         # (1, TJ)
    cross = jax.lax.dot_general(head, pm, dim_nums,
                                preferred_element_type=f32)              # (TI, TJ)
    mu = mh + mm                                                         # (TI, TJ)
    ex2 = sh + sm + (2.0 * inv_p) * cross
    var = jnp.maximum(ex2 - mu * mu, 0.0)            # clamp: E[h^2]-mu^2 form
    inv = jax.lax.rsqrt(var + eps)                   # (TI, TJ), EUP

    # --- single fused elementwise pass (optionally bf16 on v6e/v7x) ---
    cd = compute_dtype
    scale = inv.astype(cd)[:, :, None]               # (TI, TJ, 1)
    shift = (-mu * inv).astype(cd)[:, :, None]       # (TI, TJ, 1)
    g = g_ref[...].astype(cd)[None, :, :]            # (1, 1, P)
    bt = bt_ref[...].astype(cd)[None, :, :]          # (1, 1, P)
    h = head.astype(cd)[:, None, :] + pm.astype(cd)[None, :, :]   # (TI, TJ, P)
    act = jnp.maximum((h * scale + shift) * g + bt, 0.0)          # relu, dtype cd

    # --- output projection on the MXU (f32 accumulate) ---
    out = jnp.dot(act.reshape(ti * tj, p), w2_ref[...].astype(cd),
                  preferred_element_type=f32) + b2_ref[...]       # (TI*TJ, L)
    n_labels = out.shape[-1]
    if lane_dense:
        # Fold (mod, label) onto the lane axis -> unmasked full-width stores.
        # TODO(synk): verify via bundle dump that this sublane->lane fold stays
        # cheap for very small L; the 3-D fallback path covers rejection.
        out_ref[...] = out.reshape(ti, tj * n_labels).astype(out_ref.dtype)
    else:
        out_ref[...] = out.reshape(ti, tj, n_labels).astype(out_ref.dtype)


# ---------------------------------------------------------------------------
# Per-generation sizing helpers
# ---------------------------------------------------------------------------
def _round_up(n, m):
    return ((n + m - 1) // m) * m


def _vmem_budget_bytes():
    """Scoped-VMEM budget derived from the chip (v7x: 64 MiB/TC, v5e/v6e: 128)."""
    cap = None
    try:
        cap = int(pltpu.get_tpu_info().vmem_capacity_bytes)
    except Exception:
        cap = None
    if not cap:
        kind = ""
        try:
            kind = jax.devices()[0].device_kind.lower()
        except Exception:
            pass
        cap = 64 * 2**20 if "v7" in kind else 128 * 2**20
    return min(int(cap * 0.70), 100 * 2**20)


def default_compute_dtype():
    """bf16 elementwise path on v6e/v7x (2x VPU width, half the VMEM temps);
    f32 on v5e (no bf16 VPU) and unknown chips."""
    try:
        kind = jax.devices()[0].device_kind.lower()
    except Exception:
        kind = ""
    return jnp.bfloat16 if ("v6" in kind or "v7" in kind) else jnp.float32


def _step_bytes(ti, tj, proj_dim, n_labels, bytes_cd):
    """Rough per-grid-step VMEM footprint: ~3 live (TI,TJ,P) temporaries plus
    double-buffered input/output blocks and the broadcast parameters."""
    tmp = 3 * ti * tj * proj_dim * bytes_cd
    io = 2 * (ti + tj) * proj_dim * 4 + 2 * ti * tj * n_labels * 4
    const = 2 * (4 * proj_dim + proj_dim * n_labels + n_labels) * 4
    return tmp + io + const


def _select_tiles(n_pad, proj_dim, n_labels, bytes_cd, budget, lane_dense):
    """Largest aligned (ti, tj) dividing n_pad whose step footprint fits the
    VMEM budget (with slack for pipelining / compiler scratch)."""
    align_j = math.lcm(8, 128 // math.gcd(n_labels, 128)) if lane_dense else 8
    limit = int(budget * 0.45)
    ti_cands = [t for t in range(8, min(n_pad, 128) + 1, 8) if n_pad % t == 0] or [n_pad]
    tj_cands = [t for t in range(align_j, min(n_pad, 512) + 1, align_j)
                if n_pad % t == 0] or [n_pad]
    best = (ti_cands[0], tj_cands[0])
    best_sz = -1
    for ti in ti_cands:
        for tj in tj_cands:
            if (_step_bytes(ti, tj, proj_dim, n_labels, bytes_cd) <= limit
                    and ti * tj > best_sz):
                best, best_sz = (ti, tj), ti * tj
    return best


# ---------------------------------------------------------------------------
# Wrapper
# ---------------------------------------------------------------------------
@functools.partial(
    jax.jit,
    static_argnames=("tile_heads", "tile_mods", "compute_dtype",
                     "lane_dense_output", "eps", "mod_tile_buffers"))
def batched_mlp_forward(x, w1, b1, gamma, beta, w2, b2, *,
                        tile_heads=None, tile_mods=None,
                        compute_dtype=jnp.float32,
                        lane_dense_output=True, eps=1e-5,
                        mod_tile_buffers=None):
    """x: (batch, n_words, input_dim) or (n_words, input_dim). Returns
    (batch, n_words, n_words, n_labels) (batch dim dropped if x was 2-D)."""
    squeeze_batch = x.ndim == 2
    if squeeze_batch:
        x = x[None]
    bsz, n_words, _ = x.shape
    proj_dim = w1.shape[1]
    n_labels = w2.shape[1]

    # Hoisted first linear: (x_i + x_j) @ W1 + b1 = (x @ W1)_i + (x @ W1)_j + b1
    proj = jnp.einsum("bnd,dp->bnp", x, w1).astype(jnp.float32)       # (B, N, P)

    # Pad the word axis so tuned, aligned tiles always apply (zero rows are
    # LayerNorm-safe after the var clamp and get sliced off below).
    lane_dense = lane_dense_output
    align_j = math.lcm(8, 128 // math.gcd(n_labels, 128)) if lane_dense else 8
    n_pad = max(_round_up(n_words, align_j), align_j)
    if n_pad != n_words:
        proj = jnp.pad(proj, ((0, 0), (0, n_pad - n_words), (0, 0)))

    budget = _vmem_budget_bytes()
    bytes_cd = jnp.dtype(compute_dtype).itemsize
    auto_ti, auto_tj = _select_tiles(n_pad, proj_dim, n_labels, bytes_cd,
                                     budget, lane_dense)
    ti = tile_heads if tile_heads is not None else auto_ti
    tj = tile_mods if tile_mods is not None else auto_tj

    assert n_pad % ti == 0 and (ti % 8 == 0 or ti == n_pad), (ti, n_pad)
    assert n_pad % tj == 0 and (tj % 8 == 0 or tj == n_pad), (tj, n_pad)
    if lane_dense:
        assert (tj * n_labels) % 128 == 0 or tj == n_pad, (tj, n_labels)

    grid = (bsz, n_pad // ti, n_pad // tj)     # batch / head tile / mod tile

    kernel = functools.partial(_pairwise_mlp_kernel, eps=eps,
                               compute_dtype=compute_dtype,
                               lane_dense=lane_dense)

    const = lambda b, i, j: (0, 0)
    pm_kwargs = {}
    if mod_tile_buffers is not None:           # deepen pm prefetch if DMA-exposed
        pm_kwargs["pipeline_mode"] = pl.Buffered(mod_tile_buffers)
    in_specs = [
        pl.BlockSpec((None, ti, proj_dim), lambda b, i, j: (b, i, 0)),   # head tile
        pl.BlockSpec((None, tj, proj_dim), lambda b, i, j: (b, j, 0),    # mod tile
                     **pm_kwargs),
        pl.BlockSpec((1, proj_dim), const),            # b1
        pl.BlockSpec((1, proj_dim), const),            # gamma
        pl.BlockSpec((1, proj_dim), const),            # beta
        pl.BlockSpec((proj_dim, n_labels), const),     # w2
        pl.BlockSpec((1, n_labels), const),            # b2
    ]
    if lane_dense:
        out_shape = jax.ShapeDtypeStruct((bsz, n_pad, n_pad * n_labels), jnp.float32)
        out_spec = pl.BlockSpec((None, ti, tj * n_labels), lambda b, i, j: (b, i, j))
    else:
        out_shape = jax.ShapeDtypeStruct((bsz, n_pad, n_pad, n_labels), jnp.float32)
        out_spec = pl.BlockSpec((None, ti, tj, n_labels), lambda b, i, j: (b, i, j, 0))

    out = pl.pallas_call(
        kernel,
        out_shape=out_shape,
        grid_spec=pltpu.PrefetchScalarGridSpec(
            num_scalar_prefetch=0,
            grid=grid,
            in_specs=in_specs,
            out_specs=out_spec,
        ),
        compiler_params=pltpu.CompilerParams(
            dimension_semantics=("parallel", "parallel", "parallel"),
            vmem_limit_bytes=budget),
    )(proj, proj, b1, gamma, beta, w2, b2)

    # Zero-cost reshape for the lane-dense layout (same row-major bytes),
    # then drop padded rows/columns.
    out = out.reshape(bsz, n_pad, n_pad, n_labels)[:, :n_words, :n_words, :]
    if squeeze_batch:
        out = out[0]
    return out


# ---------------------------------------------------------------------------
# Parameters & pure-JAX reference
# ---------------------------------------------------------------------------
def make_params(key, input_dim, proj_dim, n_labels):
    """Deterministic parameters with the module's shapes (init details don't
    affect the forward-pass check)."""
    k1, k2, k3, k4 = jax.random.split(key, 4)
    a1 = 1.0 / math.sqrt(input_dim)
    w1 = jax.random.uniform(k1, (input_dim, proj_dim), jnp.float32, -a1, a1)
    b1 = jax.random.uniform(k2, (1, proj_dim), jnp.float32, -a1, a1)
    gamma = jnp.ones((1, proj_dim), jnp.float32)
    beta = jnp.zeros((1, proj_dim), jnp.float32)
    a2 = 1.0 / math.sqrt(proj_dim)
    w2 = jax.random.uniform(k3, (proj_dim, n_labels), jnp.float32, -a2, a2)
    b2 = jax.random.uniform(k4, (1, n_labels), jnp.float32, -a2, a2)
    return w1, b1, gamma, beta, w2, b2


def reference_forward(x, w1, b1, gamma, beta, w2, b2, eps=1e-5):
    """Pure-JAX reference matching the PyTorch module (2-D or 3-D input)."""
    s = x[..., :, None, :] + x[..., None, :, :]       # pairwise sum
    h = s @ w1 + b1                                   # Linear
    mu = h.mean(axis=-1, keepdims=True)               # LayerNorm
    var = ((h - mu) ** 2).mean(axis=-1, keepdims=True)
    h = (h - mu) / jnp.sqrt(var + eps) * gamma + beta
    h = jnp.maximum(h, 0.0)                           # ReLU
    return h @ w2 + b2                                # Linear


# ---------------------------------------------------------------------------
# Self-test
# ---------------------------------------------------------------------------
if __name__ == "__main__":
    input_dim, proj_dim, n_labels = 32, 32, 8
    batch, n_words = 2, 32

    key = jax.random.PRNGKey(0)
    kx, kp, kx2 = jax.random.split(key, 3)
    xb = jax.random.normal(kx, (batch, n_words, input_dim), jnp.float32)
    params = make_params(kp, input_dim, proj_dim, n_labels)

    def run(x_in, **kw):
        try:
            return jax.block_until_ready(batched_mlp_forward(x_in, *params, **kw))
        except Exception:
            # Fallback for Mosaic versions that reject the in-kernel
            # (TI*TJ, L) -> (TI, TJ*L) fold; identical math, 3-D output layout.
            kw = dict(kw, lane_dense_output=False)
            return jax.block_until_ready(batched_mlp_forward(x_in, *params, **kw))

    ref_b = reference_forward(xb, *params)

    # 1) f32, auto (VMEM-budgeted) tiles, explicit batch grid axis.
    out = run(xb)
    assert out.shape == (batch, n_words, n_words, n_labels)
    assert jnp.allclose(out, ref_b, atol=2e-4, rtol=2e-4), \
        float(jnp.max(jnp.abs(out - ref_b)))

    # 2) f32, explicit small tiles -> multi-step (batch, 4, 2) grid.
    out_t = run(xb, tile_heads=8, tile_mods=16)
    assert jnp.allclose(out_t, ref_b, atol=2e-4, rtol=2e-4)

    # 3) per-generation default compute dtype (bf16 on v6e/v7x, f32 on v5e).
    auto_cd = default_compute_dtype()
    out_a = run(xb, compute_dtype=auto_cd)
    tol = 2e-4 if auto_cd == jnp.float32 else 5e-2
    assert jnp.allclose(out_a, ref_b, atol=tol, rtol=tol)
    if auto_cd != jnp.bfloat16:
        # Exercise the bf16 elementwise path even on f32-default chips.
        out_bf = run(xb, compute_dtype=jnp.bfloat16)
        assert jnp.allclose(out_bf, ref_b, atol=5e-2, rtol=5e-2)

    # 4) single sentence with n_words not tile-aligned -> wrapper padding path.
    x_odd = jax.random.normal(kx2, (20, input_dim), jnp.float32)
    ref_odd = reference_forward(x_odd, *params)
    out_odd = run(x_odd)
    assert out_odd.shape == (20, 20, n_labels)
    assert jnp.allclose(out_odd, ref_odd, atol=2e-4, rtol=2e-4)

    print("KERNEL_OK")
</pallas_src>

<mosaic_0001>
module attributes {stable_mosaic.version = 11 : i64} {
  func.func @_pairwise_mlp_kernel(%arg0: i32, %arg1: i32, %arg2: i32, %arg3: memref<1x32x32xf32, #tpu.memory_space<vmem>>, %arg4: memref<1x32x32xf32, #tpu.memory_space<vmem>>, %arg5: memref<1x32xf32, #tpu.memory_space<vmem>>, %arg6: memref<1x32xf32, #tpu.memory_space<vmem>>, %arg7: memref<1x32xf32, #tpu.memory_space<vmem>>, %arg8: memref<32x8xf32, #tpu.memory_space<vmem>>, %arg9: memref<1x8xf32, #tpu.memory_space<vmem>>, %arg10: memref<1x32x256xf32, #tpu.memory_space<vmem>>) attributes {dimension_semantics = [#tpu.dimension_semantics<parallel>, #tpu.dimension_semantics<parallel>, #tpu.dimension_semantics<parallel>], iteration_bounds = array<i64: 2, 1, 1>, scalar_prefetch = 0 : i64, scratch_operands = 0 : i64, tpu.core_type = #tpu.core_type<tc>, window_params = [{transform_indices = @transform_0, window_bounds = array<i64: 1, 32, 32>}, {transform_indices = @transform_1, window_bounds = array<i64: 1, 32, 32>}, {pipeline_mode = #tpu.pipeline_mode<synchronous>, transform_indices = @transform_2, window_bounds = array<i64: 1, 32>}, {pipeline_mode = #tpu.pipeline_mode<synchronous>, transform_indices = @transform_3, window_bounds = array<i64: 1, 32>}, {pipeline_mode = #tpu.pipeline_mode<synchronous>, transform_indices = @transform_4, window_bounds = array<i64: 1, 32>}, {pipeline_mode = #tpu.pipeline_mode<synchronous>, transform_indices = @transform_5, window_bounds = array<i64: 32, 8>}, {pipeline_mode = #tpu.pipeline_mode<synchronous>, transform_indices = @transform_6, window_bounds = array<i64: 1, 8>}, {transform_indices = @transform_7, window_bounds = array<i64: 1, 32, 256>}]} {
    %c0 = arith.constant 0 : index
    %c0_0 = arith.constant 0 : index
    %c0_1 = arith.constant 0 : index
    %0 = vector.load %arg3[%c0, %c0_0, %c0_1] : memref<1x32x32xf32, #tpu.memory_space<vmem>>, vector<1x32x32xf32>
    %1 = vector.shape_cast %0 : vector<1x32x32xf32> to vector<32x32xf32>
    %c0_2 = arith.constant 0 : index
    %c0_3 = arith.constant 0 : index
    %2 = vector.load %arg5[%c0_2, %c0_3] : memref<1x32xf32, #tpu.memory_space<vmem>>, vector<1x32xf32>
    %3 = vector.broadcast %2 : vector<1x32xf32> to vector<32x32xf32>
    %4 = arith.addf %1, %3 : vector<32x32xf32>
    %c0_4 = arith.constant 0 : index
    %c0_5 = arith.constant 0 : index
    %c0_6 = arith.constant 0 : index
    %5 = vector.load %arg4[%c0_4, %c0_5, %c0_6] : memref<1x32x32xf32, #tpu.memory_space<vmem>>, vector<1x32x32xf32>
    %6 = vector.shape_cast %5 : vector<1x32x32xf32> to vector<32x32xf32>
    %cst = arith.constant dense<0.000000e+00> : vector<32xf32>
    %7 = vector.multi_reduction <add>, %4, %cst [1] : vector<32x32xf32> to vector<32xf32>
    %8 = vector.shape_cast %7 : vector<32xf32> to vector<32x1xf32>
    %cst_7 = arith.constant 3.125000e-02 : f32
    %9 = vector.broadcast %cst_7 : f32 to vector<32x1xf32>
    %10 = arith.mulf %8, %9 : vector<32x1xf32>
    %11 = arith.mulf %4, %4 : vector<32x32xf32>
    %cst_8 = arith.constant dense<0.000000e+00> : vector<32xf32>
    %12 = vector.multi_reduction <add>, %11, %cst_8 [1] : vector<32x32xf32> to vector<32xf32>
    %13 = vector.shape_cast %12 : vector<32xf32> to vector<32x1xf32>
    %cst_9 = arith.constant 3.125000e-02 : f32
    %14 = vector.broadcast %cst_9 : f32 to vector<32x1xf32>
    %15 = arith.mulf %13, %14 : vector<32x1xf32>
    %cst_10 = arith.constant 1.000000e+00 : f32
    %16 = vector.broadcast %cst_10 : f32 to vector<1x32xf32>
    %cst_11 = arith.constant dense<0.000000e+00> : vector<1x32xf32>
    %17 = tpu.matmul %16, %6, %cst_11 {dimension_numbers = #tpu.dot_dimension_numbers<[1], [1], [0], [0], [0, 0, 1, 0], [], []>} : vector<1x32xf32>, vector<32x32xf32>, vector<1x32xf32> -> vector<1x32xf32>
    %cst_12 = arith.constant 3.125000e-02 : f32
    %18 = vector.broadcast %cst_12 : f32 to vector<1x32xf32>
    %19 = arith.mulf %17, %18 : vector<1x32xf32>
    %20 = arith.mulf %6, %6 : vector<32x32xf32>
    %cst_13 = arith.constant dense<0.000000e+00> : vector<1x32xf32>
    %21 = tpu.matmul %16, %20, %cst_13 {dimension_numbers = #tpu.dot_dimension_numbers<[1], [1], [0], [0], [0, 0, 1, 0], [], []>} : vector<1x32xf32>, vector<32x32xf32>, vector<1x32xf32> -> vector<1x32xf32>
    %cst_14 = arith.constant 3.125000e-02 : f32
    %22 = vector.broadcast %cst_14 : f32 to vector<1x32xf32>
    %23 = arith.mulf %21, %22 : vector<1x32xf32>
    %cst_15 = arith.constant dense<0.000000e+00> : vector<32x32xf32>
    %24 = tpu.matmul %4, %6, %cst_15 {dimension_numbers = #tpu.dot_dimension_numbers<[1], [1], [0], [0], [0, 0, 1, 0], [], []>} : vector<32x32xf32>, vector<32x32xf32>, vector<32x32xf32> -> vector<32x32xf32>
    %25 = vector.broadcast %10 : vector<32x1xf32> to vector<32x32xf32>
    %26 = vector.broadcast %19 : vector<1x32xf32> to vector<32x32xf32>
    %27 = arith.addf %25, %26 : vector<32x32xf32>
    %28 = vector.broadcast %15 : vector<32x1xf32> to vector<32x32xf32>
    %29 = vector.broadcast %23 : vector<1x32xf32> to vector<32x32xf32>
    %30 = arith.addf %28, %29 : vector<32x32xf32>
    %cst_16 = arith.constant 6.250000e-02 : f32
    %31 = vector.broadcast %cst_16 : f32 to vector<32x32xf32>
    %32 = arith.mulf %31, %24 : vector<32x32xf32>
    %33 = arith.addf %30, %32 : vector<32x32xf32>
    %34 = arith.mulf %27, %27 : vector<32x32xf32>
    %35 = arith.subf %33, %34 : vector<32x32xf32>
    %cst_17 = arith.constant 0.000000e+00 : f32
    %36 = vector.broadcast %cst_17 : f32 to vector<32x32xf32>
    %37 = arith.maximumf %35, %36 : vector<32x32xf32>
    %cst_18 = arith.constant 9.99999974E-6 : f32
    %38 = vector.broadcast %cst_18 : f32 to vector<32x32xf32>
    %39 = arith.addf %37, %38 : vector<32x32xf32>
    %40 = math.rsqrt %39 : vector<32x32xf32>
    %41 = vector.shape_cast %40 : vector<32x32xf32> to vector<32x32x1xf32>
    %cst_19 = arith.constant 0.000000e+00 : f32
    %42 = vector.broadcast %cst_19 : f32 to vector<32x32xf32>
    %43 = arith.subf %42, %27 : vector<32x32xf32>
    %44 = arith.mulf %43, %40 : vector<32x32xf32>
    %45 = vector.shape_cast %44 : vector<32x32xf32> to vector<32x32x1xf32>
    %c0_20 = arith.constant 0 : index
    %c0_21 = arith.constant 0 : index
    %46 = vector.load %arg6[%c0_20, %c0_21] : memref<1x32xf32, #tpu.memory_space<vmem>>, vector<1x32xf32>
    %47 = vector.shape_cast %46 : vector<1x32xf32> to vector<1x1x32xf32>
    %c0_22 = arith.constant 0 : index
    %c0_23 = arith.constant 0 : index
    %48 = vector.load %arg7[%c0_22, %c0_23] : memref<1x32xf32, #tpu.memory_space<vmem>>, vector<1x32xf32>
    %49 = vector.shape_cast %48 : vector<1x32xf32> to vector<1x1x32xf32>
    %50 = vector.shape_cast %4 : vector<32x32xf32> to vector<32x1x32xf32>
    %51 = vector.shape_cast %6 : vector<32x32xf32> to vector<1x32x32xf32>
    %52 = vector.broadcast %50 : vector<32x1x32xf32> to vector<32x32x32xf32>
    %53 = vector.broadcast %51 : vector<1x32x32xf32> to vector<32x32x32xf32>
    %54 = arith.addf %52, %53 : vector<32x32x32xf32>
    %55 = vector.broadcast %41 : vector<32x32x1xf32> to vector<32x32x32xf32>
    %56 = arith.mulf %54, %55 : vector<32x32x32xf32>
    %57 = vector.broadcast %45 : vector<32x32x1xf32> to vector<32x32x32xf32>
    %58 = arith.addf %56, %57 : vector<32x32x32xf32>
    %59 = vector.broadcast %47 : vector<1x1x32xf32> to vector<32x32x32xf32>
    %60 = arith.mulf %58, %59 : vector<32x32x32xf32>
    %61 = vector.broadcast %49 : vector<1x1x32xf32> to vector<32x32x32xf32>
    %62 = arith.addf %60, %61 : vector<32x32x32xf32>
    %cst_24 = arith.constant 0.000000e+00 : f32
    %63 = vector.broadcast %cst_24 : f32 to vector<32x32x32xf32>
    %64 = arith.maximumf %62, %63 : vector<32x32x32xf32>
    %65 = vector.shape_cast %64 : vector<32x32x32xf32> to vector<1024x32xf32>
    %c0_25 = arith.constant 0 : index
    %c0_26 = arith.constant 0 : index
    %66 = vector.load %arg8[%c0_25, %c0_26] : memref<32x8xf32, #tpu.memory_space<vmem>>, vector<32x8xf32>
    %cst_27 = arith.constant dense<0.000000e+00> : vector<1024x8xf32>
    %67 = tpu.matmul %65, %66, %cst_27 {dimension_numbers = #tpu.dot_dimension_numbers<[1], [0], [0], [1], [0, 0, 1, 1], [], []>} : vector<1024x32xf32>, vector<32x8xf32>, vector<1024x8xf32> -> vector<1024x8xf32>
    %c0_28 = arith.constant 0 : index
    %c0_29 = arith.constant 0 : index
    %68 = vector.load %arg9[%c0_28, %c0_29] : memref<1x8xf32, #tpu.memory_space<vmem>>, vector<1x8xf32>
    %69 = vector.broadcast %68 : vector<1x8xf32> to vector<1024x8xf32>
    %70 = arith.addf %67, %69 : vector<1024x8xf32>
    %71 = vector.shape_cast %70 : vector<1024x8xf32> to vector<32x256xf32>
    %c0_30 = arith.constant 0 : index
    %c0_31 = arith.constant 0 : index
    %c0_32 = arith.constant 0 : index
    %72 = vector.load %arg10[%c0_30, %c0_31, %c0_32] : memref<1x32x256xf32, #tpu.memory_space<vmem>>, vector<1x32x256xf32>
    %73 = vector.shape_cast %72 : vector<1x32x256xf32> to vector<32x256xf32>
    %74 = vector.shape_cast %71 : vector<32x256xf32> to vector<1x32x256xf32>
    tpu.vector_store %arg10[%c0_30, %c0_31, %c0_32], %74 {strides = array<i32>} : memref<1x32x256xf32, #tpu.memory_space<vmem>>, vector<1x32x256xf32>,
    return
  }
  func.func @transform_0(%arg0: i32, %arg1: i32, %arg2: i32) -> (i32, i32, i32) {
    %c0_i32 = arith.constant 0 : i32
    %c0_i32_0 = arith.constant 0 : i32
    return %arg0, %arg1, %c0_i32 : i32, i32, i32
  }
  func.func @transform_1(%arg0: i32, %arg1: i32, %arg2: i32) -> (i32, i32, i32) {
    %c0_i32 = arith.constant 0 : i32
    %c0_i32_0 = arith.constant 0 : i32
    return %arg0, %arg2, %c0_i32 : i32, i32, i32
  }
  func.func @transform_2(%arg0: i32, %arg1: i32, %arg2: i32) -> (i32, i32) {
    %c0_i32 = arith.constant 0 : i32
    %c0_i32_0 = arith.constant 0 : i32
    %c0_i32_1 = arith.constant 0 : i32
    return %c0_i32, %c0_i32_0 : i32, i32
  }
  func.func @transform_3(%arg0: i32, %arg1: i32, %arg2: i32) -> (i32, i32) {
    %c0_i32 = arith.constant 0 : i32
    %c0_i32_0 = arith.constant 0 : i32
    %c0_i32_1 = arith.constant 0 : i32
    return %c0_i32, %c0_i32_0 : i32, i32
  }
  func.func @transform_4(%arg0: i32, %arg1: i32, %arg2: i32) -> (i32, i32) {
    %c0_i32 = arith.constant 0 : i32
    %c0_i32_0 = arith.constant 0 : i32
    %c0_i32_1 = arith.constant 0 : i32
    return %c0_i32, %c0_i32_0 : i32, i32
  }
  func.func @transform_5(%arg0: i32, %arg1: i32, %arg2: i32) -> (i32, i32) {
    %c0_i32 = arith.constant 0 : i32
    %c0_i32_0 = arith.constant 0 : i32
    %c0_i32_1 = arith.constant 0 : i32
    return %c0_i32, %c0_i32_0 : i32, i32
  }
  func.func @transform_6(%arg0: i32, %arg1: i32, %arg2: i32) -> (i32, i32) {
    %c0_i32 = arith.constant 0 : i32
    %c0_i32_0 = arith.constant 0 : i32
    %c0_i32_1 = arith.constant 0 : i32
    return %c0_i32, %c0_i32_0 : i32, i32
  }
  func.func @transform_7(%arg0: i32, %arg1: i32, %arg2: i32) -> (i32, i32, i32) {
    %c0_i32 = arith.constant 0 : i32
    return %arg0, %arg1, %arg2 : i32, i32, i32
  }
}

module attributes {stable_mosaic.version = 11 : i64} {
  func.func @_pairwise_mlp_kernel(%arg0: i32, %arg1: i32, %arg2: i32, %arg3: memref<1x32x32xf32, #tpu.memory_space<vmem>>, %arg4: memref<1x32x32xf32, #tpu.memory_space<vmem>>, %arg5: memref<1x32xf32, #tpu.memory_space<vmem>>, %arg6: memref<1x32xf32, #tpu.memory_space<vmem>>, %arg7: memref<1x32xf32, #tpu.memory_space<vmem>>, %arg8: memref<32x8xf32, #tpu.memory_space<vmem>>, %arg9: memref<1x8xf32, #tpu.memory_space<vmem>>, %arg10: memref<1x32x32x8xf32, #tpu.memory_space<vmem>>) attributes {dimension_semantics = [#tpu.dimension_semantics<parallel>, #tpu.dimension_semantics<parallel>, #tpu.dimension_semantics<parallel>], iteration_bounds = array<i64: 2, 1, 1>, scalar_prefetch = 0 : i64, scratch_operands = 0 : i64, tpu.core_type = #tpu.core_type<tc>, window_params = [{transform_indices = @transform_0, window_bounds = array<i64: 1, 32, 32>}, {transform_indices = @transform_1, window_bounds = array<i64: 1, 32, 32>}, {pipeline_mode = #tpu.pipeline_mode<synchronous>, transform_indices = @transform_2, window_bounds = array<i64: 1, 32>}, {pipeline_mode = #tpu.pipeline_mode<synchronous>, transform_indices = @transform_3, window_bounds = array<i64: 1, 32>}, {pipeline_mode = #tpu.pipeline_mode<synchronous>, transform_indices = @transform_4, window_bounds = array<i64: 1, 32>}, {pipeline_mode = #tpu.pipeline_mode<synchronous>, transform_indices = @transform_5, window_bounds = array<i64: 32, 8>}, {pipeline_mode = #tpu.pipeline_mode<synchronous>, transform_indices = @transform_6, window_bounds = array<i64: 1, 8>}, {transform_indices = @transform_7, window_bounds = array<i64: 1, 32, 32, 8>}]} {
    %c0 = arith.constant 0 : index
    %c0_0 = arith.constant 0 : index
    %c0_1 = arith.constant 0 : index
    %0 = vector.load %arg3[%c0, %c0_0, %c0_1] : memref<1x32x32xf32, #tpu.memory_space<vmem>>, vector<1x32x32xf32>
    %1 = vector.shape_cast %0 : vector<1x32x32xf32> to vector<32x32xf32>
    %c0_2 = arith.constant 0 : index
    %c0_3 = arith.constant 0 : index
    %2 = vector.load %arg5[%c0_2, %c0_3] : memref<1x32xf32, #tpu.memory_space<vmem>>, vector<1x32xf32>
    %3 = vector.broadcast %2 : vector<1x32xf32> to vector<32x32xf32>
    %4 = arith.addf %1, %3 : vector<32x32xf32>
    %c0_4 = arith.constant 0 : index
    %c0_5 = arith.constant 0 : index
    %c0_6 = arith.constant 0 : index
    %5 = vector.load %arg4[%c0_4, %c0_5, %c0_6] : memref<1x32x32xf32, #tpu.memory_space<vmem>>, vector<1x32x32xf32>
    %6 = vector.shape_cast %5 : vector<1x32x32xf32> to vector<32x32xf32>
    %cst = arith.constant dense<0.000000e+00> : vector<32xf32>
    %7 = vector.multi_reduction <add>, %4, %cst [1] : vector<32x32xf32> to vector<32xf32>
    %8 = vector.shape_cast %7 : vector<32xf32> to vector<32x1xf32>
    %cst_7 = arith.constant 3.125000e-02 : f32
    %9 = vector.broadcast %cst_7 : f32 to vector<32x1xf32>
    %10 = arith.mulf %8, %9 : vector<32x1xf32>
    %11 = arith.mulf %4, %4 : vector<32x32xf32>
    %cst_8 = arith.constant dense<0.000000e+00> : vector<32xf32>
    %12 = vector.multi_reduction <add>, %11, %cst_8 [1] : vector<32x32xf32> to vector<32xf32>
    %13 = vector.shape_cast %12 : vector<32xf32> to vector<32x1xf32>
    %cst_9 = arith.constant 3.125000e-02 : f32
    %14 = vector.broadcast %cst_9 : f32 to vector<32x1xf32>
    %15 = arith.mulf %13, %14 : vector<32x1xf32>
    %cst_10 = arith.constant 1.000000e+00 : f32
    %16 = vector.broadcast %cst_10 : f32 to vector<1x32xf32>
    %cst_11 = arith.constant dense<0.000000e+00> : vector<1x32xf32>
    %17 = tpu.matmul %16, %6, %cst_11 {dimension_numbers = #tpu.dot_dimension_numbers<[1], [1], [0], [0], [0, 0, 1, 0], [], []>} : vector<1x32xf32>, vector<32x32xf32>, vector<1x32xf32> -> vector<1x32xf32>
    %cst_12 = arith.constant 3.125000e-02 : f32
    %18 = vector.broadcast %cst_12 : f32 to vector<1x32xf32>
    %19 = arith.mulf %17, %18 : vector<1x32xf32>
    %20 = arith.mulf %6, %6 : vector<32x32xf32>
    %cst_13 = arith.constant dense<0.000000e+00> : vector<1x32xf32>
    %21 = tpu.matmul %16, %20, %cst_13 {dimension_numbers = #tpu.dot_dimension_numbers<[1], [1], [0], [0], [0, 0, 1, 0], [], []>} : vector<1x32xf32>, vector<32x32xf32>, vector<1x32xf32> -> vector<1x32xf32>
    %cst_14 = arith.constant 3.125000e-02 : f32
    %22 = vector.broadcast %cst_14 : f32 to vector<1x32xf32>
    %23 = arith.mulf %21, %22 : vector<1x32xf32>
    %cst_15 = arith.constant dense<0.000000e+00> : vector<32x32xf32>
    %24 = tpu.matmul %4, %6, %cst_15 {dimension_numbers = #tpu.dot_dimension_numbers<[1], [1], [0], [0], [0, 0, 1, 0], [], []>} : vector<32x32xf32>, vector<32x32xf32>, vector<32x32xf32> -> vector<32x32xf32>
    %25 = vector.broadcast %10 : vector<32x1xf32> to vector<32x32xf32>
    %26 = vector.broadcast %19 : vector<1x32xf32> to vector<32x32xf32>
    %27 = arith.addf %25, %26 : vector<32x32xf32>
    %28 = vector.broadcast %15 : vector<32x1xf32> to vector<32x32xf32>
    %29 = vector.broadcast %23 : vector<1x32xf32> to vector<32x32xf32>
    %30 = arith.addf %28, %29 : vector<32x32xf32>
    %cst_16 = arith.constant 6.250000e-02 : f32
    %31 = vector.broadcast %cst_16 : f32 to vector<32x32xf32>
    %32 = arith.mulf %31, %24 : vector<32x32xf32>
    %33 = arith.addf %30, %32 : vector<32x32xf32>
    %34 = arith.mulf %27, %27 : vector<32x32xf32>
    %35 = arith.subf %33, %34 : vector<32x32xf32>
    %cst_17 = arith.constant 0.000000e+00 : f32
    %36 = vector.broadcast %cst_17 : f32 to vector<32x32xf32>
    %37 = arith.maximumf %35, %36 : vector<32x32xf32>
    %cst_18 = arith.constant 9.99999974E-6 : f32
    %38 = vector.broadcast %cst_18 : f32 to vector<32x32xf32>
    %39 = arith.addf %37, %38 : vector<32x32xf32>
    %40 = math.rsqrt %39 : vector<32x32xf32>
    %41 = vector.shape_cast %40 : vector<32x32xf32> to vector<32x32x1xf32>
    %cst_19 = arith.constant 0.000000e+00 : f32
    %42 = vector.broadcast %cst_19 : f32 to vector<32x32xf32>
    %43 = arith.subf %42, %27 : vector<32x32xf32>
    %44 = arith.mulf %43, %40 : vector<32x32xf32>
    %45 = vector.shape_cast %44 : vector<32x32xf32> to vector<32x32x1xf32>
    %c0_20 = arith.constant 0 : index
    %c0_21 = arith.constant 0 : index
    %46 = vector.load %arg6[%c0_20, %c0_21] : memref<1x32xf32, #tpu.memory_space<vmem>>, vector<1x32xf32>
    %47 = vector.shape_cast %46 : vector<1x32xf32> to vector<1x1x32xf32>
    %c0_22 = arith.constant 0 : index
    %c0_23 = arith.constant 0 : index
    %48 = vector.load %arg7[%c0_22, %c0_23] : memref<1x32xf32, #tpu.memory_space<vmem>>, vector<1x32xf32>
    %49 = vector.shape_cast %48 : vector<1x32xf32> to vector<1x1x32xf32>
    %50 = vector.shape_cast %4 : vector<32x32xf32> to vector<32x1x32xf32>
    %51 = vector.shape_cast %6 : vector<32x32xf32> to vector<1x32x32xf32>
    %52 = vector.broadcast %50 : vector<32x1x32xf32> to vector<32x32x32xf32>
    %53 = vector.broadcast %51 : vector<1x32x32xf32> to vector<32x32x32xf32>
    %54 = arith.addf %52, %53 : vector<32x32x32xf32>
    %55 = vector.broadcast %41 : vector<32x32x1xf32> to vector<32x32x32xf32>
    %56 = arith.mulf %54, %55 : vector<32x32x32xf32>
    %57 = vector.broadcast %45 : vector<32x32x1xf32> to vector<32x32x32xf32>
    %58 = arith.addf %56, %57 : vector<32x32x32xf32>
    %59 = vector.broadcast %47 : vector<1x1x32xf32> to vector<32x32x32xf32>
    %60 = arith.mulf %58, %59 : vector<32x32x32xf32>
    %61 = vector.broadcast %49 : vector<1x1x32xf32> to vector<32x32x32xf32>
    %62 = arith.addf %60, %61 : vector<32x32x32xf32>
    %cst_24 = arith.constant 0.000000e+00 : f32
    %63 = vector.broadcast %cst_24 : f32 to vector<32x32x32xf32>
    %64 = arith.maximumf %62, %63 : vector<32x32x32xf32>
    %65 = vector.shape_cast %64 : vector<32x32x32xf32> to vector<1024x32xf32>
    %c0_25 = arith.constant 0 : index
    %c0_26 = arith.constant 0 : index
    %66 = vector.load %arg8[%c0_25, %c0_26] : memref<32x8xf32, #tpu.memory_space<vmem>>, vector<32x8xf32>
    %cst_27 = arith.constant dense<0.000000e+00> : vector<1024x8xf32>
    %67 = tpu.matmul %65, %66, %cst_27 {dimension_numbers = #tpu.dot_dimension_numbers<[1], [0], [0], [1], [0, 0, 1, 1], [], []>} : vector<1024x32xf32>, vector<32x8xf32>, vector<1024x8xf32> -> vector<1024x8xf32>
    %c0_28 = arith.constant 0 : index
    %c0_29 = arith.constant 0 : index
    %68 = vector.load %arg9[%c0_28, %c0_29] : memref<1x8xf32, #tpu.memory_space<vmem>>, vector<1x8xf32>
    %69 = vector.broadcast %68 : vector<1x8xf32> to vector<1024x8xf32>
    %70 = arith.addf %67, %69 : vector<1024x8xf32>
    %71 = vector.shape_cast %70 : vector<1024x8xf32> to vector<32x32x8xf32>
    %c0_30 = arith.constant 0 : index
    %c0_31 = arith.constant 0 : index
    %c0_32 = arith.constant 0 : index
    %c0_33 = arith.constant 0 : index
    %72 = vector.load %arg10[%c0_30, %c0_31, %c0_32, %c0_33] : memref<1x32x32x8xf32, #tpu.memory_space<vmem>>, vector<1x32x32x8xf32>
    %73 = vector.shape_cast %72 : vector<1x32x32x8xf32> to vector<32x32x8xf32>
    %74 = vector.shape_cast %71 : vector<32x32x8xf32> to vector<1x32x32x8xf32>
    tpu.vector_store %arg10[%c0_30, %c0_31, %c0_32, %c0_33], %74 {strides = array<i32>} : memref<1x32x32x8xf32, #tpu.memory_space<vmem>>, vector<1x32x32x8xf32>,
    return
  }
  func.func @transform_0(%arg0: i32, %arg1: i32, %arg2: i32) -> (i32, i32, i32) {
    %c0_i32 = arith.constant 0 : i32
    %c0_i32_0 = arith.constant 0 : i32
    return %arg0, %arg1, %c0_i32 : i32, i32, i32
  }
  func.func @transform_1(%arg0: i32, %arg1: i32, %arg2: i32) -> (i32, i32, i32) {
    %c0_i32 = arith.constant 0 : i32
    %c0_i32_0 = arith.constant 0 : i32
    return %arg0, %arg2, %c0_i32 : i32, i32, i32
  }
  func.func @transform_2(%arg0: i32, %arg1: i32, %arg2: i32) -> (i32, i32) {
    %c0_i32 = arith.constant 0 : i32
    %c0_i32_0 = arith.constant 0 : i32
    %c0_i32_1 = arith.constant 0 : i32
    return %c0_i32, %c0_i32_0 : i32, i32
  }
  func.func @transform_3(%arg0: i32, %arg1: i32, %arg2: i32) -> (i32, i32) {
    %c0_i32 = arith.constant 0 : i32
    %c0_i32_0 = arith.constant 0 : i32
    %c0_i32_1 = arith.constant 0 : i32
    return %c0_i32, %c0_i32_0 : i32, i32
  }
  func.func @transform_4(%arg0: i32, %arg1: i32, %arg2: i32) -> (i32, i32) {
    %c0_i32 = arith.constant 0 : i32
    %c0_i32_0 = arith.constant 0 : i32
    %c0_i32_1 = arith.constant 0 : i32
    return %c0_i32, %c0_i32_0 : i32, i32
  }
  func.func @transform_5(%arg0: i32, %arg1: i32, %arg2: i32) -> (i32, i32) {
    %c0_i32 = arith.constant 0 : i32
    %c0_i32_0 = arith.constant 0 : i32
    %c0_i32_1 = arith.constant 0 : i32
    return %c0_i32, %c0_i32_0 : i32, i32
  }
  func.func @transform_6(%arg0: i32, %arg1: i32, %arg2: i32) -> (i32, i32) {
    %c0_i32 = arith.constant 0 : i32
    %c0_i32_0 = arith.constant 0 : i32
    %c0_i32_1 = arith.constant 0 : i32
    return %c0_i32, %c0_i32_0 : i32, i32
  }
  func.func @transform_7(%arg0: i32, %arg1: i32, %arg2: i32) -> (i32, i32, i32, i32) {
    %c0_i32 = arith.constant 0 : i32
    %c0_i32_0 = arith.constant 0 : i32
    return %arg0, %arg1, %arg2, %c0_i32 : i32, i32, i32, i32
  }
}

</mosaic_0001>

<llo_original>
// kernel: batched_mlp_forward.1
$region0: #{batched_mlp_forward.1}
  #allocation0 [shape = 'u32[]', space=smem, size = 0x4, offset = 0x4, fixed_abs, tag = 'smem constant byte address 0x4 - core index']
  #allocation1 [shape = 'u32[144,128]{1,0:T(1,128)}', space=vmem, size = 0x12000, scoped, tag = 'internal scratch']
  %s0 = inlined_call_operand.hbm [shape: f32[2,32,32], index: 0, kind: input, shape index: {}, may-alias: {0,1}]
  %s1 = inlined_call_operand.hbm [shape: f32[2,32,32], index: 1, kind: input, shape index: {}, may-alias: {0,1}]
  %s2 = inlined_call_operand.hbm [shape: f32[1,32], index: 2, kind: input, shape index: {}]
  %s3 = inlined_call_operand.hbm [shape: f32[1,32], index: 3, kind: input, shape index: {}]
  %s4 = inlined_call_operand.hbm [shape: f32[1,32], index: 4, kind: input, shape index: {}]
  %s5 = inlined_call_operand.hbm [shape: f32[32,8], index: 5, kind: input, shape index: {}]
  %s6 = inlined_call_operand.hbm [shape: f32[1,8], index: 6, kind: input, shape index: {}]
  %s7 = inlined_call_operand.hbm [shape: f32[2,32,32,8], index: 7, kind: output, shape index: {}]
  %s8 = sld [smem:[#allocation0]]
  $region89: #{batched_mlp_forward.1} parent=0
    _
  %s10 = ssub.s32 1, %s8
  %s11 = scalar_select 0, %s10, %s8
  $region1: #{batched_mlp_forward.1} parent=0
    #allocation2 [shape = 'u8[32768]{0}', space=vmem, size = 0x8000, scoped, tag = 'input window, operand 0']
    #allocation3 [shape = 's32[2]{0}', space=sflag, size = 0x8, scoped, tag = 'scoped memory for batched_mlp_forward.1']
    #allocation4 [shape = 's32[2]{0}', space=sflag, size = 0x8, scoped, tag = 'scoped memory for batched_mlp_forward.1']
    #allocation5 [shape = 'u8[32768]{0}', space=vmem, size = 0x8000, scoped, tag = 'input window, operand 1']
    #allocation6 [shape = 's32[2]{0}', space=sflag, size = 0x8, scoped, tag = 'scoped memory for batched_mlp_forward.1']
    #allocation7 [shape = 'u8[512]{0}', space=vmem, size = 0x400, scoped, tag = 'input window, operand 2, single buffered']
    #allocation8 [shape = 'u8[512]{0}', space=vmem, size = 0x400, scoped, tag = 'input window, operand 3, single buffered']
    #allocation9 [shape = 's32[1]{0}', space=sflag, size = 0x4, scoped, tag = 'scoped memory for batched_mlp_forward.1']
    #allocation10 [shape = 'u8[512]{0}', space=vmem, size = 0x400, scoped, tag = 'input window, operand 4, single buffered']
    #allocation11 [shape = 'u8[16384]{0}', space=vmem, size = 0x4000, scoped, tag = 'input window, operand 5, single buffered']
    #allocation12 [shape = 's32[1]{0}', space=sflag, size = 0x4, scoped, tag = 'scoped memory for batched_mlp_forward.1']
    #allocation13 [shape = 'u8[512]{0}', space=vmem, size = 0x400, scoped, tag = 'input window, operand 6, single buffered']
    #allocation14 [shape = 'u8[1048576]{0}', space=vmem, size = 0x100000, scoped, tag = 'output window, operand 0']
    %12 = vsyncpa [#allocation3], 0
    %s13 = scalar_lea.sflag [#allocation3], 1
    %14 = vsyncpa %s13, 0
    %15 = vsyncpa [#allocation6], 0
    %s16 = scalar_lea.sflag [#allocation6], 1
    %17 = vsyncpa %s16, 0
    %18 = vsyncpa [#allocation9], 0
    %19 = vsyncpa [#allocation12], 0
    %20 = vsyncpa [#allocation4], 0
    %s21 = scalar_lea.sflag [#allocation4], 1
    %22 = vsyncpa %s21, 0
    loop: start=0, step=1, limit=4
    $region2: #{batched_mlp_forward.1} parent=1 // loop_pre_header
      _
    $region3: #{batched_mlp_forward.1} parent=1 // loop_header
      %s24 = sphi 0, %s28
      %p25 = scmp.ge.s32.totalorder %s24, 4
      %s31 = sphi 0, %s50
      %s32 = sphi 0, %s46
      %s33 = sphi 0, %s42
      %s34 = sphi 0, %s31
      %s35 = sphi 0, %s32
      %s36 = sphi 0, %s33
      %s37 = sphi 0, %s34
      %s38 = sphi 0, %s35
      %s39 = sphi 0, %s36
      %s55 = sphi 0, %s57
      %s58 = sphi 0, %s55
      %s59 = sphi 0, %s58
      %s75 = sphi 0, %s59
      %s83 = sphi 0, %s85
      %s86 = sphi 0, %s83
      %s87 = sphi 0, %s86
      %s103 = sphi 0, %s87
      %s107 = sphi 0, %s107
      %s109 = sphi 0, %s107
      %s110 = sphi 0, %s109
      %s124 = sphi 0, %s110
      %s128 = sphi 0, %s128
      %s130 = sphi 0, %s128
      %s131 = sphi 0, %s130
      %s145 = sphi 0, %s131
      %s149 = sphi 0, %s149
      %s151 = sphi 0, %s149
      %s152 = sphi 0, %s151
      %s166 = sphi 0, %s152
      %s170 = sphi 0, %s170
      %s172 = sphi 0, %s170
      %s173 = sphi 0, %s172
      %s187 = sphi 0, %s173
      %s191 = sphi 0, %s191
      %s193 = sphi 0, %s191
      %s194 = sphi 0, %s193
      %s208 = sphi 0, %s194
      %s218 = sphi 0, %s220
      %s221 = sphi 0, %s218
      %s222 = sphi 0, %s221
      %s238 = sphi 0, %s222
    $region4: #{batched_mlp_forward.1} parent=1 // loop_header_branch
      %27 = sbr.rel (%p25) target = $region8
    $region5: #{batched_mlp_forward.1} parent=1 // loop_body
      %s29 = ssub.s32 %s24, 1
      %s30 = ssub.s32 %s24, 2
      %s40 = sadd.s32 1, %s33
      %p41 = scmp.ge.s32.totalorder %s40, 1
      %s42 = scalar_select %p41, 0, %s40
      %s43 = sadd.s32 1, %s32
      %s44 = scalar_select %p41, %s43, %s32
      %p45 = scmp.ge.s32.totalorder %s44, 1
      %s46 = scalar_select %p45, 0, %s44
      %s47 = sadd.s32 1, %s31
      %s48 = scalar_select %p45, %s47, %s31
      %p49 = scmp.ge.s32.totalorder %s48, 2
      %s50 = scalar_select %p49, 0, %s48
      %s51 = ssub.s32 %s31, %s50
      %s52 = ssub.s32 %s32, %s46
      %s53 = sor.u32 %s51, %s52
      %p54 = scmp.eq.s32.totalorder %s53, 0
      %s56 = sadd.s32 %s55, 1
      %s57 = scalar_select %p54, %s55, %s56
      %p60 = pneg %p54
      %p61 = scmp.eq.s32.totalorder %s24, 1
      %p62 = por %p60, %p61
      %p63 = scmp.ne.s32.totalorder %s55, %s58
      %p64 = scmp.eq.s32.totalorder %s24, 0
      %p65 = por %p63, %p64
      %p66 = scmp.ne.s32.totalorder %s55, %s58
      %p67 = scmp.eq.s32.totalorder %s29, 1
      %p68 = por %p66, %p67
      %p69 = scmp.ne.s32.totalorder %s58, %s59
      %p70 = scmp.eq.s32.totalorder %s29, 0
      %p71 = por %p69, %p70
      %p72 = scmp.ne.s32.totalorder %s58, %s59
      %p73 = scmp.eq.s32.totalorder %s30, 1
      %p74 = por %p72, %p73
      %p76 = scmp.ne.s32.totalorder %s59, %s75
      %p77 = scmp.eq.s32.totalorder %s30, 0
      %p78 = por %p76, %p77
      %s79 = ssub.s32 %s31, %s50
      %s80 = ssub.s32 %s33, %s42
      %s81 = sor.u32 %s79, %s80
      %p82 = scmp.eq.s32.totalorder %s81, 0
      %s84 = sadd.s32 %s83, 1
      %s85 = scalar_select %p82, %s83, %s84
      %p88 = pneg %p82
      %p89 = scmp.eq.s32.totalorder %s24, 1
      %p90 = por %p88, %p89
      %p91 = scmp.ne.s32.totalorder %s83, %s86
      %p92 = scmp.eq.s32.totalorder %s24, 0
      %p93 = por %p91, %p92
      %p94 = scmp.ne.s32.totalorder %s83, %s86
      %p95 = scmp.eq.s32.totalorder %s29, 1
      %p96 = por %p94, %p95
      %p97 = scmp.ne.s32.totalorder %s86, %s87
      %p98 = scmp.eq.s32.totalorder %s29, 0
      %p99 = por %p97, %p98
      %p100 = scmp.ne.s32.totalorder %s86, %s87
      %p101 = scmp.eq.s32.totalorder %s30, 1
      %p102 = por %p100, %p101
      %p104 = scmp.ne.s32.totalorder %s87, %s103
      %p105 = scmp.eq.s32.totalorder %s30, 0
      %p106 = por %p104, %p105
      %s108 = sadd.s32 %s107, 1
      %p111 = scmp.eq.s32.totalorder %s24, 1
      %p112 = scmp.ne.s32.totalorder %s107, %s109
      %p113 = scmp.eq.s32.totalorder %s24, 0
      %p114 = por %p112, %p113
      %p115 = scmp.ne.s32.totalorder %s107, %s109
      %p116 = scmp.eq.s32.totalorder %s29, 1
      %p117 = por %p115, %p116
      %p118 = scmp.ne.s32.totalorder %s109, %s110
      %p119 = scmp.eq.s32.totalorder %s29, 0
      %p120 = por %p118, %p119
      %p121 = scmp.ne.s32.totalorder %s109, %s110
      %p122 = scmp.eq.s32.totalorder %s30, 1
      %p123 = por %p121, %p122
      %p125 = scmp.ne.s32.totalorder %s110, %s124
      %p126 = scmp.eq.s32.totalorder %s30, 0
      %p127 = por %p125, %p126
      %s129 = sadd.s32 %s128, 1
      %p132 = scmp.eq.s32.totalorder %s24, 1
      %p133 = scmp.ne.s32.totalorder %s128, %s130
      %p134 = scmp.eq.s32.totalorder %s24, 0
      %p135 = por %p133, %p134
      %p136 = scmp.ne.s32.totalorder %s128, %s130
      %p137 = scmp.eq.s32.totalorder %s29, 1
      %p138 = por %p136, %p137
      %p139 = scmp.ne.s32.totalorder %s130, %s131
      %p140 = scmp.eq.s32.totalorder %s29, 0
      %p141 = por %p139, %p140
      %p142 = scmp.ne.s32.totalorder %s130, %s131
      %p143 = scmp.eq.s32.totalorder %s30, 1
      %p144 = por %p142, %p143
      %p146 = scmp.ne.s32.totalorder %s131, %s145
      %p147 = scmp.eq.s32.totalorder %s30, 0
      %p148 = por %p146, %p147
      %s150 = sadd.s32 %s149, 1
      %p153 = scmp.eq.s32.totalorder %s24, 1
      %p154 = scmp.ne.s32.totalorder %s149, %s151
      %p155 = scmp.eq.s32.totalorder %s24, 0
      %p156 = por %p154, %p155
      %p157 = scmp.ne.s32.totalorder %s149, %s151
      %p158 = scmp.eq.s32.totalorder %s29, 1
      %p159 = por %p157, %p158
      %p160 = scmp.ne.s32.totalorder %s151, %s152
      %p161 = scmp.eq.s32.totalorder %s29, 0
      %p162 = por %p160, %p161
      %p163 = scmp.ne.s32.totalorder %s151, %s152
      %p164 = scmp.eq.s32.totalorder %s30, 1
      %p165 = por %p163, %p164
      %p167 = scmp.ne.s32.totalorder %s152, %s166
      %p168 = scmp.eq.s32.totalorder %s30, 0
      %p169 = por %p167, %p168
      %s171 = sadd.s32 %s170, 1
      %p174 = scmp.eq.s32.totalorder %s24, 1
      %p175 = scmp.ne.s32.totalorder %s170, %s172
      %p176 = scmp.eq.s32.totalorder %s24, 0
      %p177 = por %p175, %p176
      %p178 = scmp.ne.s32.totalorder %s170, %s172
      %p179 = scmp.eq.s32.totalorder %s29, 1
      %p180 = por %p178, %p179
      %p181 = scmp.ne.s32.totalorder %s172, %s173
      %p182 = scmp.eq.s32.totalorder %s29, 0
      %p183 = por %p181, %p182
      %p184 = scmp.ne.s32.totalorder %s172, %s173
      %p185 = scmp.eq.s32.totalorder %s30, 1
      %p186 = por %p184, %p185
      %p188 = scmp.ne.s32.totalorder %s173, %s187
      %p189 = scmp.eq.s32.totalorder %s30, 0
      %p190 = por %p188, %p189
      %s192 = sadd.s32 %s191, 1
      %p195 = scmp.eq.s32.totalorder %s24, 1
      %p196 = scmp.ne.s32.totalorder %s191, %s193
      %p197 = scmp.eq.s32.totalorder %s24, 0
      %p198 = por %p196, %p197
      %p199 = scmp.ne.s32.totalorder %s191, %s193
      %p200 = scmp.eq.s32.totalorder %s29, 1
      %p201 = por %p199, %p200
      %p202 = scmp.ne.s32.totalorder %s193, %s194
      %p203 = scmp.eq.s32.totalorder %s29, 0
      %p204 = por %p202, %p203
      %p205 = scmp.ne.s32.totalorder %s193, %s194
      %p206 = scmp.eq.s32.totalorder %s30, 1
      %p207 = por %p205, %p206
      %p209 = scmp.ne.s32.totalorder %s194, %s208
      %p210 = scmp.eq.s32.totalorder %s30, 0
      %p211 = por %p209, %p210
      %s212 = ssub.s32 %s31, %s50
      %s213 = ssub.s32 %s32, %s46
      %s214 = sor.u32 %s212, %s213
      %s215 = ssub.s32 %s33, %s42
      %s216 = sor.u32 %s214, %s215
      %p217 = scmp.eq.s32.totalorder %s216, 0
      %s219 = sadd.s32 %s218, 1
      %s220 = scalar_select %p217, %s218, %s219
      %p223 = pneg %p217
      %p224 = scmp.eq.s32.totalorder %s24, 1
      %p225 = por %p223, %p224
      %p226 = scmp.ne.s32.totalorder %s218, %s221
      %p227 = scmp.eq.s32.totalorder %s24, 0
      %p228 = por %p226, %p227
      %p229 = scmp.ne.s32.totalorder %s218, %s221
      %p230 = scmp.eq.s32.totalorder %s29, 1
      %p231 = por %p229, %p230
      %p232 = scmp.ne.s32.totalorder %s221, %s222
      %p233 = scmp.eq.s32.totalorder %s29, 0
      %p234 = por %p232, %p233
      %p235 = scmp.ne.s32.totalorder %s221, %s222
      %p236 = scmp.eq.s32.totalorder %s30, 1
      %p237 = por %p235, %p236
      %p239 = scmp.ne.s32.totalorder %s222, %s238
      %p240 = scmp.eq.s32.totalorder %s30, 0
      %p241 = por %p239, %p240
      %p242 = scmp.le.s32.totalorder 1, %s24
      %p243 = scmp.lt.s32.totalorder %s24, 3
      %p244 = pnand %p242, %p243
      %p245 = pneg %p244
      // Predicated region
      $region9: #{batched_mlp_forward.1} parent=5 // pred_check
        _
      $region10: #{batched_mlp_forward.1} parent=5 // pred_check_branch
        %247 = sbr.rel (%p244) target = $region12
      $region11: #{batched_mlp_forward.1} parent=5 // pred_region
        %s248 = ssub.s32 %s24, 1
        // Predicated region
        $region13: #{batched_mlp_forward.1} parent=11 // pred_check
          %p249 = pneg %p120
        $region14: #{batched_mlp_forward.1} parent=11 // pred_check_branch
          %251 = sbr.rel (%p249) target = $region16
        $region15: #{batched_mlp_forward.1} parent=11 // pred_region
          %s253 = ssub.s32 16, 16
          %254 = vsyncadd [#allocation6], %s253
          %s256 = sshll.u32 [#allocation7], 4
          %s257 = int_to_ptr.vmem [resolvable:$true] %s256
          %259 = dma.hbm_to_vmem [thread:$0]  %s2, 16, %s257, [#allocation6]
        $region16: #{batched_mlp_forward.1} parent=11 // pred_fallthru
          _
        // Predicated region
        $region17: #{batched_mlp_forward.1} parent=11 // pred_check
          %p260 = pneg %p141
        $region18: #{batched_mlp_forward.1} parent=11 // pred_check_branch
          %262 = sbr.rel (%p260) target = $region20
        $region19: #{batched_mlp_forward.1} parent=11 // pred_region
          %s264 = ssub.s32 16, 16
          %265 = vsyncadd [#allocation9], %s264
          %s267 = sshll.u32 [#allocation8], 4
          %s268 = int_to_ptr.vmem [resolvable:$true] %s267
          %270 = dma.hbm_to_vmem [thread:$0]  %s3, 16, %s268, [#allocation9]
        $region20: #{batched_mlp_forward.1} parent=11 // pred_fallthru
          _
        // Predicated region
        $region21: #{batched_mlp_forward.1} parent=11 // pred_check
          %p271 = pneg %p162
        $region22: #{batched_mlp_forward.1} parent=11 // pred_check_branch
          %273 = sbr.rel (%p271) target = $region24
        $region23: #{batched_mlp_forward.1} parent=11 // pred_region
          %s275 = ssub.s32 16, 16
          %276 = vsyncadd [#allocation9], %s275
          %s278 = sshll.u32 [#allocation10], 4
          %s279 = int_to_ptr.vmem [resolvable:$true] %s278
          %281 = dma.hbm_to_vmem [thread:$0]  %s4, 16, %s279, [#allocation9]
        $region24: #{batched_mlp_forward.1} parent=11 // pred_fallthru
          _
        // Predicated region
        $region25: #{batched_mlp_forward.1} parent=11 // pred_check
          %p282 = pneg %p183
        $region26: #{batched_mlp_forward.1} parent=11 // pred_check_branch
          %284 = sbr.rel (%p282) target = $region28
        $region27: #{batched_mlp_forward.1} parent=11 // pred_region
          %s286 = ssub.s32 512, 512
          %287 = vsyncadd [#allocation12], %s286
          %s288 = sshll.u32 [#allocation11], 4
          %s289 = int_to_ptr.vmem [resolvable:$true] %s288
          %294 = dma.hbm_to_vmem [thread:$0]  %s5, 512, %s289, [#allocation12], 128, 128, 8
        $region28: #{batched_mlp_forward.1} parent=11 // pred_fallthru
          _
        // Predicated region
        $region29: #{batched_mlp_forward.1} parent=11 // pred_check
          %p295 = pneg %p204
        $region30: #{batched_mlp_forward.1} parent=11 // pred_check_branch
          %297 = sbr.rel (%p295) target = $region32
        $region31: #{batched_mlp_forward.1} parent=11 // pred_region
          %s299 = ssub.s32 16, 16
          %300 = vsyncadd [#allocation12], %s299
          %s302 = sshll.u32 [#allocation13], 4
          %s303 = int_to_ptr.vmem [resolvable:$true] %s302
          %305 = dma.hbm_to_vmem [thread:$0]  %s6, 16, %s303, [#allocation12]
        $region32: #{batched_mlp_forward.1} parent=11 // pred_fallthru
          _
      $region12: #{batched_mlp_forward.1} parent=5 // pred_fallthru
        _
      %p306 = scmp.lt.s32.totalorder %s24, 2
      // Predicated region
      $region33: #{batched_mlp_forward.1} parent=5 // pred_check
        %p307 = pneg %p306
      $region34: #{batched_mlp_forward.1} parent=5 // pred_check_branch
        %309 = sbr.rel (%p307) target = $region36
      $region35: #{batched_mlp_forward.1} parent=5 // pred_region
        // Predicated region
        $region37: #{batched_mlp_forward.1} parent=35 // pred_check
          %p310 = pneg %p65
        $region38: #{batched_mlp_forward.1} parent=35 // pred_check_branch
          %312 = sbr.rel (%p310) target = $region40
        $region39: #{batched_mlp_forward.1} parent=35 // pred_region
          %s313 = sand.u32 %s55, 1
          %s314 = scalar_lea.sflag [#allocation3], %s313
          %s315 = sand.u32 %s55, 1
          %s316 = smul.addr %s315, 32
          %s317 = scalar_lea.vmem [#allocation2], %s316
          %s318 = smul.u32 4, %s32
          %s320 = ssub.s32 512, 512
          %321 = vsyncadd %s314, %s320
          %s322 = smul.addr %s31, 4
          %s323 = sadd.s32 %s318, %s322
          %s324 = smul.addr %s323, 128
          %s325 = scalar_lea.hbm %s0, %s324
          %s326 = sshll.u32 %s317, 4
          %s327 = int_to_ptr.vmem [resolvable:$true] %s326
          %332 = dma.hbm_to_vmem [thread:$0]  %s325, 512, %s327, %s314, 128, 128, 8
        $region40: #{batched_mlp_forward.1} parent=35 // pred_fallthru
          _
        // Predicated region
        $region41: #{batched_mlp_forward.1} parent=35 // pred_check
          %p333 = pneg %p93
        $region42: #{batched_mlp_forward.1} parent=35 // pred_check_branch
          %335 = sbr.rel (%p333) target = $region44
        $region43: #{batched_mlp_forward.1} parent=35 // pred_region
          %s336 = sand.u32 %s24, 1
          %s337 = scalar_lea.sflag [#allocation6], %s336
          %s338 = sand.u32 %s83, 1
          %s339 = smul.addr %s338, 32
          %s340 = scalar_lea.vmem [#allocation5], %s339
          %s341 = smul.u32 4, %s33
          %s343 = ssub.s32 512, 512
          %344 = vsyncadd %s337, %s343
          %s345 = smul.addr %s31, 4
          %s346 = sadd.s32 %s341, %s345
          %s347 = smul.addr %s346, 128
          %s348 = scalar_lea.hbm %s1, %s347
          %s349 = sshll.u32 %s340, 4
          %s350 = int_to_ptr.vmem [resolvable:$true] %s349
          %355 = dma.hbm_to_vmem [thread:$0]  %s348, 512, %s350, %s337, 128, 128, 8
        $region44: #{batched_mlp_forward.1} parent=35 // pred_fallthru
          _
      $region36: #{batched_mlp_forward.1} parent=5 // pred_fallthru
        _
      %p356 = scmp.le.s32.totalorder 1, %s24
      %p357 = scmp.lt.s32.totalorder %s24, 3
      %p358 = pnand %p356, %p357
      %p359 = pneg %p358
      // Predicated region
      $region45: #{batched_mlp_forward.1} parent=5 // pred_check
        _
      $region46: #{batched_mlp_forward.1} parent=5 // pred_check_branch
        %361 = sbr.rel (%p358) target = $region48
      $region47: #{batched_mlp_forward.1} parent=5 // pred_region
        %s362 = ssub.s32 %s24, 1
        %s363 = sand.u32 %s58, 1
        %s364 = scalar_lea.sflag [#allocation3], %s363
        %s365 = sand.u32 %s58, 1
        %s366 = smul.addr %s365, 32
        %s367 = scalar_lea.vmem [#allocation2], %s366
        // Predicated region
        $region49: #{batched_mlp_forward.1} parent=47 // pred_check
          %p368 = pneg %p71
        $region50: #{batched_mlp_forward.1} parent=47 // pred_check_branch
          %370 = sbr.rel (%p368) target = $region52
        $region51: #{batched_mlp_forward.1} parent=47 // pred_region
          %371 = dma.done %s364, 512
        $region52: #{batched_mlp_forward.1} parent=47 // pred_fallthru
          _
        %s372 = sand.u32 %s29, 1
        %s373 = scalar_lea.sflag [#allocation6], %s372
        %s374 = sand.u32 %s86, 1
        %s375 = smul.addr %s374, 32
        %s376 = scalar_lea.vmem [#allocation5], %s375
        // Predicated region
        $region53: #{batched_mlp_forward.1} parent=47 // pred_check
          %p377 = pneg %p99
        $region54: #{batched_mlp_forward.1} parent=47 // pred_check_branch
          %379 = sbr.rel (%p377) target = $region56
        $region55: #{batched_mlp_forward.1} parent=47 // pred_region
          %380 = dma.done %s373, 512
        $region56: #{batched_mlp_forward.1} parent=47 // pred_fallthru
          _
        // Predicated region
        $region57: #{batched_mlp_forward.1} parent=47 // pred_check
          %p381 = pneg %p120
        $region58: #{batched_mlp_forward.1} parent=47 // pred_check_branch
          %383 = sbr.rel (%p381) target = $region60
        $region59: #{batched_mlp_forward.1} parent=47 // pred_region
          %384 = dma.done [#allocation6], 16
        $region60: #{batched_mlp_forward.1} parent=47 // pred_fallthru
          _
        // Predicated region
        $region61: #{batched_mlp_forward.1} parent=47 // pred_check
          %p385 = pneg %p141
        $region62: #{batched_mlp_forward.1} parent=47 // pred_check_branch
          %387 = sbr.rel (%p385) target = $region64
        $region63: #{batched_mlp_forward.1} parent=47 // pred_region
          %388 = dma.done [#allocation9], 16
        $region64: #{batched_mlp_forward.1} parent=47 // pred_fallthru
          _
        // Predicated region
        $region65: #{batched_mlp_forward.1} parent=47 // pred_check
          %p389 = pneg %p162
        $region66: #{batched_mlp_forward.1} parent=47 // pred_check_branch
          %391 = sbr.rel (%p389) target = $region68
        $region67: #{batched_mlp_forward.1} parent=47 // pred_region
          %392 = dma.done [#allocation9], 16
        $region68: #{batched_mlp_forward.1} parent=47 // pred_fallthru
          _
        // Predicated region
        $region69: #{batched_mlp_forward.1} parent=47 // pred_check
          %p393 = pneg %p183
        $region70: #{batched_mlp_forward.1} parent=47 // pred_check_branch
          %395 = sbr.rel (%p393) target = $region72
        $region71: #{batched_mlp_forward.1} parent=47 // pred_region
          %396 = dma.done [#allocation12], 512
        $region72: #{batched_mlp_forward.1} parent=47 // pred_fallthru
          _
        // Predicated region
        $region73: #{batched_mlp_forward.1} parent=47 // pred_check
          %p397 = pneg %p204
        $region74: #{batched_mlp_forward.1} parent=47 // pred_check_branch
          %399 = sbr.rel (%p397) target = $region76
        $region75: #{batched_mlp_forward.1} parent=47 // pred_region
          %400 = dma.done [#allocation12], 16
        $region76: #{batched_mlp_forward.1} parent=47 // pred_fallthru
          _
        %s401 = sand.u32 %s58, 1
        %s402 = scalar_lea.sflag [#allocation3], %s401
        %s403 = sand.u32 %s58, 1
        %s404 = smul.addr %s403, 32
        %s405 = scalar_lea.vmem [#allocation2], %s404
        %p406 = pneg %p71
        %p407 = pneg %p68
        %s408 = sand.u32 %s29, 1
        %s409 = scalar_lea.sflag [#allocation6], %s408
        %s410 = sand.u32 %s86, 1
        %s411 = smul.addr %s410, 32
        %s412 = scalar_lea.vmem [#allocation5], %s411
        %p413 = pneg %p99
        %p414 = pneg %p96
        %p415 = pneg %p120
        %p416 = pneg %p117
        %p417 = pneg %p141
        %p418 = pneg %p138
        %p419 = pneg %p162
        %p420 = pneg %p159
        %p421 = pneg %p183
        %p422 = pneg %p180
        %p423 = pneg %p204
        %p424 = pneg %p201
        %p425 = pneg %p234
        %p426 = pneg %p231
        %s427 = sand.u32 %s221, 1
        %s428 = scalar_lea.sflag [#allocation4], %s427
        %s429 = sand.u32 %s221, 1
        %s430 = smul.addr %s429, 1024
        %s431 = scalar_lea.vmem [#allocation14], %s430
        %s432 = smul.u32 4, %s35
        %s433 = smul.u32 4, %s36
        %s434 = smul.u32 32, %s35
        %s435 = smul.u32 4, %s36
        %v436 = vld [vmem:[%s367] sm:$0xff]
        %v437 = vld [vmem:[%s367 + $0x8] sm:$0xff]
        %v438 = vld [vmem:[%s367 + $0x10] sm:$0xff]
        %v439 = vld [vmem:[%s367 + $0x18] sm:$0xff]
        %v440 = vld [vmem:[#allocation7] sm:$0x1]
        %v442 = vlaneseq
        %v443 = vshrl.u32 %v442, 7
        %v444 = vsub.s32 0, %v443
        %v445 = vrot.slane %v440, %v444
        %v447 = vadd.f32 %v436, %v445
        %v448 = vadd.f32 %v437, %v445
        %v449 = vadd.f32 %v438, %v445
        %v450 = vadd.f32 %v439, %v445
        %v451 = vld [vmem:[%s376] sm:$0xff]
        %v452 = vld [vmem:[%s376 + $0x8] sm:$0xff]
        %v453 = vld [vmem:[%s376 + $0x10] sm:$0xff]
        %v454 = vld [vmem:[%s376 + $0x18] sm:$0xff]
        %vm455 = vcmask 261120
        %v456 = vsel %vm455, %v447, 0.0
        %457 = vadd.xlane.f32.xlu0 %v456
        %v458 = vpop.xlane.xlu0 %457
        %v459 = vsel %vm455, %v448, 0.0
        %460 = vadd.xlane.f32.xlu0 %v459
        %v461 = vpop.xlane.xlu0 %460
        %v462 = vsel %vm455, %v449, 0.0
        %463 = vadd.xlane.f32.xlu0 %v462
        %v464 = vpop.xlane.xlu0 %463
        %v465 = vsel %vm455, %v450, 0.0
        %466 = vadd.xlane.f32.xlu0 %v465
        %v467 = vpop.xlane.xlu0 %466
        %v468 = vmul.f32 %v458, 0.03125
        %v469 = vmul.f32 %v461, 0.03125
        %v470 = vmul.f32 %v464, 0.03125
        %v471 = vmul.f32 %v467, 0.03125
        %v472 = vmul.f32 %v447, %v447
        %v473 = vmul.f32 %v448, %v448
        %v474 = vmul.f32 %v449, %v449
        %v475 = vmul.f32 %v450, %v450
        %v476 = vsel %vm455, %v472, 0.0
        %477 = vadd.xlane.f32.xlu0 %v476
        %v478 = vpop.xlane.xlu0 %477
        %v479 = vsel %vm455, %v473, 0.0
        %480 = vadd.xlane.f32.xlu0 %v479
        %v481 = vpop.xlane.xlu0 %480
        %v482 = vsel %vm455, %v474, 0.0
        %483 = vadd.xlane.f32.xlu0 %v482
        %v484 = vpop.xlane.xlu0 %483
        %v485 = vsel %vm455, %v475, 0.0
        %486 = vadd.xlane.f32.xlu0 %v485
        %v487 = vpop.xlane.xlu0 %486
        %v488 = vmul.f32 %v478, 0.03125
        %v489 = vmul.f32 %v481, 0.03125
        %v490 = vmul.f32 %v484, 0.03125
        %v491 = vmul.f32 %v487, 0.03125
        %v493 = vsel %vm455, 1.0, 0
        %v496 = vsel %vm455, %v451, 0
        %v499 = vsel %vm455, %v452, 0
        %v502 = vsel %vm455, %v453, 0
        %v505 = vsel %vm455, %v454, 0
        %507 = vmatprep.subr.mxu0 0.0
        %508 = vmatpush1.xpose.msra.mxu0 %v496
        %509 = vmatprep.subr.mxu0 0.0
        %510 = vmatpush1.xpose.msra.mxu0 %v499
        %511 = vmatprep.subr.mxu0 0.0
        %512 = vmatpush1.xpose.msra.mxu0 %v502
        %513 = vmatprep.subr.mxu0 0.0
        %514 = vmatpush1.xpose.msra.mxu0 %v505
        %515 = vmatprep.subr.mxu0 0.0
        %516 = vmatpush1.xpose.msra.mxu0 0.0
        %517 = vmatprep.subr.mxu0 0.0
        %518 = vmatpush1.xpose.msra.mxu0 0.0
        %519 = vmatprep.subr.mxu0 0.0
        %520 = vmatpush1.xpose.msra.mxu0 0.0
        %521 = vmatprep.subr.mxu0 0.0
        %522 = vmatpush1.xpose.msra.mxu0 0.0
        %523 = vmatprep.subr.mxu0 0.0
        %524 = vmatpush1.xpose.msra.mxu0 0.0
        %525 = vmatprep.subr.mxu0 0.0
        %526 = vmatpush1.xpose.msra.mxu0 0.0
        %527 = vmatprep.subr.mxu0 0.0
        %528 = vmatpush1.xpose.msra.mxu0 0.0
        %529 = vmatprep.subr.mxu0 0.0
        %530 = vmatpush1.xpose.msra.mxu0 0.0
        %531 = vmatprep.subr.mxu0 0.0
        %532 = vmatpush1.xpose.msra.mxu0 0.0
        %533 = vmatprep.subr.mxu0 0.0
        %534 = vmatpush1.xpose.msra.mxu0 0.0
        %535 = vmatprep.subr.mxu0 0.0
        %536 = vmatpush1.xpose.msra.mxu0 0.0
        %537 = vmatprep.subr.mxu0 0.0
        %538 = vmatpush1.xpose.msra.mxu0 0.0
        %539 = vmatprep.subr.mxu0 0.0
        %540 = vmatpush1.xpose.msra.mxu0 0.0
        %541 = vmatprep.subr.mxu0 0.0
        %542 = vmatpush1.xpose.msra.mxu0 0.0
        %543 = vmatprep.subr.mxu0 0.0
        %544 = vmatpush1.xpose.msra.mxu0 0.0
        %545 = vmatprep.subr.mxu0 0.0
        %546 = vmatpush1.xpose.msra.mxu0 0.0
        %547 = vmatprep.subr.mxu0 0.0
        %548 = vmatpush1.xpose.msra.mxu0 0.0
        %549 = vmatprep.subr.mxu0 0.0
        %550 = vmatpush1.xpose.msra.mxu0 0.0
        %551 = vmatprep.subr.mxu0 0.0
        %552 = vmatpush1.xpose.msra.mxu0 0.0
        %553 = vmatprep.subr.mxu0 0.0
        %554 = vmatpush1.xpose.msra.mxu0 0.0
        %555 = vmatprep.subr.mxu0 0.0
        %556 = vmatpush1.xpose.msra.mxu0 0.0
        %557 = vmatprep.subr.mxu0 0.0
        %558 = vmatpush1.xpose.msra.mxu0 0.0
        %559 = vmatprep.subr.mxu0 0.0
        %560 = vmatpush1.xpose.msra.mxu0 0.0
        %561 = vmatprep.subr.mxu0 0.0
        %562 = vmatpush1.xpose.msra.mxu0 0.0
        %563 = vmatprep.subr.mxu0 0.0
        %564 = vmatpush1.xpose.msra.mxu0 0.0
        %565 = vmatprep.subr.mxu0 0.0
        %566 = vmatpush1.xpose.msra.mxu0 0.0
        %567 = vmatprep.subr.mxu0 0.0
        %568 = vmatpush1.xpose.msra.mxu0 0.0
        %569 = vmatprep.subr.mxu0 0.0
        %570 = vmatpush1.xpose.msra.mxu0 0.0
        %571 = vmatprep.mubr.f32.mxu0 0.0
        %572 = vmatmul.mubr.f32.gmra.mrb[0].mxu0 %v493
        %v573 = vpop.f32.mrb[0].mxu0
        %v574 = vadd.f32 0.0, %v573
        %v575 = vpop.f32.mrb[0].mxu0
        %576 = vdwg.mxu0
        %v577 = vmul.f32 %v574, 0.03125
        %v578 = vmul.f32 %v451, %v451
        %v579 = vmul.f32 %v452, %v452
        %v580 = vmul.f32 %v453, %v453
        %v581 = vmul.f32 %v454, %v454
        %v583 = vsel %vm455, %v578, 0
        %v586 = vsel %vm455, %v579, 0
        %v589 = vsel %vm455, %v580, 0
        %v592 = vsel %vm455, %v581, 0
        %594 = vmatprep.subr.mxu0 0.0
        %595 = vmatpush1.xpose.msra.mxu0 %v583
        %596 = vmatprep.subr.mxu0 0.0
        %597 = vmatpush1.xpose.msra.mxu0 %v586
        %598 = vmatprep.subr.mxu0 0.0
        %599 = vmatpush1.xpose.msra.mxu0 %v589
        %600 = vmatprep.subr.mxu0 0.0
        %601 = vmatpush1.xpose.msra.mxu0 %v592
        %602 = vmatprep.subr.mxu0 0.0
        %603 = vmatpush1.xpose.msra.mxu0 0.0
        %604 = vmatprep.subr.mxu0 0.0
        %605 = vmatpush1.xpose.msra.mxu0 0.0
        %606 = vmatprep.subr.mxu0 0.0
        %607 = vmatpush1.xpose.msra.mxu0 0.0
        %608 = vmatprep.subr.mxu0 0.0
        %609 = vmatpush1.xpose.msra.mxu0 0.0
        %610 = vmatprep.subr.mxu0 0.0
        %611 = vmatpush1.xpose.msra.mxu0 0.0
        %612 = vmatprep.subr.mxu0 0.0
        %613 = vmatpush1.xpose.msra.mxu0 0.0
        %614 = vmatprep.subr.mxu0 0.0
        %615 = vmatpush1.xpose.msra.mxu0 0.0
        %616 = vmatprep.subr.mxu0 0.0
        %617 = vmatpush1.xpose.msra.mxu0 0.0
        %618 = vmatprep.subr.mxu0 0.0
        %619 = vmatpush1.xpose.msra.mxu0 0.0
        %620 = vmatprep.subr.mxu0 0.0
        %621 = vmatpush1.xpose.msra.mxu0 0.0
        %622 = vmatprep.subr.mxu0 0.0
        %623 = vmatpush1.xpose.msra.mxu0 0.0
        %624 = vmatprep.subr.mxu0 0.0
        %625 = vmatpush1.xpose.msra.mxu0 0.0
        %626 = vmatprep.subr.mxu0 0.0
        %627 = vmatpush1.xpose.msra.mxu0 0.0
        %628 = vmatprep.subr.mxu0 0.0
        %629 = vmatpush1.xpose.msra.mxu0 0.0
        %630 = vmatprep.subr.mxu0 0.0
        %631 = vmatpush1.xpose.msra.mxu0 0.0
        %632 = vmatprep.subr.mxu0 0.0
        %633 = vmatpush1.xpose.msra.mxu0 0.0
        %634 = vmatprep.subr.mxu0 0.0
        %635 = vmatpush1.xpose.msra.mxu0 0.0
        %636 = vmatprep.subr.mxu0 0.0
        %637 = vmatpush1.xpose.msra.mxu0 0.0
        %638 = vmatprep.subr.mxu0 0.0
        %639 = vmatpush1.xpose.msra.mxu0 0.0
        %640 = vmatprep.subr.mxu0 0.0
        %641 = vmatpush1.xpose.msra.mxu0 0.0
        %642 = vmatprep.subr.mxu0 0.0
        %643 = vmatpush1.xpose.msra.mxu0 0.0
        %644 = vmatprep.subr.mxu0 0.0
        %645 = vmatpush1.xpose.msra.mxu0 0.0
        %646 = vmatprep.subr.mxu0 0.0
        %647 = vmatpush1.xpose.msra.mxu0 0.0
        %648 = vmatprep.subr.mxu0 0.0
        %649 = vmatpush1.xpose.msra.mxu0 0.0
        %650 = vmatprep.subr.mxu0 0.0
        %651 = vmatpush1.xpose.msra.mxu0 0.0
        %652 = vmatprep.subr.mxu0 0.0
        %653 = vmatpush1.xpose.msra.mxu0 0.0
        %654 = vmatprep.subr.mxu0 0.0
        %655 = vmatpush1.xpose.msra.mxu0 0.0
        %656 = vmatprep.subr.mxu0 0.0
        %657 = vmatpush1.xpose.msra.mxu0 0.0
        %658 = vmatprep.mubr.f32.mxu0 0.0
        %659 = vmatmul.mubr.f32.gmra.mrb[0].mxu0 %v493
        %v660 = vpop.f32.mrb[0].mxu0
        %v661 = vadd.f32 0.0, %v660
        %v662 = vpop.f32.mrb[0].mxu0
        %663 = vdwg.mxu0
        %v664 = vmul.f32 %v661, 0.03125
        %v666 = vsel %vm455, %v447, 0
        %v669 = vsel %vm455, %v448, 0
        %v672 = vsel %vm455, %v449, 0
        %v675 = vsel %vm455, %v450, 0
        %677 = vmatprep.subr.mxu0 0.0
        %678 = vmatpush1.xpose.msra.mxu0 %v496
        %679 = vmatprep.subr.mxu0 0.0
        %680 = vmatpush1.xpose.msra.mxu0 %v499
        %681 = vmatprep.subr.mxu0 0.0
        %682 = vmatpush1.xpose.msra.mxu0 %v502
        %683 = vmatprep.subr.mxu0 0.0
        %684 = vmatpush1.xpose.msra.mxu0 %v505
        %685 = vmatprep.subr.mxu0 0.0
        %686 = vmatpush1.xpose.msra.mxu0 0.0
        %687 = vmatprep.subr.mxu0 0.0
        %688 = vmatpush1.xpose.msra.mxu0 0.0
        %689 = vmatprep.subr.mxu0 0.0
        %690 = vmatpush1.xpose.msra.mxu0 0.0
        %691 = vmatprep.subr.mxu0 0.0
        %692 = vmatpush1.xpose.msra.mxu0 0.0
        %693 = vmatprep.subr.mxu0 0.0
        %694 = vmatpush1.xpose.msra.mxu0 0.0
        %695 = vmatprep.subr.mxu0 0.0
        %696 = vmatpush1.xpose.msra.mxu0 0.0
        %697 = vmatprep.subr.mxu0 0.0
        %698 = vmatpush1.xpose.msra.mxu0 0.0
        %699 = vmatprep.subr.mxu0 0.0
        %700 = vmatpush1.xpose.msra.mxu0 0.0
        %701 = vmatprep.subr.mxu0 0.0
        %702 = vmatpush1.xpose.msra.mxu0 0.0
        %703 = vmatprep.subr.mxu0 0.0
        %704 = vmatpush1.xpose.msra.mxu0 0.0
        %705 = vmatprep.subr.mxu0 0.0
        %706 = vmatpush1.xpose.msra.mxu0 0.0
        %707 = vmatprep.subr.mxu0 0.0
        %708 = vmatpush1.xpose.msra.mxu0 0.0
        %709 = vmatprep.subr.mxu0 0.0
        %710 = vmatpush1.xpose.msra.mxu0 0.0
        %711 = vmatprep.subr.mxu0 0.0
        %712 = vmatpush1.xpose.msra.mxu0 0.0
        %713 = vmatprep.subr.mxu0 0.0
        %714 = vmatpush1.xpose.msra.mxu0 0.0
        %715 = vmatprep.subr.mxu0 0.0
        %716 = vmatpush1.xpose.msra.mxu0 0.0
        %717 = vmatprep.subr.mxu0 0.0
        %718 = vmatpush1.xpose.msra.mxu0 0.0
        %719 = vmatprep.subr.mxu0 0.0
        %720 = vmatpush1.xpose.msra.mxu0 0.0
        %721 = vmatprep.subr.mxu0 0.0
        %722 = vmatpush1.xpose.msra.mxu0 0.0
        %723 = vmatprep.subr.mxu0 0.0
        %724 = vmatpush1.xpose.msra.mxu0 0.0
        %725 = vmatprep.subr.mxu0 0.0
        %726 = vmatpush1.xpose.msra.mxu0 0.0
        %727 = vmatprep.subr.mxu0 0.0
        %728 = vmatpush1.xpose.msra.mxu0 0.0
        %729 = vmatprep.subr.mxu0 0.0
        %730 = vmatpush1.xpose.msra.mxu0 0.0
        %731 = vmatprep.subr.mxu0 0.0
        %732 = vmatpush1.xpose.msra.mxu0 0.0
        %733 = vmatprep.subr.mxu0 0.0
        %734 = vmatpush1.xpose.msra.mxu0 0.0
        %735 = vmatprep.subr.mxu0 0.0
        %736 = vmatpush1.xpose.msra.mxu0 0.0
        %737 = vmatprep.subr.mxu0 0.0
        %738 = vmatpush1.xpose.msra.mxu0 0.0
        %739 = vmatprep.subr.mxu0 0.0
        %740 = vmatpush1.xpose.msra.mxu0 0.0
        %741 = vmatprep.mubr.f32.mxu0 0.0
        %742 = vmatmul.mubr.f32.gmra.mrb[0].mxu0 %v666
        %v743 = vpop.f32.mrb[0].mxu0
        %v744 = vadd.f32 0.0, %v743
        %v745 = vpop.f32.mrb[0].mxu0
        %746 = vmatprep.mubr.f32.mxu0 0.0
        %747 = vmatmul.mubr.f32.gmra.mrb[0].mxu0 %v669
        %v748 = vpop.f32.mrb[0].mxu0
        %v749 = vadd.f32 0.0, %v748
        %v750 = vpop.f32.mrb[0].mxu0
        %751 = vmatprep.mubr.f32.mxu0 0.0
        %752 = vmatmul.mubr.f32.gmra.mrb[0].mxu0 %v672
        %v753 = vpop.f32.mrb[0].mxu0
        %v754 = vadd.f32 0.0, %v753
        %v755 = vpop.f32.mrb[0].mxu0
        %756 = vmatprep.mubr.f32.mxu0 0.0
        %757 = vmatmul.mubr.f32.gmra.mrb[0].mxu0 %v675
        %v758 = vpop.f32.mrb[0].mxu0
        %v759 = vadd.f32 0.0, %v758
        %v760 = vpop.f32.mrb[0].mxu0
        %761 = vdwg.mxu0
        %v762 = vlaneseq
        %v763 = vshrl.u32 %v762, 7
        %v764 = vsub.s32 0, %v763
        %v765 = vrot.slane %v577, %v764
        %v766 = vadd.f32 %v468, %v765
        %v767 = vadd.f32 %v469, %v765
        %v768 = vadd.f32 %v470, %v765
        %v769 = vadd.f32 %v471, %v765
        %v770 = vlaneseq
        %v771 = vshrl.u32 %v770, 7
        %v772 = vsub.s32 0, %v771
        %v773 = vrot.slane %v664, %v772
        %v774 = vadd.f32 %v488, %v773
        %v775 = vadd.f32 %v489, %v773
        %v776 = vadd.f32 %v490, %v773
        %v777 = vadd.f32 %v491, %v773
        %v778 = vmul.f32 %v744, 0.0625
        %v779 = vmul.f32 %v749, 0.0625
        %v780 = vmul.f32 %v754, 0.0625
        %v781 = vmul.f32 %v759, 0.0625
        %v782 = vadd.f32 %v774, %v778
        %v783 = vadd.f32 %v775, %v779
        %v784 = vadd.f32 %v776, %v780
        %v785 = vadd.f32 %v777, %v781
        %v786 = vmul.f32 %v766, %v766
        %v787 = vmul.f32 %v767, %v767
        %v788 = vmul.f32 %v768, %v768
        %v789 = vmul.f32 %v769, %v769
        %v790 = vsub.f32 %v782, %v786
        %v791 = vsub.f32 %v783, %v787
        %v792 = vsub.f32 %v784, %v788
        %v793 = vsub.f32 %v785, %v789
        %v794 = vmax.f32 %v790, 0.0
        %v795 = vmax.f32 %v791, 0.0
        %v796 = vmax.f32 %v792, 0.0
        %v797 = vmax.f32 %v793, 0.0
        %v798 = vadd.f32 %v794, 1e-05
        %v799 = vadd.f32 %v795, 1e-05
        %v800 = vadd.f32 %v796, 1e-05
        %v801 = vadd.f32 %v797, 1e-05
        %v802 = vrsqrt.pop %v798
        %v803 = vrsqrt.pop %v799
        %v804 = vrsqrt.pop %v800
        %v805 = vrsqrt.pop %v801
        %v806 = vlaneseq
        %v807 = vshrl.u32 %v806, 7
        %v808 = vsub.s32 0, %v807
        %v809 = vrot.slane %v802, %v808
        %811 = vbcast.lane.b32.xlu0 %v809, 256
        %v812 = vpop.permute.xlu0 %811
        %s814 = sor.u32 256, 8
        %815 = vbcast.lane.b32.xlu0 %v809, %s814
        %v816 = vpop.permute.xlu0 %815
        %s818 = sor.u32 256, 16
        %819 = vbcast.lane.b32.xlu0 %v809, %s818
        %v820 = vpop.permute.xlu0 %819
        %s822 = sor.u32 256, 24
        %823 = vbcast.lane.b32.xlu0 %v809, %s822
        %v824 = vpop.permute.xlu0 %823
        %v825 = vlaneseq
        %v826 = vshrl.u32 %v825, 7
        %v827 = vsub.s32 1, %v826
        %v828 = vrot.slane %v802, %v827
        %830 = vbcast.lane.b32.xlu0 %v828, 256
        %v831 = vpop.permute.xlu0 %830
        %s833 = sor.u32 256, 8
        %834 = vbcast.lane.b32.xlu0 %v828, %s833
        %v835 = vpop.permute.xlu0 %834
        %s837 = sor.u32 256, 16
        %838 = vbcast.lane.b32.xlu0 %v828, %s837
        %v839 = vpop.permute.xlu0 %838
        %s841 = sor.u32 256, 24
        %842 = vbcast.lane.b32.xlu0 %v828, %s841
        %v843 = vpop.permute.xlu0 %842
        %v844 = vlaneseq
        %v845 = vshrl.u32 %v844, 7
        %v846 = vsub.s32 2, %v845
        %v847 = vrot.slane %v802, %v846
        %849 = vbcast.lane.b32.xlu0 %v847, 256
        %v850 = vpop.permute.xlu0 %849
        %s852 = sor.u32 256, 8
        %853 = vbcast.lane.b32.xlu0 %v847, %s852
        %v854 = vpop.permute.xlu0 %853
        %s856 = sor.u32 256, 16
        %857 = vbcast.lane.b32.xlu0 %v847, %s856
        %v858 = vpop.permute.xlu0 %857
        %s860 = sor.u32 256, 24
        %861 = vbcast.lane.b32.xlu0 %v847, %s860
        %v862 = vpop.permute.xlu0 %861
        %v863 = vlaneseq
        %v864 = vshrl.u32 %v863, 7
        %v865 = vsub.s32 3, %v864
        %v866 = vrot.slane %v802, %v865
        %868 = vbcast.lane.b32.xlu0 %v866, 256
        %v869 = vpop.permute.xlu0 %868
        %s871 = sor.u32 256, 8
        %872 = vbcast.lane.b32.xlu0 %v866, %s871
        %v873 = vpop.permute.xlu0 %872
        %s875 = sor.u32 256, 16
        %876 = vbcast.lane.b32.xlu0 %v866, %s875
        %v877 = vpop.permute.xlu0 %876
        %s879 = sor.u32 256, 24
        %880 = vbcast.lane.b32.xlu0 %v866, %s879
        %v881 = vpop.permute.xlu0 %880
        %v882 = vlaneseq
        %v883 = vshrl.u32 %v882, 7
        %v884 = vsub.s32 4, %v883
        %v885 = vrot.slane %v802, %v884
        %887 = vbcast.lane.b32.xlu0 %v885, 256
        %v888 = vpop.permute.xlu0 %887
        %s890 = sor.u32 256, 8
        %891 = vbcast.lane.b32.xlu0 %v885, %s890
        %v892 = vpop.permute.xlu0 %891
        %s894 = sor.u32 256, 16
        %895 = vbcast.lane.b32.xlu0 %v885, %s894
        %v896 = vpop.permute.xlu0 %895
        %s898 = sor.u32 256, 24
        %899 = vbcast.lane.b32.xlu0 %v885, %s898
        %v900 = vpop.permute.xlu0 %899
        %v901 = vlaneseq
        %v902 = vshrl.u32 %v901, 7
        %v903 = vsub.s32 5, %v902
        %v904 = vrot.slane %v802, %v903
        %906 = vbcast.lane.b32.xlu0 %v904, 256
        %v907 = vpop.permute.xlu0 %906
        %s909 = sor.u32 256, 8
        %910 = vbcast.lane.b32.xlu0 %v904, %s909
        %v911 = vpop.permute.xlu0 %910
        %s913 = sor.u32 256, 16
        %914 = vbcast.lane.b32.xlu0 %v904, %s913
        %v915 = vpop.permute.xlu0 %914
        %s917 = sor.u32 256, 24
        %918 = vbcast.lane.b32.xlu0 %v904, %s917
        %v919 = vpop.permute.xlu0 %918
        %v920 = vlaneseq
        %v921 = vshrl.u32 %v920, 7
        %v922 = vsub.s32 6, %v921
        %v923 = vrot.slane %v802, %v922
        %925 = vbcast.lane.b32.xlu0 %v923, 256
        %v926 = vpop.permute.xlu0 %925
        %s928 = sor.u32 256, 8
        %929 = vbcast.lane.b32.xlu0 %v923, %s928
        %v930 = vpop.permute.xlu0 %929
        %s932 = sor.u32 256, 16
        %933 = vbcast.lane.b32.xlu0 %v923, %s932
        %v934 = vpop.permute.xlu0 %933
        %s936 = sor.u32 256, 24
        %937 = vbcast.lane.b32.xlu0 %v923, %s936
        %v938 = vpop.permute.xlu0 %937
        %v939 = vlaneseq
        %v940 = vshrl.u32 %v939, 7
        %v941 = vsub.s32 7, %v940
        %v942 = vrot.slane %v802, %v941
        %944 = vbcast.lane.b32.xlu0 %v942, 256
        %v945 = vpop.permute.xlu0 %944
        %s947 = sor.u32 256, 8
        %948 = vbcast.lane.b32.xlu0 %v942, %s947
        %v949 = vpop.permute.xlu0 %948
        %s951 = sor.u32 256, 16
        %952 = vbcast.lane.b32.xlu0 %v942, %s951
        %v953 = vpop.permute.xlu0 %952
        %s955 = sor.u32 256, 24
        %956 = vbcast.lane.b32.xlu0 %v942, %s955
        %v957 = vpop.permute.xlu0 %956
        %v958 = vlaneseq
        %v959 = vshrl.u32 %v958, 7
        %v960 = vsub.s32 0, %v959
        %v961 = vrot.slane %v803, %v960
        %963 = vbcast.lane.b32.xlu0 %v961, 256
        %v964 = vpop.permute.xlu0 %963
        %s966 = sor.u32 256, 8
        %967 = vbcast.lane.b32.xlu0 %v961, %s966
        %v968 = vpop.permute.xlu0 %967
        %s970 = sor.u32 256, 16
        %971 = vbcast.lane.b32.xlu0 %v961, %s970
        %v972 = vpop.permute.xlu0 %971
        %s974 = sor.u32 256, 24
        %975 = vbcast.lane.b32.xlu0 %v961, %s974
        %v976 = vpop.permute.xlu0 %975
        %v977 = vlaneseq
        %v978 = vshrl.u32 %v977, 7
        %v979 = vsub.s32 1, %v978
        %v980 = vrot.slane %v803, %v979
        %982 = vbcast.lane.b32.xlu0 %v980, 256
        %v983 = vpop.permute.xlu0 %982
        %s985 = sor.u32 256, 8
        %986 = vbcast.lane.b32.xlu0 %v980, %s985
        %v987 = vpop.permute.xlu0 %986
        %s989 = sor.u32 256, 16
        %990 = vbcast.lane.b32.xlu0 %v980, %s989
        %v991 = vpop.permute.xlu0 %990
        %s993 = sor.u32 256, 24
        %994 = vbcast.lane.b32.xlu0 %v980, %s993
        %v995 = vpop.permute.xlu0 %994
        %v996 = vlaneseq
        %v997 = vshrl.u32 %v996, 7
        %v998 = vsub.s32 2, %v997
        %v999 = vrot.slane %v803, %v998
        %1001 = vbcast.lane.b32.xlu0 %v999, 256
        %v1002 = vpop.permute.xlu0 %1001
        %s1004 = sor.u32 256, 8
        %1005 = vbcast.lane.b32.xlu0 %v999, %s1004
        %v1006 = vpop.permute.xlu0 %1005
        %s1008 = sor.u32 256, 16
        %1009 = vbcast.lane.b32.xlu0 %v999, %s1008
        %v1010 = vpop.permute.xlu0 %1009
        %s1012 = sor.u32 256, 24
        %1013 = vbcast.lane.b32.xlu0 %v999, %s1012
        %v1014 = vpop.permute.xlu0 %1013
        %v1015 = vlaneseq
        %v1016 = vshrl.u32 %v1015, 7
        %v1017 = vsub.s32 3, %v1016
        %v1018 = vrot.slane %v803, %v1017
        %1020 = vbcast.lane.b32.xlu0 %v1018, 256
        %v1021 = vpop.permute.xlu0 %1020
        %s1023 = sor.u32 256, 8
        %1024 = vbcast.lane.b32.xlu0 %v1018, %s1023
        %v1025 = vpop.permute.xlu0 %1024
        %s1027 = sor.u32 256, 16
        %1028 = vbcast.lane.b32.xlu0 %v1018, %s1027
        %v1029 = vpop.permute.xlu0 %1028
        %s1031 = sor.u32 256, 24
        %1032 = vbcast.lane.b32.xlu0 %v1018, %s1031
        %v1033 = vpop.permute.xlu0 %1032
        %v1034 = vlaneseq
        %v1035 = vshrl.u32 %v1034, 7
        %v1036 = vsub.s32 4, %v1035
        %v1037 = vrot.slane %v803, %v1036
        %1039 = vbcast.lane.b32.xlu0 %v1037, 256
        %v1040 = vpop.permute.xlu0 %1039
        %s1042 = sor.u32 256, 8
        %1043 = vbcast.lane.b32.xlu0 %v1037, %s1042
        %v1044 = vpop.permute.xlu0 %1043
        %s1046 = sor.u32 256, 16
        %1047 = vbcast.lane.b32.xlu0 %v1037, %s1046
        %v1048 = vpop.permute.xlu0 %1047
        %s1050 = sor.u32 256, 24
        %1051 = vbcast.lane.b32.xlu0 %v1037, %s1050
        %v1052 = vpop.permute.xlu0 %1051
        %v1053 = vlaneseq
        %v1054 = vshrl.u32 %v1053, 7
        %v1055 = vsub.s32 5, %v1054
        %v1056 = vrot.slane %v803, %v1055
        %1058 = vbcast.lane.b32.xlu0 %v1056, 256
        %v1059 = vpop.permute.xlu0 %1058
        %s1061 = sor.u32 256, 8
        %1062 = vbcast.lane.b32.xlu0 %v1056, %s1061
        %v1063 = vpop.permute.xlu0 %1062
        %s1065 = sor.u32 256, 16
        %1066 = vbcast.lane.b32.xlu0 %v1056, %s1065
        %v1067 = vpop.permute.xlu0 %1066
        %s1069 = sor.u32 256, 24
        %1070 = vbcast.lane.b32.xlu0 %v1056, %s1069
        %v1071 = vpop.permute.xlu0 %1070
        %v1072 = vlaneseq
        %v1073 = vshrl.u32 %v1072, 7
        %v1074 = vsub.s32 6, %v1073
        %v1075 = vrot.slane %v803, %v1074
        %1077 = vbcast.lane.b32.xlu0 %v1075, 256
        %v1078 = vpop.permute.xlu0 %1077
        %s1080 = sor.u32 256, 8
        %1081 = vbcast.lane.b32.xlu0 %v1075, %s1080
        %v1082 = vpop.permute.xlu0 %1081
        %s1084 = sor.u32 256, 16
        %1085 = vbcast.lane.b32.xlu0 %v1075, %s1084
        %v1086 = vpop.permute.xlu0 %1085
        %s1088 = sor.u32 256, 24
        %1089 = vbcast.lane.b32.xlu0 %v1075, %s1088
        %v1090 = vpop.permute.xlu0 %1089
        %v1091 = vlaneseq
        %v1092 = vshrl.u32 %v1091, 7
        %v1093 = vsub.s32 7, %v1092
        %v1094 = vrot.slane %v803, %v1093
        %1096 = vbcast.lane.b32.xlu0 %v1094, 256
        %v1097 = vpop.permute.xlu0 %1096
        %s1099 = sor.u32 256, 8
        %1100 = vbcast.lane.b32.xlu0 %v1094, %s1099
        %v1101 = vpop.permute.xlu0 %1100
        %s1103 = sor.u32 256, 16
        %1104 = vbcast.lane.b32.xlu0 %v1094, %s1103
        %v1105 = vpop.permute.xlu0 %1104
        %s1107 = sor.u32 256, 24
        %1108 = vbcast.lane.b32.xlu0 %v1094, %s1107
        %v1109 = vpop.permute.xlu0 %1108
        %v1110 = vlaneseq
        %v1111 = vshrl.u32 %v1110, 7
        %v1112 = vsub.s32 0, %v1111
        %v1113 = vrot.slane %v804, %v1112
        %1115 = vbcast.lane.b32.xlu0 %v1113, 256
        %v1116 = vpop.permute.xlu0 %1115
        %s1118 = sor.u32 256, 8
        %1119 = vbcast.lane.b32.xlu0 %v1113, %s1118
        %v1120 = vpop.permute.xlu0 %1119
        %s1122 = sor.u32 256, 16
        %1123 = vbcast.lane.b32.xlu0 %v1113, %s1122
        %v1124 = vpop.permute.xlu0 %1123
        %s1126 = sor.u32 256, 24
        %1127 = vbcast.lane.b32.xlu0 %v1113, %s1126
        %v1128 = vpop.permute.xlu0 %1127
        %v1129 = vlaneseq
        %v1130 = vshrl.u32 %v1129, 7
        %v1131 = vsub.s32 1, %v1130
        %v1132 = vrot.slane %v804, %v1131
        %1134 = vbcast.lane.b32.xlu0 %v1132, 256
        %v1135 = vpop.permute.xlu0 %1134
        %s1137 = sor.u32 256, 8
        %1138 = vbcast.lane.b32.xlu0 %v1132, %s1137
        %v1139 = vpop.permute.xlu0 %1138
        %s1141 = sor.u32 256, 16
        %1142 = vbcast.lane.b32.xlu0 %v1132, %s1141
        %v1143 = vpop.permute.xlu0 %1142
        %s1145 = sor.u32 256, 24
        %1146 = vbcast.lane.b32.xlu0 %v1132, %s1145
        %v1147 = vpop.permute.xlu0 %1146
        %v1148 = vlaneseq
        %v1149 = vshrl.u32 %v1148, 7
        %v1150 = vsub.s32 2, %v1149
        %v1151 = vrot.slane %v804, %v1150
        %1153 = vbcast.lane.b32.xlu0 %v1151, 256
        %v1154 = vpop.permute.xlu0 %1153
        %s1156 = sor.u32 256, 8
        %1157 = vbcast.lane.b32.xlu0 %v1151, %s1156
        %v1158 = vpop.permute.xlu0 %1157
        %s1160 = sor.u32 256, 16
        %1161 = vbcast.lane.b32.xlu0 %v1151, %s1160
        %v1162 = vpop.permute.xlu0 %1161
        %s1164 = sor.u32 256, 24
        %1165 = vbcast.lane.b32.xlu0 %v1151, %s1164
        %v1166 = vpop.permute.xlu0 %1165
        %v1167 = vlaneseq
        %v1168 = vshrl.u32 %v1167, 7
        %v1169 = vsub.s32 3, %v1168
        %v1170 = vrot.slane %v804, %v1169
        %1172 = vbcast.lane.b32.xlu0 %v1170, 256
        %v1173 = vpop.permute.xlu0 %1172
        %s1175 = sor.u32 256, 8
        %1176 = vbcast.lane.b32.xlu0 %v1170, %s1175
        %v1177 = vpop.permute.xlu0 %1176
        %s1179 = sor.u32 256, 16
        %1180 = vbcast.lane.b32.xlu0 %v1170, %s1179
        %v1181 = vpop.permute.xlu0 %1180
        %s1183 = sor.u32 256, 24
        %1184 = vbcast.lane.b32.xlu0 %v1170, %s1183
        %v1185 = vpop.permute.xlu0 %1184
        %v1186 = vlaneseq
        %v1187 = vshrl.u32 %v1186, 7
        %v1188 = vsub.s32 4, %v1187
        %v1189 = vrot.slane %v804, %v1188
        %1191 = vbcast.lane.b32.xlu0 %v1189, 256
        %v1192 = vpop.permute.xlu0 %1191
        %s1194 = sor.u32 256, 8
        %1195 = vbcast.lane.b32.xlu0 %v1189, %s1194
        %v1196 = vpop.permute.xlu0 %1195
        %s1198 = sor.u32 256, 16
        %1199 = vbcast.lane.b32.xlu0 %v1189, %s1198
        %v1200 = vpop.permute.xlu0 %1199
        %s1202 = sor.u32 256, 24
        %1203 = vbcast.lane.b32.xlu0 %v1189, %s1202
        %v1204 = vpop.permute.xlu0 %1203
        %v1205 = vlaneseq
        %v1206 = vshrl.u32 %v1205, 7
        %v1207 = vsub.s32 5, %v1206
        %v1208 = vrot.slane %v804, %v1207
        %1210 = vbcast.lane.b32.xlu0 %v1208, 256
        %v1211 = vpop.permute.xlu0 %1210
        %s1213 = sor.u32 256, 8
        %1214 = vbcast.lane.b32.xlu0 %v1208, %s1213
        %v1215 = vpop.permute.xlu0 %1214
        %s1217 = sor.u32 256, 16
        %1218 = vbcast.lane.b32.xlu0 %v1208, %s1217
        %v1219 = vpop.permute.xlu0 %1218
        %s1221 = sor.u32 256, 24
        %1222 = vbcast.lane.b32.xlu0 %v1208, %s1221
        %v1223 = vpop.permute.xlu0 %1222
        %v1224 = vlaneseq
        %v1225 = vshrl.u32 %v1224, 7
        %v1226 = vsub.s32 6, %v1225
        %v1227 = vrot.slane %v804, %v1226
        %1229 = vbcast.lane.b32.xlu0 %v1227, 256
        %v1230 = vpop.permute.xlu0 %1229
        %s1232 = sor.u32 256, 8
        %1233 = vbcast.lane.b32.xlu0 %v1227, %s1232
        %v1234 = vpop.permute.xlu0 %1233
        %s1236 = sor.u32 256, 16
        %1237 = vbcast.lane.b32.xlu0 %v1227, %s1236
        %v1238 = vpop.permute.xlu0 %1237
        %s1240 = sor.u32 256, 24
        %1241 = vbcast.lane.b32.xlu0 %v1227, %s1240
        %v1242 = vpop.permute.xlu0 %1241
        %v1243 = vlaneseq
        %v1244 = vshrl.u32 %v1243, 7
        %v1245 = vsub.s32 7, %v1244
        %v1246 = vrot.slane %v804, %v1245
        %1248 = vbcast.lane.b32.xlu0 %v1246, 256
        %v1249 = vpop.permute.xlu0 %1248
        %s1251 = sor.u32 256, 8
        %1252 = vbcast.lane.b32.xlu0 %v1246, %s1251
        %v1253 = vpop.permute.xlu0 %1252
        %s1255 = sor.u32 256, 16
        %1256 = vbcast.lane.b32.xlu0 %v1246, %s1255
        %v1257 = vpop.permute.xlu0 %1256
        %s1259 = sor.u32 256, 24
        %1260 = vbcast.lane.b32.xlu0 %v1246, %s1259
        %v1261 = vpop.permute.xlu0 %1260
        %v1262 = vlaneseq
        %v1263 = vshrl.u32 %v1262, 7
        %v1264 = vsub.s32 0, %v1263
        %v1265 = vrot.slane %v805, %v1264
        %1267 = vbcast.lane.b32.xlu0 %v1265, 256
        %v1268 = vpop.permute.xlu0 %1267
        %s1270 = sor.u32 256, 8
        %1271 = vbcast.lane.b32.xlu0 %v1265, %s1270
        %v1272 = vpop.permute.xlu0 %1271
        %s1274 = sor.u32 256, 16
        %1275 = vbcast.lane.b32.xlu0 %v1265, %s1274
        %v1276 = vpop.permute.xlu0 %1275
        %s1278 = sor.u32 256, 24
        %1279 = vbcast.lane.b32.xlu0 %v1265, %s1278
        %v1280 = vpop.permute.xlu0 %1279
        %v1281 = vlaneseq
        %v1282 = vshrl.u32 %v1281, 7
        %v1283 = vsub.s32 1, %v1282
        %v1284 = vrot.slane %v805, %v1283
        %1286 = vbcast.lane.b32.xlu0 %v1284, 256
        %v1287 = vpop.permute.xlu0 %1286
        %s1289 = sor.u32 256, 8
        %1290 = vbcast.lane.b32.xlu0 %v1284, %s1289
        %v1291 = vpop.permute.xlu0 %1290
        %s1293 = sor.u32 256, 16
        %1294 = vbcast.lane.b32.xlu0 %v1284, %s1293
        %v1295 = vpop.permute.xlu0 %1294
        %s1297 = sor.u32 256, 24
        %1298 = vbcast.lane.b32.xlu0 %v1284, %s1297
        %v1299 = vpop.permute.xlu0 %1298
        %v1300 = vlaneseq
        %v1301 = vshrl.u32 %v1300, 7
        %v1302 = vsub.s32 2, %v1301
        %v1303 = vrot.slane %v805, %v1302
        %1305 = vbcast.lane.b32.xlu0 %v1303, 256
        %v1306 = vpop.permute.xlu0 %1305
        %s1308 = sor.u32 256, 8
        %1309 = vbcast.lane.b32.xlu0 %v1303, %s1308
        %v1310 = vpop.permute.xlu0 %1309
        %s1312 = sor.u32 256, 16
        %1313 = vbcast.lane.b32.xlu0 %v1303, %s1312
        %v1314 = vpop.permute.xlu0 %1313
        %s1316 = sor.u32 256, 24
        %1317 = vbcast.lane.b32.xlu0 %v1303, %s1316
        %v1318 = vpop.permute.xlu0 %1317
        %v1319 = vlaneseq
        %v1320 = vshrl.u32 %v1319, 7
        %v1321 = vsub.s32 3, %v1320
        %v1322 = vrot.slane %v805, %v1321
        %1324 = vbcast.lane.b32.xlu0 %v1322, 256
        %v1325 = vpop.permute.xlu0 %1324
        %s1327 = sor.u32 256, 8
        %1328 = vbcast.lane.b32.xlu0 %v1322, %s1327
        %v1329 = vpop.permute.xlu0 %1328
        %s1331 = sor.u32 256, 16
        %1332 = vbcast.lane.b32.xlu0 %v1322, %s1331
        %v1333 = vpop.permute.xlu0 %1332
        %s1335 = sor.u32 256, 24
        %1336 = vbcast.lane.b32.xlu0 %v1322, %s1335
        %v1337 = vpop.permute.xlu0 %1336
        %v1338 = vlaneseq
        %v1339 = vshrl.u32 %v1338, 7
        %v1340 = vsub.s32 4, %v1339
        %v1341 = vrot.slane %v805, %v1340
        %1343 = vbcast.lane.b32.xlu0 %v1341, 256
        %v1344 = vpop.permute.xlu0 %1343
        %s1346 = sor.u32 256, 8
        %1347 = vbcast.lane.b32.xlu0 %v1341, %s1346
        %v1348 = vpop.permute.xlu0 %1347
        %s1350 = sor.u32 256, 16
        %1351 = vbcast.lane.b32.xlu0 %v1341, %s1350
        %v1352 = vpop.permute.xlu0 %1351
        %s1354 = sor.u32 256, 24
        %1355 = vbcast.lane.b32.xlu0 %v1341, %s1354
        %v1356 = vpop.permute.xlu0 %1355
        %v1357 = vlaneseq
        %v1358 = vshrl.u32 %v1357, 7
        %v1359 = vsub.s32 5, %v1358
        %v1360 = vrot.slane %v805, %v1359
        %1362 = vbcast.lane.b32.xlu0 %v1360, 256
        %v1363 = vpop.permute.xlu0 %1362
        %s1365 = sor.u32 256, 8
        %1366 = vbcast.lane.b32.xlu0 %v1360, %s1365
        %v1367 = vpop.permute.xlu0 %1366
        %s1369 = sor.u32 256, 16
        %1370 = vbcast.lane.b32.xlu0 %v1360, %s1369
        %v1371 = vpop.permute.xlu0 %1370
        %s1373 = sor.u32 256, 24
        %1374 = vbcast.lane.b32.xlu0 %v1360, %s1373
        %v1375 = vpop.permute.xlu0 %1374
        %v1376 = vlaneseq
        %v1377 = vshrl.u32 %v1376, 7
        %v1378 = vsub.s32 6, %v1377
        %v1379 = vrot.slane %v805, %v1378
        %1381 = vbcast.lane.b32.xlu0 %v1379, 256
        %v1382 = vpop.permute.xlu0 %1381
        %s1384 = sor.u32 256, 8
        %1385 = vbcast.lane.b32.xlu0 %v1379, %s1384
        %v1386 = vpop.permute.xlu0 %1385
        %s1388 = sor.u32 256, 16
        %1389 = vbcast.lane.b32.xlu0 %v1379, %s1388
        %v1390 = vpop.permute.xlu0 %1389
        %s1392 = sor.u32 256, 24
        %1393 = vbcast.lane.b32.xlu0 %v1379, %s1392
        %v1394 = vpop.permute.xlu0 %1393
        %v1395 = vlaneseq
        %v1396 = vshrl.u32 %v1395, 7
        %v1397 = vsub.s32 7, %v1396
        %v1398 = vrot.slane %v805, %v1397
        %1400 = vbcast.lane.b32.xlu0 %v1398, 256
        %v1401 = vpop.permute.xlu0 %1400
        %s1403 = sor.u32 256, 8
        %1404 = vbcast.lane.b32.xlu0 %v1398, %s1403
        %v1405 = vpop.permute.xlu0 %1404
        %s1407 = sor.u32 256, 16
        %1408 = vbcast.lane.b32.xlu0 %v1398, %s1407
        %v1409 = vpop.permute.xlu0 %1408
        %s1411 = sor.u32 256, 24
        %1412 = vbcast.lane.b32.xlu0 %v1398, %s1411
        %v1413 = vpop.permute.xlu0 %1412
        %v1414 = vsub.f32 0.0, %v766
        %v1415 = vsub.f32 0.0, %v767
        %v1416 = vsub.f32 0.0, %v768
        %v1417 = vsub.f32 0.0, %v769
        %v1418 = vmul.f32 %v1414, %v802
        %v1419 = vmul.f32 %v1415, %v803
        %v1420 = vmul.f32 %v1416, %v804
        %v1421 = vmul.f32 %v1417, %v805
        %v1422 = vlaneseq
        %v1423 = vshrl.u32 %v1422, 7
        %v1424 = vsub.s32 0, %v1423
        %v1425 = vrot.slane %v1418, %v1424
        %1427 = vbcast.lane.b32.xlu0 %v1425, 256
        %v1428 = vpop.permute.xlu0 %1427
        %s1430 = sor.u32 256, 8
        %1431 = vbcast.lane.b32.xlu0 %v1425, %s1430
        %v1432 = vpop.permute.xlu0 %1431
        %s1434 = sor.u32 256, 16
        %1435 = vbcast.lane.b32.xlu0 %v1425, %s1434
        %v1436 = vpop.permute.xlu0 %1435
        %s1438 = sor.u32 256, 24
        %1439 = vbcast.lane.b32.xlu0 %v1425, %s1438
        %v1440 = vpop.permute.xlu0 %1439
        %v1441 = vlaneseq
        %v1442 = vshrl.u32 %v1441, 7
        %v1443 = vsub.s32 1, %v1442
        %v1444 = vrot.slane %v1418, %v1443
        %1446 = vbcast.lane.b32.xlu0 %v1444, 256
        %v1447 = vpop.permute.xlu0 %1446
        %s1449 = sor.u32 256, 8
        %1450 = vbcast.lane.b32.xlu0 %v1444, %s1449
        %v1451 = vpop.permute.xlu0 %1450
        %s1453 = sor.u32 256, 16
        %1454 = vbcast.lane.b32.xlu0 %v1444, %s1453
        %v1455 = vpop.permute.xlu0 %1454
        %s1457 = sor.u32 256, 24
        %1458 = vbcast.lane.b32.xlu0 %v1444, %s1457
        %v1459 = vpop.permute.xlu0 %1458
        %v1460 = vlaneseq
        %v1461 = vshrl.u32 %v1460, 7
        %v1462 = vsub.s32 2, %v1461
        %v1463 = vrot.slane %v1418, %v1462
        %1465 = vbcast.lane.b32.xlu0 %v1463, 256
        %v1466 = vpop.permute.xlu0 %1465
        %s1468 = sor.u32 256, 8
        %1469 = vbcast.lane.b32.xlu0 %v1463, %s1468
        %v1470 = vpop.permute.xlu0 %1469
        %s1472 = sor.u32 256, 16
        %1473 = vbcast.lane.b32.xlu0 %v1463, %s1472
        %v1474 = vpop.permute.xlu0 %1473
        %s1476 = sor.u32 256, 24
        %1477 = vbcast.lane.b32.xlu0 %v1463, %s1476
        %v1478 = vpop.permute.xlu0 %1477
        %v1479 = vlaneseq
        %v1480 = vshrl.u32 %v1479, 7
        %v1481 = vsub.s32 3, %v1480
        %v1482 = vrot.slane %v1418, %v1481
        %1484 = vbcast.lane.b32.xlu0 %v1482, 256
        %v1485 = vpop.permute.xlu0 %1484
        %s1487 = sor.u32 256, 8
        %1488 = vbcast.lane.b32.xlu0 %v1482, %s1487
        %v1489 = vpop.permute.xlu0 %1488
        %s1491 = sor.u32 256, 16
        %1492 = vbcast.lane.b32.xlu0 %v1482, %s1491
        %v1493 = vpop.permute.xlu0 %1492
        %s1495 = sor.u32 256, 24
        %1496 = vbcast.lane.b32.xlu0 %v1482, %s1495
        %v1497 = vpop.permute.xlu0 %1496
        %v1498 = vlaneseq
        %v1499 = vshrl.u32 %v1498, 7
        %v1500 = vsub.s32 4, %v1499
        %v1501 = vrot.slane %v1418, %v1500
        %1503 = vbcast.lane.b32.xlu0 %v1501, 256
        %v1504 = vpop.permute.xlu0 %1503
        %s1506 = sor.u32 256, 8
        %1507 = vbcast.lane.b32.xlu0 %v1501, %s1506
        %v1508 = vpop.permute.xlu0 %1507
        %s1510 = sor.u32 256, 16
        %1511 = vbcast.lane.b32.xlu0 %v1501, %s1510
        %v1512 = vpop.permute.xlu0 %1511
        %s1514 = sor.u32 256, 24
        %1515 = vbcast.lane.b32.xlu0 %v1501, %s1514
        %v1516 = vpop.permute.xlu0 %1515
        %v1517 = vlaneseq
        %v1518 = vshrl.u32 %v1517, 7
        %v1519 = vsub.s32 5, %v1518
        %v1520 = vrot.slane %v1418, %v1519
        %1522 = vbcast.lane.b32.xlu0 %v1520, 256
        %v1523 = vpop.permute.xlu0 %1522
        %s1525 = sor.u32 256, 8
        %1526 = vbcast.lane.b32.xlu0 %v1520, %s1525
        %v1527 = vpop.permute.xlu0 %1526
        %s1529 = sor.u32 256, 16
        %1530 = vbcast.lane.b32.xlu0 %v1520, %s1529
        %v1531 = vpop.permute.xlu0 %1530
        %s1533 = sor.u32 256, 24
        %1534 = vbcast.lane.b32.xlu0 %v1520, %s1533
        %v1535 = vpop.permute.xlu0 %1534
        %v1536 = vlaneseq
        %v1537 = vshrl.u32 %v1536, 7
        %v1538 = vsub.s32 6, %v1537
        %v1539 = vrot.slane %v1418, %v1538
        %1541 = vbcast.lane.b32.xlu0 %v1539, 256
        %v1542 = vpop.permute.xlu0 %1541
        %s1544 = sor.u32 256, 8
        %1545 = vbcast.lane.b32.xlu0 %v1539, %s1544
        %v1546 = vpop.permute.xlu0 %1545
        %s1548 = sor.u32 256, 16
        %1549 = vbcast.lane.b32.xlu0 %v1539, %s1548
        %v1550 = vpop.permute.xlu0 %1549
        %s1552 = sor.u32 256, 24
        %1553 = vbcast.lane.b32.xlu0 %v1539, %s1552
        %v1554 = vpop.permute.xlu0 %1553
        %v1555 = vlaneseq
        %v1556 = vshrl.u32 %v1555, 7
        %v1557 = vsub.s32 7, %v1556
        %v1558 = vrot.slane %v1418, %v1557
        %1560 = vbcast.lane.b32.xlu0 %v1558, 256
        %v1561 = vpop.permute.xlu0 %1560
        %s1563 = sor.u32 256, 8
        %1564 = vbcast.lane.b32.xlu0 %v1558, %s1563
        %v1565 = vpop.permute.xlu0 %1564
        %s1567 = sor.u32 256, 16
        %1568 = vbcast.lane.b32.xlu0 %v1558, %s1567
        %v1569 = vpop.permute.xlu0 %1568
        %s1571 = sor.u32 256, 24
        %1572 = vbcast.lane.b32.xlu0 %v1558, %s1571
        %v1573 = vpop.permute.xlu0 %1572
        %v1574 = vlaneseq
        %v1575 = vshrl.u32 %v1574, 7
        %v1576 = vsub.s32 0, %v1575
        %v1577 = vrot.slane %v1419, %v1576
        %1579 = vbcast.lane.b32.xlu0 %v1577, 256
        %v1580 = vpop.permute.xlu0 %1579
        %s1582 = sor.u32 256, 8
        %1583 = vbcast.lane.b32.xlu0 %v1577, %s1582
        %v1584 = vpop.permute.xlu0 %1583
        %s1586 = sor.u32 256, 16
        %1587 = vbcast.lane.b32.xlu0 %v1577, %s1586
        %v1588 = vpop.permute.xlu0 %1587
        %s1590 = sor.u32 256, 24
        %1591 = vbcast.lane.b32.xlu0 %v1577, %s1590
        %v1592 = vpop.permute.xlu0 %1591
        %v1593 = vlaneseq
        %v1594 = vshrl.u32 %v1593, 7
        %v1595 = vsub.s32 1, %v1594
        %v1596 = vrot.slane %v1419, %v1595
        %1598 = vbcast.lane.b32.xlu0 %v1596, 256
        %v1599 = vpop.permute.xlu0 %1598
        %s1601 = sor.u32 256, 8
        %1602 = vbcast.lane.b32.xlu0 %v1596, %s1601
        %v1603 = vpop.permute.xlu0 %1602
        %s1605 = sor.u32 256, 16
        %1606 = vbcast.lane.b32.xlu0 %v1596, %s1605
        %v1607 = vpop.permute.xlu0 %1606
        %s1609 = sor.u32 256, 24
        %1610 = vbcast.lane.b32.xlu0 %v1596, %s1609
        %v1611 = vpop.permute.xlu0 %1610
        %v1612 = vlaneseq
        %v1613 = vshrl.u32 %v1612, 7
        %v1614 = vsub.s32 2, %v1613
        %v1615 = vrot.slane %v1419, %v1614
        %1617 = vbcast.lane.b32.xlu0 %v1615, 256
        %v1618 = vpop.permute.xlu0 %1617
        %s1620 = sor.u32 256, 8
        %1621 = vbcast.lane.b32.xlu0 %v1615, %s1620
        %v1622 = vpop.permute.xlu0 %1621
        %s1624 = sor.u32 256, 16
        %1625 = vbcast.lane.b32.xlu0 %v1615, %s1624
        %v1626 = vpop.permute.xlu0 %1625
        %s1628 = sor.u32 256, 24
        %1629 = vbcast.lane.b32.xlu0 %v1615, %s1628
        %v1630 = vpop.permute.xlu0 %1629
        %v1631 = vlaneseq
        %v1632 = vshrl.u32 %v1631, 7
        %v1633 = vsub.s32 3, %v1632
        %v1634 = vrot.slane %v1419, %v1633
        %1636 = vbcast.lane.b32.xlu0 %v1634, 256
        %v1637 = vpop.permute.xlu0 %1636
        %s1639 = sor.u32 256, 8
        %1640 = vbcast.lane.b32.xlu0 %v1634, %s1639
        %v1641 = vpop.permute.xlu0 %1640
        %s1643 = sor.u32 256, 16
        %1644 = vbcast.lane.b32.xlu0 %v1634, %s1643
        %v1645 = vpop.permute.xlu0 %1644
        %s1647 = sor.u32 256, 24
        %1648 = vbcast.lane.b32.xlu0 %v1634, %s1647
        %v1649 = vpop.permute.xlu0 %1648
        %v1650 = vlaneseq
        %v1651 = vshrl.u32 %v1650, 7
        %v1652 = vsub.s32 4, %v1651
        %v1653 = vrot.slane %v1419, %v1652
        %1655 = vbcast.lane.b32.xlu0 %v1653, 256
        %v1656 = vpop.permute.xlu0 %1655
        %s1658 = sor.u32 256, 8
        %1659 = vbcast.lane.b32.xlu0 %v1653, %s1658
        %v1660 = vpop.permute.xlu0 %1659
        %s1662 = sor.u32 256, 16
        %1663 = vbcast.lane.b32.xlu0 %v1653, %s1662
        %v1664 = vpop.permute.xlu0 %1663
        %s1666 = sor.u32 256, 24
        %1667 = vbcast.lane.b32.xlu0 %v1653, %s1666
        %v1668 = vpop.permute.xlu0 %1667
        %v1669 = vlaneseq
        %v1670 = vshrl.u32 %v1669, 7
        %v1671 = vsub.s32 5, %v1670
        %v1672 = vrot.slane %v1419, %v1671
        %1674 = vbcast.lane.b32.xlu0 %v1672, 256
        %v1675 = vpop.permute.xlu0 %1674
        %s1677 = sor.u32 256, 8
        %1678 = vbcast.lane.b32.xlu0 %v1672, %s1677
        %v1679 = vpop.permute.xlu0 %1678
        %s1681 = sor.u32 256, 16
        %1682 = vbcast.lane.b32.xlu0 %v1672, %s1681
        %v1683 = vpop.permute.xlu0 %1682
        %s1685 = sor.u32 256, 24
        %1686 = vbcast.lane.b32.xlu0 %v1672, %s1685
        %v1687 = vpop.permute.xlu0 %1686
        %v1688 = vlaneseq
        %v1689 = vshrl.u32 %v1688, 7
        %v1690 = vsub.s32 6, %v1689
        %v1691 = vrot.slane %v1419, %v1690
        %1693 = vbcast.lane.b32.xlu0 %v1691, 256
        %v1694 = vpop.permute.xlu0 %1693
        %s1696 = sor.u32 256, 8
        %1697 = vbcast.lane.b32.xlu0 %v1691, %s1696
        %v1698 = vpop.permute.xlu0 %1697
        %s1700 = sor.u32 256, 16
        %1701 = vbcast.lane.b32.xlu0 %v1691, %s1700
        %v1702 = vpop.permute.xlu0 %1701
        %s1704 = sor.u32 256, 24
        %1705 = vbcast.lane.b32.xlu0 %v1691, %s1704
        %v1706 = vpop.permute.xlu0 %1705
        %v1707 = vlaneseq
        %v1708 = vshrl.u32 %v1707, 7
        %v1709 = vsub.s32 7, %v1708
        %v1710 = vrot.slane %v1419, %v1709
        %1712 = vbcast.lane.b32.xlu0 %v1710, 256
        %v1713 = vpop.permute.xlu0 %1712
        %s1715 = sor.u32 256, 8
        %1716 = vbcast.lane.b32.xlu0 %v1710, %s1715
        %v1717 = vpop.permute.xlu0 %1716
        %s1719 = sor.u32 256, 16
        %1720 = vbcast.lane.b32.xlu0 %v1710, %s1719
        %v1721 = vpop.permute.xlu0 %1720
        %s1723 = sor.u32 256, 24
        %1724 = vbcast.lane.b32.xlu0 %v1710, %s1723
        %v1725 = vpop.permute.xlu0 %1724
        %v1726 = vlaneseq
        %v1727 = vshrl.u32 %v1726, 7
        %v1728 = vsub.s32 0, %v1727
        %v1729 = vrot.slane %v1420, %v1728
        %1731 = vbcast.lane.b32.xlu0 %v1729, 256
        %v1732 = vpop.permute.xlu0 %1731
        %s1734 = sor.u32 256, 8
        %1735 = vbcast.lane.b32.xlu0 %v1729, %s1734
        %v1736 = vpop.permute.xlu0 %1735
        %s1738 = sor.u32 256, 16
        %1739 = vbcast.lane.b32.xlu0 %v1729, %s1738
        %v1740 = vpop.permute.xlu0 %1739
        %s1742 = sor.u32 256, 24
        %1743 = vbcast.lane.b32.xlu0 %v1729, %s1742
        %v1744 = vpop.permute.xlu0 %1743
        %v1745 = vlaneseq
        %v1746 = vshrl.u32 %v1745, 7
        %v1747 = vsub.s32 1, %v1746
        %v1748 = vrot.slane %v1420, %v1747
        %1750 = vbcast.lane.b32.xlu0 %v1748, 256
        %v1751 = vpop.permute.xlu0 %1750
        %s1753 = sor.u32 256, 8
        %1754 = vbcast.lane.b32.xlu0 %v1748, %s1753
        %v1755 = vpop.permute.xlu0 %1754
        %s1757 = sor.u32 256, 16
        %1758 = vbcast.lane.b32.xlu0 %v1748, %s1757
        %v1759 = vpop.permute.xlu0 %1758
        %s1761 = sor.u32 256, 24
        %1762 = vbcast.lane.b32.xlu0 %v1748, %s1761
        %v1763 = vpop.permute.xlu0 %1762
        %v1764 = vlaneseq
        %v1765 = vshrl.u32 %v1764, 7
        %v1766 = vsub.s32 2, %v1765
        %v1767 = vrot.slane %v1420, %v1766
        %1769 = vbcast.lane.b32.xlu0 %v1767, 256
        %v1770 = vpop.permute.xlu0 %1769
        %s1772 = sor.u32 256, 8
        %1773 = vbcast.lane.b32.xlu0 %v1767, %s1772
        %v1774 = vpop.permute.xlu0 %1773
        %s1776 = sor.u32 256, 16
        %1777 = vbcast.lane.b32.xlu0 %v1767, %s1776
        %v1778 = vpop.permute.xlu0 %1777
        %s1780 = sor.u32 256, 24
        %1781 = vbcast.lane.b32.xlu0 %v1767, %s1780
        %v1782 = vpop.permute.xlu0 %1781
        %v1783 = vlaneseq
        %v1784 = vshrl.u32 %v1783, 7
        %v1785 = vsub.s32 3, %v1784
        %v1786 = vrot.slane %v1420, %v1785
        %1788 = vbcast.lane.b32.xlu0 %v1786, 256
        %v1789 = vpop.permute.xlu0 %1788
        %s1791 = sor.u32 256, 8
        %1792 = vbcast.lane.b32.xlu0 %v1786, %s1791
        %v1793 = vpop.permute.xlu0 %1792
        %s1795 = sor.u32 256, 16
        %1796 = vbcast.lane.b32.xlu0 %v1786, %s1795
        %v1797 = vpop.permute.xlu0 %1796
        %s1799 = sor.u32 256, 24
        %1800 = vbcast.lane.b32.xlu0 %v1786, %s1799
        %v1801 = vpop.permute.xlu0 %1800
        %v1802 = vlaneseq
        %v1803 = vshrl.u32 %v1802, 7
        %v1804 = vsub.s32 4, %v1803
        %v1805 = vrot.slane %v1420, %v1804
        %1807 = vbcast.lane.b32.xlu0 %v1805, 256
        %v1808 = vpop.permute.xlu0 %1807
        %s1810 = sor.u32 256, 8
        %1811 = vbcast.lane.b32.xlu0 %v1805, %s1810
        %v1812 = vpop.permute.xlu0 %1811
        %s1814 = sor.u32 256, 16
        %1815 = vbcast.lane.b32.xlu0 %v1805, %s1814
        %v1816 = vpop.permute.xlu0 %1815
        %s1818 = sor.u32 256, 24
        %1819 = vbcast.lane.b32.xlu0 %v1805, %s1818
        %v1820 = vpop.permute.xlu0 %1819
        %v1821 = vlaneseq
        %v1822 = vshrl.u32 %v1821, 7
        %v1823 = vsub.s32 5, %v1822
        %v1824 = vrot.slane %v1420, %v1823
        %1826 = vbcast.lane.b32.xlu0 %v1824, 256
        %v1827 = vpop.permute.xlu0 %1826
        %s1829 = sor.u32 256, 8
        %1830 = vbcast.lane.b32.xlu0 %v1824, %s1829
        %v1831 = vpop.permute.xlu0 %1830
        %s1833 = sor.u32 256, 16
        %1834 = vbcast.lane.b32.xlu0 %v1824, %s1833
        %v1835 = vpop.permute.xlu0 %1834
        %s1837 = sor.u32 256, 24
        %1838 = vbcast.lane.b32.xlu0 %v1824, %s1837
        %v1839 = vpop.permute.xlu0 %1838
        %v1840 = vlaneseq
        %v1841 = vshrl.u32 %v1840, 7
        %v1842 = vsub.s32 6, %v1841
        %v1843 = vrot.slane %v1420, %v1842
        %1845 = vbcast.lane.b32.xlu0 %v1843, 256
        %v1846 = vpop.permute.xlu0 %1845
        %s1848 = sor.u32 256, 8
        %1849 = vbcast.lane.b32.xlu0 %v1843, %s1848
        %v1850 = vpop.permute.xlu0 %1849
        %s1852 = sor.u32 256, 16
        %1853 = vbcast.lane.b32.xlu0 %v1843, %s1852
        %v1854 = vpop.permute.xlu0 %1853
        %s1856 = sor.u32 256, 24
        %1857 = vbcast.lane.b32.xlu0 %v1843, %s1856
        %v1858 = vpop.permute.xlu0 %1857
        %v1859 = vlaneseq
        %v1860 = vshrl.u32 %v1859, 7
        %v1861 = vsub.s32 7, %v1860
        %v1862 = vrot.slane %v1420, %v1861
        %1864 = vbcast.lane.b32.xlu0 %v1862, 256
        %v1865 = vpop.permute.xlu0 %1864
        %s1867 = sor.u32 256, 8
        %1868 = vbcast.lane.b32.xlu0 %v1862, %s1867
        %v1869 = vpop.permute.xlu0 %1868
        %s1871 = sor.u32 256, 16
        %1872 = vbcast.lane.b32.xlu0 %v1862, %s1871
        %v1873 = vpop.permute.xlu0 %1872
        %s1875 = sor.u32 256, 24
        %1876 = vbcast.lane.b32.xlu0 %v1862, %s1875
        %v1877 = vpop.permute.xlu0 %1876
        %v1878 = vlaneseq
        %v1879 = vshrl.u32 %v1878, 7
        %v1880 = vsub.s32 0, %v1879
        %v1881 = vrot.slane %v1421, %v1880
        %1883 = vbcast.lane.b32.xlu0 %v1881, 256
        %v1884 = vpop.permute.xlu0 %1883
        %s1886 = sor.u32 256, 8
        %1887 = vbcast.lane.b32.xlu0 %v1881, %s1886
        %v1888 = vpop.permute.xlu0 %1887
        %s1890 = sor.u32 256, 16
        %1891 = vbcast.lane.b32.xlu0 %v1881, %s1890
        %v1892 = vpop.permute.xlu0 %1891
        %s1894 = sor.u32 256, 24
        %1895 = vbcast.lane.b32.xlu0 %v1881, %s1894
        %v1896 = vpop.permute.xlu0 %1895
        %v1897 = vlaneseq
        %v1898 = vshrl.u32 %v1897, 7
        %v1899 = vsub.s32 1, %v1898
        %v1900 = vrot.slane %v1421, %v1899
        %1902 = vbcast.lane.b32.xlu0 %v1900, 256
        %v1903 = vpop.permute.xlu0 %1902
        %s1905 = sor.u32 256, 8
        %1906 = vbcast.lane.b32.xlu0 %v1900, %s1905
        %v1907 = vpop.permute.xlu0 %1906
        %s1909 = sor.u32 256, 16
        %1910 = vbcast.lane.b32.xlu0 %v1900, %s1909
        %v1911 = vpop.permute.xlu0 %1910
        %s1913 = sor.u32 256, 24
        %1914 = vbcast.lane.b32.xlu0 %v1900, %s1913
        %v1915 = vpop.permute.xlu0 %1914
        %v1916 = vlaneseq
        %v1917 = vshrl.u32 %v1916, 7
        %v1918 = vsub.s32 2, %v1917
        %v1919 = vrot.slane %v1421, %v1918
        %1921 = vbcast.lane.b32.xlu0 %v1919, 256
        %v1922 = vpop.permute.xlu0 %1921
        %s1924 = sor.u32 256, 8
        %1925 = vbcast.lane.b32.xlu0 %v1919, %s1924
        %v1926 = vpop.permute.xlu0 %1925
        %s1928 = sor.u32 256, 16
        %1929 = vbcast.lane.b32.xlu0 %v1919, %s1928
        %v1930 = vpop.permute.xlu0 %1929
        %s1932 = sor.u32 256, 24
        %1933 = vbcast.lane.b32.xlu0 %v1919, %s1932
        %v1934 = vpop.permute.xlu0 %1933
        %v1935 = vlaneseq
        %v1936 = vshrl.u32 %v1935, 7
        %v1937 = vsub.s32 3, %v1936
        %v1938 = vrot.slane %v1421, %v1937
        %1940 = vbcast.lane.b32.xlu0 %v1938, 256
        %v1941 = vpop.permute.xlu0 %1940
        %s1943 = sor.u32 256, 8
        %1944 = vbcast.lane.b32.xlu0 %v1938, %s1943
        %v1945 = vpop.permute.xlu0 %1944
        %s1947 = sor.u32 256, 16
        %1948 = vbcast.lane.b32.xlu0 %v1938, %s1947
        %v1949 = vpop.permute.xlu0 %1948
        %s1951 = sor.u32 256, 24
        %1952 = vbcast.lane.b32.xlu0 %v1938, %s1951
        %v1953 = vpop.permute.xlu0 %1952
        %v1954 = vlaneseq
        %v1955 = vshrl.u32 %v1954, 7
        %v1956 = vsub.s32 4, %v1955
        %v1957 = vrot.slane %v1421, %v1956
        %1959 = vbcast.lane.b32.xlu0 %v1957, 256
        %v1960 = vpop.permute.xlu0 %1959
        %s1962 = sor.u32 256, 8
        %1963 = vbcast.lane.b32.xlu0 %v1957, %s1962
        %v1964 = vpop.permute.xlu0 %1963
        %s1966 = sor.u32 256, 16
        %1967 = vbcast.lane.b32.xlu0 %v1957, %s1966
        %v1968 = vpop.permute.xlu0 %1967
        %s1970 = sor.u32 256, 24
        %1971 = vbcast.lane.b32.xlu0 %v1957, %s1970
        %v1972 = vpop.permute.xlu0 %1971
        %v1973 = vlaneseq
        %v1974 = vshrl.u32 %v1973, 7
        %v1975 = vsub.s32 5, %v1974
        %v1976 = vrot.slane %v1421, %v1975
        %1978 = vbcast.lane.b32.xlu0 %v1976, 256
        %v1979 = vpop.permute.xlu0 %1978
        %s1981 = sor.u32 256, 8
        %1982 = vbcast.lane.b32.xlu0 %v1976, %s1981
        %v1983 = vpop.permute.xlu0 %1982
        %s1985 = sor.u32 256, 16
        %1986 = vbcast.lane.b32.xlu0 %v1976, %s1985
        %v1987 = vpop.permute.xlu0 %1986
        %s1989 = sor.u32 256, 24
        %1990 = vbcast.lane.b32.xlu0 %v1976, %s1989
        %v1991 = vpop.permute.xlu0 %1990
        %v1992 = vlaneseq
        %v1993 = vshrl.u32 %v1992, 7
        %v1994 = vsub.s32 6, %v1993
        %v1995 = vrot.slane %v1421, %v1994
        %1997 = vbcast.lane.b32.xlu0 %v1995, 256
        %v1998 = vpop.permute.xlu0 %1997
        %s2000 = sor.u32 256, 8
        %2001 = vbcast.lane.b32.xlu0 %v1995, %s2000
        %v2002 = vpop.permute.xlu0 %2001
        %s2004 = sor.u32 256, 16
        %2005 = vbcast.lane.b32.xlu0 %v1995, %s2004
        %v2006 = vpop.permute.xlu0 %2005
        %s2008 = sor.u32 256, 24
        %2009 = vbcast.lane.b32.xlu0 %v1995, %s2008
        %v2010 = vpop.permute.xlu0 %2009
        %v2011 = vlaneseq
        %v2012 = vshrl.u32 %v2011, 7
        %v2013 = vsub.s32 7, %v2012
        %v2014 = vrot.slane %v1421, %v2013
        %2016 = vbcast.lane.b32.xlu0 %v2014, 256
        %v2017 = vpop.permute.xlu0 %2016
        %s2019 = sor.u32 256, 8
        %2020 = vbcast.lane.b32.xlu0 %v2014, %s2019
        %v2021 = vpop.permute.xlu0 %2020
        %s2023 = sor.u32 256, 16
        %2024 = vbcast.lane.b32.xlu0 %v2014, %s2023
        %v2025 = vpop.permute.xlu0 %2024
        %s2027 = sor.u32 256, 24
        %2028 = vbcast.lane.b32.xlu0 %v2014, %s2027
        %v2029 = vpop.permute.xlu0 %2028
        %v2030 = vld [vmem:[#allocation8] sm:$0x1]
        %v2031 = vld [vmem:[#allocation10] sm:$0x1]
        %v2032 = vcombine.high %v447, %v447
        %v2034 = vunpack.c.l.s4 1966171168
        %v2035 = vunpack.c.0.s8 %v2034
        %v2036 = vlaneseq
        %v2037 = vshrl.u32 %v2036, 7
        %v2038 = vsub.s32 %v2035, %v2037
        %v2039 = vrot.slane %v447, %v2038
        %v2041 = vunpack.c.l.s4 1966171168
        %v2042 = vunpack.c.0.s8 %v2041
        %v2043 = vlaneseq
        %v2044 = vshrl.u32 %v2043, 7
        %v2045 = vsub.s32 %v2042, %v2044
        %v2046 = vrot.slane %v2032, %v2045
        %v2047 = vcombine.high %v2039, %v2039
        %v2048 = vcombine.high %v2046, %v2046
        %v2050 = vunpack.c.l.s4 1966171168
        %v2051 = vunpack.c.0.s8 %v2050
        %v2052 = vlaneseq
        %v2053 = vshrl.u32 %v2052, 7
        %v2054 = vsub.s32 %v2051, %v2053
        %v2055 = vrot.slane %v2039, %v2054
        %v2057 = vunpack.c.l.s4 1966171168
        %v2058 = vunpack.c.0.s8 %v2057
        %v2059 = vlaneseq
        %v2060 = vshrl.u32 %v2059, 7
        %v2061 = vsub.s32 %v2058, %v2060
        %v2062 = vrot.slane %v2046, %v2061
        %v2064 = vunpack.c.l.s4 1966171168
        %v2065 = vunpack.c.0.s8 %v2064
        %v2066 = vlaneseq
        %v2067 = vshrl.u32 %v2066, 7
        %v2068 = vsub.s32 %v2065, %v2067
        %v2069 = vrot.slane %v2047, %v2068
        %v2071 = vunpack.c.l.s4 1966171168
        %v2072 = vunpack.c.0.s8 %v2071
        %v2073 = vlaneseq
        %v2074 = vshrl.u32 %v2073, 7
        %v2075 = vsub.s32 %v2072, %v2074
        %v2076 = vrot.slane %v2048, %v2075
        %v2077 = vcombine.high %v2055, %v2055
        %v2078 = vcombine.high %v2062, %v2062
        %v2079 = vcombine.high %v2069, %v2069
        %v2080 = vcombine.high %v2076, %v2076
        %v2081 = vcombine.high %v448, %v448
        %v2083 = vunpack.c.l.s4 1966171168
        %v2084 = vunpack.c.0.s8 %v2083
        %v2085 = vlaneseq
        %v2086 = vshrl.u32 %v2085, 7
        %v2087 = vsub.s32 %v2084, %v2086
        %v2088 = vrot.slane %v448, %v2087
        %v2090 = vunpack.c.l.s4 1966171168
        %v2091 = vunpack.c.0.s8 %v2090
        %v2092 = vlaneseq
        %v2093 = vshrl.u32 %v2092, 7
        %v2094 = vsub.s32 %v2091, %v2093
        %v2095 = vrot.slane %v2081, %v2094
        %v2096 = vcombine.high %v2088, %v2088
        %v2097 = vcombine.high %v2095, %v2095
        %v2099 = vunpack.c.l.s4 1966171168
        %v2100 = vunpack.c.0.s8 %v2099
        %v2101 = vlaneseq
        %v2102 = vshrl.u32 %v2101, 7
        %v2103 = vsub.s32 %v2100, %v2102
        %v2104 = vrot.slane %v2088, %v2103
        %v2106 = vunpack.c.l.s4 1966171168
        %v2107 = vunpack.c.0.s8 %v2106
        %v2108 = vlaneseq
        %v2109 = vshrl.u32 %v2108, 7
        %v2110 = vsub.s32 %v2107, %v2109
        %v2111 = vrot.slane %v2095, %v2110
        %v2113 = vunpack.c.l.s4 1966171168
        %v2114 = vunpack.c.0.s8 %v2113
        %v2115 = vlaneseq
        %v2116 = vshrl.u32 %v2115, 7
        %v2117 = vsub.s32 %v2114, %v2116
        %v2118 = vrot.slane %v2096, %v2117
        %v2120 = vunpack.c.l.s4 1966171168
        %v2121 = vunpack.c.0.s8 %v2120
        %v2122 = vlaneseq
        %v2123 = vshrl.u32 %v2122, 7
        %v2124 = vsub.s32 %v2121, %v2123
        %v2125 = vrot.slane %v2097, %v2124
        %v2126 = vcombine.high %v2104, %v2104
        %v2127 = vcombine.high %v2111, %v2111
        %v2128 = vcombine.high %v2118, %v2118
        %v2129 = vcombine.high %v2125, %v2125
        %v2130 = vcombine.high %v449, %v449
        %v2132 = vunpack.c.l.s4 1966171168
        %v2133 = vunpack.c.0.s8 %v2132
        %v2134 = vlaneseq
        %v2135 = vshrl.u32 %v2134, 7
        %v2136 = vsub.s32 %v2133, %v2135
        %v2137 = vrot.slane %v449, %v2136
        %v2139 = vunpack.c.l.s4 1966171168
        %v2140 = vunpack.c.0.s8 %v2139
        %v2141 = vlaneseq
        %v2142 = vshrl.u32 %v2141, 7
        %v2143 = vsub.s32 %v2140, %v2142
        %v2144 = vrot.slane %v2130, %v2143
        %v2145 = vcombine.high %v2137, %v2137
        %v2146 = vcombine.high %v2144, %v2144
        %v2148 = vunpack.c.l.s4 1966171168
        %v2149 = vunpack.c.0.s8 %v2148
        %v2150 = vlaneseq
        %v2151 = vshrl.u32 %v2150, 7
        %v2152 = vsub.s32 %v2149, %v2151
        %v2153 = vrot.slane %v2137, %v2152
        %v2155 = vunpack.c.l.s4 1966171168
        %v2156 = vunpack.c.0.s8 %v2155
        %v2157 = vlaneseq
        %v2158 = vshrl.u32 %v2157, 7
        %v2159 = vsub.s32 %v2156, %v2158
        %v2160 = vrot.slane %v2144, %v2159
        %v2162 = vunpack.c.l.s4 1966171168
        %v2163 = vunpack.c.0.s8 %v2162
        %v2164 = vlaneseq
        %v2165 = vshrl.u32 %v2164, 7
        %v2166 = vsub.s32 %v2163, %v2165
        %v2167 = vrot.slane %v2145, %v2166
        %v2169 = vunpack.c.l.s4 1966171168
        %v2170 = vunpack.c.0.s8 %v2169
        %v2171 = vlaneseq
        %v2172 = vshrl.u32 %v2171, 7
        %v2173 = vsub.s32 %v2170, %v2172
        %v2174 = vrot.slane %v2146, %v2173
        %v2175 = vcombine.high %v2153, %v2153
        %v2176 = vcombine.high %v2160, %v2160
        %v2177 = vcombine.high %v2167, %v2167
        %v2178 = vcombine.high %v2174, %v2174
        %v2179 = vcombine.high %v450, %v450
        %v2181 = vunpack.c.l.s4 1966171168
        %v2182 = vunpack.c.0.s8 %v2181
        %v2183 = vlaneseq
        %v2184 = vshrl.u32 %v2183, 7
        %v2185 = vsub.s32 %v2182, %v2184
        %v2186 = vrot.slane %v450, %v2185
        %v2188 = vunpack.c.l.s4 1966171168
        %v2189 = vunpack.c.0.s8 %v2188
        %v2190 = vlaneseq
        %v2191 = vshrl.u32 %v2190, 7
        %v2192 = vsub.s32 %v2189, %v2191
        %v2193 = vrot.slane %v2179, %v2192
        %v2194 = vcombine.high %v2186, %v2186
        %v2195 = vcombine.high %v2193, %v2193
        %v2197 = vunpack.c.l.s4 1966171168
        %v2198 = vunpack.c.0.s8 %v2197
        %v2199 = vlaneseq
        %v2200 = vshrl.u32 %v2199, 7
        %v2201 = vsub.s32 %v2198, %v2200
        %v2202 = vrot.slane %v2186, %v2201
        %v2204 = vunpack.c.l.s4 1966171168
        %v2205 = vunpack.c.0.s8 %v2204
        %v2206 = vlaneseq
        %v2207 = vshrl.u32 %v2206, 7
        %v2208 = vsub.s32 %v2205, %v2207
        %v2209 = vrot.slane %v2193, %v2208
        %v2211 = vunpack.c.l.s4 1966171168
        %v2212 = vunpack.c.0.s8 %v2211
        %v2213 = vlaneseq
        %v2214 = vshrl.u32 %v2213, 7
        %v2215 = vsub.s32 %v2212, %v2214
        %v2216 = vrot.slane %v2194, %v2215
        %v2218 = vunpack.c.l.s4 1966171168
        %v2219 = vunpack.c.0.s8 %v2218
        %v2220 = vlaneseq
        %v2221 = vshrl.u32 %v2220, 7
        %v2222 = vsub.s32 %v2219, %v2221
        %v2223 = vrot.slane %v2195, %v2222
        %v2224 = vcombine.high %v2202, %v2202
        %v2225 = vcombine.high %v2209, %v2209
        %v2226 = vcombine.high %v2216, %v2216
        %v2227 = vcombine.high %v2223, %v2223
        %v2228 = vlaneseq
        %v2229 = vshrl.u32 %v2228, 7
        %v2230 = vsub.s32 0, %v2229
        %v2231 = vrot.slane %v2055, %v2230
        %v2232 = vlaneseq
        %v2233 = vshrl.u32 %v2232, 7
        %v2234 = vsub.s32 0, %v2233
        %v2235 = vrot.slane %v2069, %v2234
        %v2236 = vlaneseq
        %v2237 = vshrl.u32 %v2236, 7
        %v2238 = vsub.s32 0, %v2237
        %v2239 = vrot.slane %v2077, %v2238
        %v2240 = vlaneseq
        %v2241 = vshrl.u32 %v2240, 7
        %v2242 = vsub.s32 0, %v2241
        %v2243 = vrot.slane %v2079, %v2242
        %v2244 = vlaneseq
        %v2245 = vshrl.u32 %v2244, 7
        %v2246 = vsub.s32 0, %v2245
        %v2247 = vrot.slane %v2062, %v2246
        %v2248 = vlaneseq
        %v2249 = vshrl.u32 %v2248, 7
        %v2250 = vsub.s32 0, %v2249
        %v2251 = vrot.slane %v2076, %v2250
        %v2252 = vlaneseq
        %v2253 = vshrl.u32 %v2252, 7
        %v2254 = vsub.s32 0, %v2253
        %v2255 = vrot.slane %v2078, %v2254
        %v2256 = vlaneseq
        %v2257 = vshrl.u32 %v2256, 7
        %v2258 = vsub.s32 0, %v2257
        %v2259 = vrot.slane %v2080, %v2258
        %v2260 = vlaneseq
        %v2261 = vshrl.u32 %v2260, 7
        %v2262 = vsub.s32 0, %v2261
        %v2263 = vrot.slane %v2104, %v2262
        %v2264 = vlaneseq
        %v2265 = vshrl.u32 %v2264, 7
        %v2266 = vsub.s32 0, %v2265
        %v2267 = vrot.slane %v2118, %v2266
        %v2268 = vlaneseq
        %v2269 = vshrl.u32 %v2268, 7
        %v2270 = vsub.s32 0, %v2269
        %v2271 = vrot.slane %v2126, %v2270
        %v2272 = vlaneseq
        %v2273 = vshrl.u32 %v2272, 7
        %v2274 = vsub.s32 0, %v2273
        %v2275 = vrot.slane %v2128, %v2274
        %v2276 = vlaneseq
        %v2277 = vshrl.u32 %v2276, 7
        %v2278 = vsub.s32 0, %v2277
        %v2279 = vrot.slane %v2111, %v2278
        %v2280 = vlaneseq
        %v2281 = vshrl.u32 %v2280, 7
        %v2282 = vsub.s32 0, %v2281
        %v2283 = vrot.slane %v2125, %v2282
        %v2284 = vlaneseq
        %v2285 = vshrl.u32 %v2284, 7
        %v2286 = vsub.s32 0, %v2285
        %v2287 = vrot.slane %v2127, %v2286
        %v2288 = vlaneseq
        %v2289 = vshrl.u32 %v2288, 7
        %v2290 = vsub.s32 0, %v2289
        %v2291 = vrot.slane %v2129, %v2290
        %v2292 = vlaneseq
        %v2293 = vshrl.u32 %v2292, 7
        %v2294 = vsub.s32 0, %v2293
        %v2295 = vrot.slane %v2153, %v2294
        %v2296 = vlaneseq
        %v2297 = vshrl.u32 %v2296, 7
        %v2298 = vsub.s32 0, %v2297
        %v2299 = vrot.slane %v2167, %v2298
        %v2300 = vlaneseq
        %v2301 = vshrl.u32 %v2300, 7
        %v2302 = vsub.s32 0, %v2301
        %v2303 = vrot.slane %v2175, %v2302
        %v2304 = vlaneseq
        %v2305 = vshrl.u32 %v2304, 7
        %v2306 = vsub.s32 0, %v2305
        %v2307 = vrot.slane %v2177, %v2306
        %v2308 = vlaneseq
        %v2309 = vshrl.u32 %v2308, 7
        %v2310 = vsub.s32 0, %v2309
        %v2311 = vrot.slane %v2160, %v2310
        %v2312 = vlaneseq
        %v2313 = vshrl.u32 %v2312, 7
        %v2314 = vsub.s32 0, %v2313
        %v2315 = vrot.slane %v2174, %v2314
        %v2316 = vlaneseq
        %v2317 = vshrl.u32 %v2316, 7
        %v2318 = vsub.s32 0, %v2317
        %v2319 = vrot.slane %v2176, %v2318
        %v2320 = vlaneseq
        %v2321 = vshrl.u32 %v2320, 7
        %v2322 = vsub.s32 0, %v2321
        %v2323 = vrot.slane %v2178, %v2322
        %v2324 = vlaneseq
        %v2325 = vshrl.u32 %v2324, 7
        %v2326 = vsub.s32 0, %v2325
        %v2327 = vrot.slane %v2202, %v2326
        %v2328 = vlaneseq
        %v2329 = vshrl.u32 %v2328, 7
        %v2330 = vsub.s32 0, %v2329
        %v2331 = vrot.slane %v2216, %v2330
        %v2332 = vlaneseq
        %v2333 = vshrl.u32 %v2332, 7
        %v2334 = vsub.s32 0, %v2333
        %v2335 = vrot.slane %v2224, %v2334
        %v2336 = vlaneseq
        %v2337 = vshrl.u32 %v2336, 7
        %v2338 = vsub.s32 0, %v2337
        %v2339 = vrot.slane %v2226, %v2338
        %v2340 = vlaneseq
        %v2341 = vshrl.u32 %v2340, 7
        %v2342 = vsub.s32 0, %v2341
        %v2343 = vrot.slane %v2209, %v2342
        %v2344 = vlaneseq
        %v2345 = vshrl.u32 %v2344, 7
        %v2346 = vsub.s32 0, %v2345
        %v2347 = vrot.slane %v2223, %v2346
        %v2348 = vlaneseq
        %v2349 = vshrl.u32 %v2348, 7
        %v2350 = vsub.s32 0, %v2349
        %v2351 = vrot.slane %v2225, %v2350
        %v2352 = vlaneseq
        %v2353 = vshrl.u32 %v2352, 7
        %v2354 = vsub.s32 0, %v2353
        %v2355 = vrot.slane %v2227, %v2354
        %v2388 = vadd.f32 %v2231, %v451
        %v2389 = vadd.f32 %v2231, %v452
        %v2390 = vadd.f32 %v2231, %v453
        %v2391 = vadd.f32 %v2231, %v454
        %v2392 = vadd.f32 %v2235, %v451
        %v2393 = vadd.f32 %v2235, %v452
        %v2394 = vadd.f32 %v2235, %v453
        %v2395 = vadd.f32 %v2235, %v454
        %v2396 = vadd.f32 %v2239, %v451
        %v2397 = vadd.f32 %v2239, %v452
        %v2398 = vadd.f32 %v2239, %v453
        %v2399 = vadd.f32 %v2239, %v454
        %v2400 = vadd.f32 %v2243, %v451
        %v2401 = vadd.f32 %v2243, %v452
        %v2402 = vadd.f32 %v2243, %v453
        %v2403 = vadd.f32 %v2243, %v454
        %v2404 = vadd.f32 %v2247, %v451
        %v2405 = vadd.f32 %v2247, %v452
        %v2406 = vadd.f32 %v2247, %v453
        %v2407 = vadd.f32 %v2247, %v454
        %v2408 = vadd.f32 %v2251, %v451
        %v2409 = vadd.f32 %v2251, %v452
        %v2410 = vadd.f32 %v2251, %v453
        %v2411 = vadd.f32 %v2251, %v454
        %v2412 = vadd.f32 %v2255, %v451
        %v2413 = vadd.f32 %v2255, %v452
        %v2414 = vadd.f32 %v2255, %v453
        %v2415 = vadd.f32 %v2255, %v454
        %v2416 = vadd.f32 %v2259, %v451
        %v2417 = vadd.f32 %v2259, %v452
        %v2418 = vadd.f32 %v2259, %v453
        %v2419 = vadd.f32 %v2259, %v454
        %v2420 = vadd.f32 %v2263, %v451
        %v2421 = vadd.f32 %v2263, %v452
        %v2422 = vadd.f32 %v2263, %v453
        %v2423 = vadd.f32 %v2263, %v454
        %v2424 = vadd.f32 %v2267, %v451
        %v2425 = vadd.f32 %v2267, %v452
        %v2426 = vadd.f32 %v2267, %v453
        %v2427 = vadd.f32 %v2267, %v454
        %v2428 = vadd.f32 %v2271, %v451
        %v2429 = vadd.f32 %v2271, %v452
        %v2430 = vadd.f32 %v2271, %v453
        %v2431 = vadd.f32 %v2271, %v454
        %v2432 = vadd.f32 %v2275, %v451
        %v2433 = vadd.f32 %v2275, %v452
        %v2434 = vadd.f32 %v2275, %v453
        %v2435 = vadd.f32 %v2275, %v454
        %v2436 = vadd.f32 %v2279, %v451
        %v2437 = vadd.f32 %v2279, %v452
        %v2438 = vadd.f32 %v2279, %v453
        %v2439 = vadd.f32 %v2279, %v454
        %v2440 = vadd.f32 %v2283, %v451
        %v2441 = vadd.f32 %v2283, %v452
        %v2442 = vadd.f32 %v2283, %v453
        %v2443 = vadd.f32 %v2283, %v454
        %v2444 = vadd.f32 %v2287, %v451
        %v2445 = vadd.f32 %v2287, %v452
        %v2446 = vadd.f32 %v2287, %v453
        %v2447 = vadd.f32 %v2287, %v454
        %v2448 = vadd.f32 %v2291, %v451
        %v2449 = vadd.f32 %v2291, %v452
        %v2450 = vadd.f32 %v2291, %v453
        %v2451 = vadd.f32 %v2291, %v454
        %v2452 = vadd.f32 %v2295, %v451
        %v2453 = vadd.f32 %v2295, %v452
        %v2454 = vadd.f32 %v2295, %v453
        %v2455 = vadd.f32 %v2295, %v454
        %v2456 = vadd.f32 %v2299, %v451
        %v2457 = vadd.f32 %v2299, %v452
        %v2458 = vadd.f32 %v2299, %v453
        %v2459 = vadd.f32 %v2299, %v454
        %v2460 = vadd.f32 %v2303, %v451
        %v2461 = vadd.f32 %v2303, %v452
        %v2462 = vadd.f32 %v2303, %v453
        %v2463 = vadd.f32 %v2303, %v454
        %v2464 = vadd.f32 %v2307, %v451
        %v2465 = vadd.f32 %v2307, %v452
        %v2466 = vadd.f32 %v2307, %v453
        %v2467 = vadd.f32 %v2307, %v454
        %v2468 = vadd.f32 %v2311, %v451
        %v2469 = vadd.f32 %v2311, %v452
        %v2470 = vadd.f32 %v2311, %v453
        %v2471 = vadd.f32 %v2311, %v454
        %v2472 = vadd.f32 %v2315, %v451
        %v2473 = vadd.f32 %v2315, %v452
        %v2474 = vadd.f32 %v2315, %v453
        %v2475 = vadd.f32 %v2315, %v454
        %v2476 = vadd.f32 %v2319, %v451
        %v2477 = vadd.f32 %v2319, %v452
        %v2478 = vadd.f32 %v2319, %v453
        %v2479 = vadd.f32 %v2319, %v454
        %v2480 = vadd.f32 %v2323, %v451
        %v2481 = vadd.f32 %v2323, %v452
        %v2482 = vadd.f32 %v2323, %v453
        %v2483 = vadd.f32 %v2323, %v454
        %v2484 = vadd.f32 %v2327, %v451
        %v2485 = vadd.f32 %v2327, %v452
        %v2486 = vadd.f32 %v2327, %v453
        %v2487 = vadd.f32 %v2327, %v454
        %v2488 = vadd.f32 %v2331, %v451
        %v2489 = vadd.f32 %v2331, %v452
        %v2490 = vadd.f32 %v2331, %v453
        %v2491 = vadd.f32 %v2331, %v454
        %v2492 = vadd.f32 %v2335, %v451
        %v2493 = vadd.f32 %v2335, %v452
        %v2494 = vadd.f32 %v2335, %v453
        %v2495 = vadd.f32 %v2335, %v454
        %v2496 = vadd.f32 %v2339, %v451
        %v2497 = vadd.f32 %v2339, %v452
        %v2498 = vadd.f32 %v2339, %v453
        %v2499 = vadd.f32 %v2339, %v454
        %v2500 = vadd.f32 %v2343, %v451
        %v2501 = vadd.f32 %v2343, %v452
        %v2502 = vadd.f32 %v2343, %v453
        %v2503 = vadd.f32 %v2343, %v454
        %v2504 = vadd.f32 %v2347, %v451
        %v2505 = vadd.f32 %v2347, %v452
        %v2506 = vadd.f32 %v2347, %v453
        %v2507 = vadd.f32 %v2347, %v454
        %v2508 = vadd.f32 %v2351, %v451
        %v2509 = vadd.f32 %v2351, %v452
        %v2510 = vadd.f32 %v2351, %v453
        %v2511 = vadd.f32 %v2351, %v454
        %v2512 = vadd.f32 %v2355, %v451
        %v2513 = vadd.f32 %v2355, %v452
        %v2514 = vadd.f32 %v2355, %v453
        %v2515 = vadd.f32 %v2355, %v454
        %v2516 = vmul.f32 %v2388, %v812
        %v2517 = vmul.f32 %v2389, %v816
        %v2518 = vmul.f32 %v2390, %v820
        %v2519 = vmul.f32 %v2391, %v824
        %v2520 = vmul.f32 %v2392, %v831
        %v2521 = vmul.f32 %v2393, %v835
        %v2522 = vmul.f32 %v2394, %v839
        %v2523 = vmul.f32 %v2395, %v843
        %v2524 = vmul.f32 %v2396, %v850
        %v2525 = vmul.f32 %v2397, %v854
        %v2526 = vmul.f32 %v2398, %v858
        %v2527 = vmul.f32 %v2399, %v862
        %v2528 = vmul.f32 %v2400, %v869
        %v2529 = vmul.f32 %v2401, %v873
        %v2530 = vmul.f32 %v2402, %v877
        %v2531 = vmul.f32 %v2403, %v881
        %v2532 = vmul.f32 %v2404, %v888
        %v2533 = vmul.f32 %v2405, %v892
        %v2534 = vmul.f32 %v2406, %v896
        %v2535 = vmul.f32 %v2407, %v900
        %v2536 = vmul.f32 %v2408, %v907
        %v2537 = vmul.f32 %v2409, %v911
        %v2538 = vmul.f32 %v2410, %v915
        %v2539 = vmul.f32 %v2411, %v919
        %v2540 = vmul.f32 %v2412, %v926
        %v2541 = vmul.f32 %v2413, %v930
        %v2542 = vmul.f32 %v2414, %v934
        %v2543 = vmul.f32 %v2415, %v938
        %v2544 = vmul.f32 %v2416, %v945
        %v2545 = vmul.f32 %v2417, %v949
        %v2546 = vmul.f32 %v2418, %v953
        %v2547 = vmul.f32 %v2419, %v957
        %v2548 = vmul.f32 %v2420, %v964
        %v2549 = vmul.f32 %v2421, %v968
        %v2550 = vmul.f32 %v2422, %v972
        %v2551 = vmul.f32 %v2423, %v976
        %v2552 = vmul.f32 %v2424, %v983
        %v2553 = vmul.f32 %v2425, %v987
        %v2554 = vmul.f32 %v2426, %v991
        %v2555 = vmul.f32 %v2427, %v995
        %v2556 = vmul.f32 %v2428, %v1002
        %v2557 = vmul.f32 %v2429, %v1006
        %v2558 = vmul.f32 %v2430, %v1010
        %v2559 = vmul.f32 %v2431, %v1014
        %v2560 = vmul.f32 %v2432, %v1021
        %v2561 = vmul.f32 %v2433, %v1025
        %v2562 = vmul.f32 %v2434, %v1029
        %v2563 = vmul.f32 %v2435, %v1033
        %v2564 = vmul.f32 %v2436, %v1040
        %v2565 = vmul.f32 %v2437, %v1044
        %v2566 = vmul.f32 %v2438, %v1048
        %v2567 = vmul.f32 %v2439, %v1052
        %v2568 = vmul.f32 %v2440, %v1059
        %v2569 = vmul.f32 %v2441, %v1063
        %v2570 = vmul.f32 %v2442, %v1067
        %v2571 = vmul.f32 %v2443, %v1071
        %v2572 = vmul.f32 %v2444, %v1078
        %v2573 = vmul.f32 %v2445, %v1082
        %v2574 = vmul.f32 %v2446, %v1086
        %v2575 = vmul.f32 %v2447, %v1090
        %v2576 = vmul.f32 %v2448, %v1097
        %v2577 = vmul.f32 %v2449, %v1101
        %v2578 = vmul.f32 %v2450, %v1105
        %v2579 = vmul.f32 %v2451, %v1109
        %v2580 = vmul.f32 %v2452, %v1116
        %v2581 = vmul.f32 %v2453, %v1120
        %v2582 = vmul.f32 %v2454, %v1124
        %v2583 = vmul.f32 %v2455, %v1128
        %v2584 = vmul.f32 %v2456, %v1135
        %v2585 = vmul.f32 %v2457, %v1139
        %v2586 = vmul.f32 %v2458, %v1143
        %v2587 = vmul.f32 %v2459, %v1147
        %v2588 = vmul.f32 %v2460, %v1154
        %v2589 = vmul.f32 %v2461, %v1158
        %v2590 = vmul.f32 %v2462, %v1162
        %v2591 = vmul.f32 %v2463, %v1166
        %v2592 = vmul.f32 %v2464, %v1173
        %v2593 = vmul.f32 %v2465, %v1177
        %v2594 = vmul.f32 %v2466, %v1181
        %v2595 = vmul.f32 %v2467, %v1185
        %v2596 = vmul.f32 %v2468, %v1192
        %v2597 = vmul.f32 %v2469, %v1196
        %v2598 = vmul.f32 %v2470, %v1200
        %v2599 = vmul.f32 %v2471, %v1204
        %v2600 = vmul.f32 %v2472, %v1211
        %v2601 = vmul.f32 %v2473, %v1215
        %v2602 = vmul.f32 %v2474, %v1219
        %v2603 = vmul.f32 %v2475, %v1223
        %v2604 = vmul.f32 %v2476, %v1230
        %v2605 = vmul.f32 %v2477, %v1234
        %v2606 = vmul.f32 %v2478, %v1238
        %v2607 = vmul.f32 %v2479, %v1242
        %v2608 = vmul.f32 %v2480, %v1249
        %v2609 = vmul.f32 %v2481, %v1253
        %v2610 = vmul.f32 %v2482, %v1257
        %v2611 = vmul.f32 %v2483, %v1261
        %v2612 = vmul.f32 %v2484, %v1268
        %v2613 = vmul.f32 %v2485, %v1272
        %v2614 = vmul.f32 %v2486, %v1276
        %v2615 = vmul.f32 %v2487, %v1280
        %v2616 = vmul.f32 %v2488, %v1287
        %v2617 = vmul.f32 %v2489, %v1291
        %v2618 = vmul.f32 %v2490, %v1295
        %v2619 = vmul.f32 %v2491, %v1299
        %v2620 = vmul.f32 %v2492, %v1306
        %v2621 = vmul.f32 %v2493, %v1310
        %v2622 = vmul.f32 %v2494, %v1314
        %v2623 = vmul.f32 %v2495, %v1318
        %v2624 = vmul.f32 %v2496, %v1325
        %v2625 = vmul.f32 %v2497, %v1329
        %v2626 = vmul.f32 %v2498, %v1333
        %v2627 = vmul.f32 %v2499, %v1337
        %v2628 = vmul.f32 %v2500, %v1344
        %v2629 = vmul.f32 %v2501, %v1348
        %v2630 = vmul.f32 %v2502, %v1352
        %v2631 = vmul.f32 %v2503, %v1356
        %v2632 = vmul.f32 %v2504, %v1363
        %v2633 = vmul.f32 %v2505, %v1367
        %v2634 = vmul.f32 %v2506, %v1371
        %v2635 = vmul.f32 %v2507, %v1375
        %v2636 = vmul.f32 %v2508, %v1382
        %v2637 = vmul.f32 %v2509, %v1386
        %v2638 = vmul.f32 %v2510, %v1390
        %v2639 = vmul.f32 %v2511, %v1394
        %v2640 = vmul.f32 %v2512, %v1401
        %v2641 = vmul.f32 %v2513, %v1405
        %v2642 = vmul.f32 %v2514, %v1409
        %v2643 = vmul.f32 %v2515, %v1413
        %v2644 = vadd.f32 %v2516, %v1428
        %v2645 = vadd.f32 %v2517, %v1432
        %v2646 = vadd.f32 %v2518, %v1436
        %v2647 = vadd.f32 %v2519, %v1440
        %v2648 = vadd.f32 %v2520, %v1447
        %v2649 = vadd.f32 %v2521, %v1451
        %v2650 = vadd.f32 %v2522, %v1455
        %v2651 = vadd.f32 %v2523, %v1459
        %v2652 = vadd.f32 %v2524, %v1466
        %v2653 = vadd.f32 %v2525, %v1470
        %v2654 = vadd.f32 %v2526, %v1474
        %v2655 = vadd.f32 %v2527, %v1478
        %v2656 = vadd.f32 %v2528, %v1485
        %v2657 = vadd.f32 %v2529, %v1489
        %v2658 = vadd.f32 %v2530, %v1493
        %v2659 = vadd.f32 %v2531, %v1497
        %v2660 = vadd.f32 %v2532, %v1504
        %v2661 = vadd.f32 %v2533, %v1508
        %v2662 = vadd.f32 %v2534, %v1512
        %v2663 = vadd.f32 %v2535, %v1516
        %v2664 = vadd.f32 %v2536, %v1523
        %v2665 = vadd.f32 %v2537, %v1527
        %v2666 = vadd.f32 %v2538, %v1531
        %v2667 = vadd.f32 %v2539, %v1535
        %v2668 = vadd.f32 %v2540, %v1542
        %v2669 = vadd.f32 %v2541, %v1546
        %v2670 = vadd.f32 %v2542, %v1550
        %v2671 = vadd.f32 %v2543, %v1554
        %v2672 = vadd.f32 %v2544, %v1561
        %v2673 = vadd.f32 %v2545, %v1565
        %v2674 = vadd.f32 %v2546, %v1569
        %v2675 = vadd.f32 %v2547, %v1573
        %v2676 = vadd.f32 %v2548, %v1580
        %v2677 = vadd.f32 %v2549, %v1584
        %v2678 = vadd.f32 %v2550, %v1588
        %v2679 = vadd.f32 %v2551, %v1592
        %v2680 = vadd.f32 %v2552, %v1599
        %v2681 = vadd.f32 %v2553, %v1603
        %v2682 = vadd.f32 %v2554, %v1607
        %v2683 = vadd.f32 %v2555, %v1611
        %v2684 = vadd.f32 %v2556, %v1618
        %v2685 = vadd.f32 %v2557, %v1622
        %v2686 = vadd.f32 %v2558, %v1626
        %v2687 = vadd.f32 %v2559, %v1630
        %v2688 = vadd.f32 %v2560, %v1637
        %v2689 = vadd.f32 %v2561, %v1641
        %v2690 = vadd.f32 %v2562, %v1645
        %v2691 = vadd.f32 %v2563, %v1649
        %v2692 = vadd.f32 %v2564, %v1656
        %v2693 = vadd.f32 %v2565, %v1660
        %v2694 = vadd.f32 %v2566, %v1664
        %v2695 = vadd.f32 %v2567, %v1668
        %v2696 = vadd.f32 %v2568, %v1675
        %v2697 = vadd.f32 %v2569, %v1679
        %v2698 = vadd.f32 %v2570, %v1683
        %v2699 = vadd.f32 %v2571, %v1687
        %v2700 = vadd.f32 %v2572, %v1694
        %v2701 = vadd.f32 %v2573, %v1698
        %v2702 = vadd.f32 %v2574, %v1702
        %v2703 = vadd.f32 %v2575, %v1706
        %v2704 = vadd.f32 %v2576, %v1713
        %v2705 = vadd.f32 %v2577, %v1717
        %v2706 = vadd.f32 %v2578, %v1721
        %v2707 = vadd.f32 %v2579, %v1725
        %v2708 = vadd.f32 %v2580, %v1732
        %v2709 = vadd.f32 %v2581, %v1736
        %v2710 = vadd.f32 %v2582, %v1740
        %v2711 = vadd.f32 %v2583, %v1744
        %v2712 = vadd.f32 %v2584, %v1751
        %v2713 = vadd.f32 %v2585, %v1755
        %v2714 = vadd.f32 %v2586, %v1759
        %v2715 = vadd.f32 %v2587, %v1763
        %v2716 = vadd.f32 %v2588, %v1770
        %v2717 = vadd.f32 %v2589, %v1774
        %v2718 = vadd.f32 %v2590, %v1778
        %v2719 = vadd.f32 %v2591, %v1782
        %v2720 = vadd.f32 %v2592, %v1789
        %v2721 = vadd.f32 %v2593, %v1793
        %v2722 = vadd.f32 %v2594, %v1797
        %v2723 = vadd.f32 %v2595, %v1801
        %v2724 = vadd.f32 %v2596, %v1808
        %v2725 = vadd.f32 %v2597, %v1812
        %v2726 = vadd.f32 %v2598, %v1816
        %v2727 = vadd.f32 %v2599, %v1820
        %v2728 = vadd.f32 %v2600, %v1827
        %v2729 = vadd.f32 %v2601, %v1831
        %v2730 = vadd.f32 %v2602, %v1835
        %v2731 = vadd.f32 %v2603, %v1839
        %v2732 = vadd.f32 %v2604, %v1846
        %v2733 = vadd.f32 %v2605, %v1850
        %v2734 = vadd.f32 %v2606, %v1854
        %v2735 = vadd.f32 %v2607, %v1858
        %v2736 = vadd.f32 %v2608, %v1865
        %v2737 = vadd.f32 %v2609, %v1869
        %v2738 = vadd.f32 %v2610, %v1873
        %v2739 = vadd.f32 %v2611, %v1877
        %v2740 = vadd.f32 %v2612, %v1884
        %v2741 = vadd.f32 %v2613, %v1888
        %v2742 = vadd.f32 %v2614, %v1892
        %v2743 = vadd.f32 %v2615, %v1896
        %v2744 = vadd.f32 %v2616, %v1903
        %v2745 = vadd.f32 %v2617, %v1907
        %v2746 = vadd.f32 %v2618, %v1911
        %v2747 = vadd.f32 %v2619, %v1915
        %v2748 = vadd.f32 %v2620, %v1922
        %v2749 = vadd.f32 %v2621, %v1926
        %v2750 = vadd.f32 %v2622, %v1930
        %v2751 = vadd.f32 %v2623, %v1934
        %v2752 = vadd.f32 %v2624, %v1941
        %v2753 = vadd.f32 %v2625, %v1945
        %v2754 = vadd.f32 %v2626, %v1949
        %v2755 = vadd.f32 %v2627, %v1953
        %v2756 = vadd.f32 %v2628, %v1960
        %v2757 = vadd.f32 %v2629, %v1964
        %v2758 = vadd.f32 %v2630, %v1968
        %v2759 = vadd.f32 %v2631, %v1972
        %v2760 = vadd.f32 %v2632, %v1979
        %v2761 = vadd.f32 %v2633, %v1983
        %v2762 = vadd.f32 %v2634, %v1987
        %v2763 = vadd.f32 %v2635, %v1991
        %v2764 = vadd.f32 %v2636, %v1998
        %v2765 = vadd.f32 %v2637, %v2002
        %v2766 = vadd.f32 %v2638, %v2006
        %v2767 = vadd.f32 %v2639, %v2010
        %v2768 = vadd.f32 %v2640, %v2017
        %v2769 = vadd.f32 %v2641, %v2021
        %v2770 = vadd.f32 %v2642, %v2025
        %v2771 = vadd.f32 %v2643, %v2029
        %v2773 = vlaneseq
        %v2774 = vshrl.u32 %v2773, 7
        %v2775 = vsub.s32 0, %v2774
        %v2776 = vrot.slane %v2030, %v2775
        %v2778 = vmul.f32 %v2644, %v2776
        %v2779 = vmul.f32 %v2645, %v2776
        %v2780 = vmul.f32 %v2646, %v2776
        %v2781 = vmul.f32 %v2647, %v2776
        %v2782 = vmul.f32 %v2648, %v2776
        %v2783 = vmul.f32 %v2649, %v2776
        %v2784 = vmul.f32 %v2650, %v2776
        %v2785 = vmul.f32 %v2651, %v2776
        %v2786 = vmul.f32 %v2652, %v2776
        %v2787 = vmul.f32 %v2653, %v2776
        %v2788 = vmul.f32 %v2654, %v2776
        %v2789 = vmul.f32 %v2655, %v2776
        %v2790 = vmul.f32 %v2656, %v2776
        %v2791 = vmul.f32 %v2657, %v2776
        %v2792 = vmul.f32 %v2658, %v2776
        %v2793 = vmul.f32 %v2659, %v2776
        %v2794 = vmul.f32 %v2660, %v2776
        %v2795 = vmul.f32 %v2661, %v2776
        %v2796 = vmul.f32 %v2662, %v2776
        %v2797 = vmul.f32 %v2663, %v2776
        %v2798 = vmul.f32 %v2664, %v2776
        %v2799 = vmul.f32 %v2665, %v2776
        %v2800 = vmul.f32 %v2666, %v2776
        %v2801 = vmul.f32 %v2667, %v2776
        %v2802 = vmul.f32 %v2668, %v2776
        %v2803 = vmul.f32 %v2669, %v2776
        %v2804 = vmul.f32 %v2670, %v2776
        %v2805 = vmul.f32 %v2671, %v2776
        %v2806 = vmul.f32 %v2672, %v2776
        %v2807 = vmul.f32 %v2673, %v2776
        %v2808 = vmul.f32 %v2674, %v2776
        %v2809 = vmul.f32 %v2675, %v2776
        %v2810 = vmul.f32 %v2676, %v2776
        %v2811 = vmul.f32 %v2677, %v2776
        %v2812 = vmul.f32 %v2678, %v2776
        %v2813 = vmul.f32 %v2679, %v2776
        %v2814 = vmul.f32 %v2680, %v2776
        %v2815 = vmul.f32 %v2681, %v2776
        %v2816 = vmul.f32 %v2682, %v2776
        %v2817 = vmul.f32 %v2683, %v2776
        %v2818 = vmul.f32 %v2684, %v2776
        %v2819 = vmul.f32 %v2685, %v2776
        %v2820 = vmul.f32 %v2686, %v2776
        %v2821 = vmul.f32 %v2687, %v2776
        %v2822 = vmul.f32 %v2688, %v2776
        %v2823 = vmul.f32 %v2689, %v2776
        %v2824 = vmul.f32 %v2690, %v2776
        %v2825 = vmul.f32 %v2691, %v2776
        %v2826 = vmul.f32 %v2692, %v2776
        %v2827 = vmul.f32 %v2693, %v2776
        %v2828 = vmul.f32 %v2694, %v2776
        %v2829 = vmul.f32 %v2695, %v2776
        %v2830 = vmul.f32 %v2696, %v2776
        %v2831 = vmul.f32 %v2697, %v2776
        %v2832 = vmul.f32 %v2698, %v2776
        %v2833 = vmul.f32 %v2699, %v2776
        %v2834 = vmul.f32 %v2700, %v2776
        %v2835 = vmul.f32 %v2701, %v2776
        %v2836 = vmul.f32 %v2702, %v2776
        %v2837 = vmul.f32 %v2703, %v2776
        %v2838 = vmul.f32 %v2704, %v2776
        %v2839 = vmul.f32 %v2705, %v2776
        %v2840 = vmul.f32 %v2706, %v2776
        %v2841 = vmul.f32 %v2707, %v2776
        %v2842 = vmul.f32 %v2708, %v2776
        %v2843 = vmul.f32 %v2709, %v2776
        %v2844 = vmul.f32 %v2710, %v2776
        %v2845 = vmul.f32 %v2711, %v2776
        %v2846 = vmul.f32 %v2712, %v2776
        %v2847 = vmul.f32 %v2713, %v2776
        %v2848 = vmul.f32 %v2714, %v2776
        %v2849 = vmul.f32 %v2715, %v2776
        %v2850 = vmul.f32 %v2716, %v2776
        %v2851 = vmul.f32 %v2717, %v2776
        %v2852 = vmul.f32 %v2718, %v2776
        %v2853 = vmul.f32 %v2719, %v2776
        %v2854 = vmul.f32 %v2720, %v2776
        %v2855 = vmul.f32 %v2721, %v2776
        %v2856 = vmul.f32 %v2722, %v2776
        %v2857 = vmul.f32 %v2723, %v2776
        %v2858 = vmul.f32 %v2724, %v2776
        %v2859 = vmul.f32 %v2725, %v2776
        %v2860 = vmul.f32 %v2726, %v2776
        %v2861 = vmul.f32 %v2727, %v2776
        %v2862 = vmul.f32 %v2728, %v2776
        %v2863 = vmul.f32 %v2729, %v2776
        %v2864 = vmul.f32 %v2730, %v2776
        %v2865 = vmul.f32 %v2731, %v2776
        %v2866 = vmul.f32 %v2732, %v2776
        %v2867 = vmul.f32 %v2733, %v2776
        %v2868 = vmul.f32 %v2734, %v2776
        %v2869 = vmul.f32 %v2735, %v2776
        %v2870 = vmul.f32 %v2736, %v2776
        %v2871 = vmul.f32 %v2737, %v2776
        %v2872 = vmul.f32 %v2738, %v2776
        %v2873 = vmul.f32 %v2739, %v2776
        %v2874 = vmul.f32 %v2740, %v2776
        %v2875 = vmul.f32 %v2741, %v2776
        %v2876 = vmul.f32 %v2742, %v2776
        %v2877 = vmul.f32 %v2743, %v2776
        %v2878 = vmul.f32 %v2744, %v2776
        %v2879 = vmul.f32 %v2745, %v2776
        %v2880 = vmul.f32 %v2746, %v2776
        %v2881 = vmul.f32 %v2747, %v2776
        %v2882 = vmul.f32 %v2748, %v2776
        %v2883 = vmul.f32 %v2749, %v2776
        %v2884 = vmul.f32 %v2750, %v2776
        %v2885 = vmul.f32 %v2751, %v2776
        %v2886 = vmul.f32 %v2752, %v2776
        %v2887 = vmul.f32 %v2753, %v2776
        %v2888 = vmul.f32 %v2754, %v2776
        %v2889 = vmul.f32 %v2755, %v2776
        %v2890 = vmul.f32 %v2756, %v2776
        %v2891 = vmul.f32 %v2757, %v2776
        %v2892 = vmul.f32 %v2758, %v2776
        %v2893 = vmul.f32 %v2759, %v2776
        %v2894 = vmul.f32 %v2760, %v2776
        %v2895 = vmul.f32 %v2761, %v2776
        %v2896 = vmul.f32 %v2762, %v2776
        %v2897 = vmul.f32 %v2763, %v2776
        %v2898 = vmul.f32 %v2764, %v2776
        %v2899 = vmul.f32 %v2765, %v2776
        %v2900 = vmul.f32 %v2766, %v2776
        %v2901 = vmul.f32 %v2767, %v2776
        %v2902 = vmul.f32 %v2768, %v2776
        %v2903 = vmul.f32 %v2769, %v2776
        %v2904 = vmul.f32 %v2770, %v2776
        %v2905 = vmul.f32 %v2771, %v2776
        %v2907 = vlaneseq
        %v2908 = vshrl.u32 %v2907, 7
        %v2909 = vsub.s32 0, %v2908
        %v2910 = vrot.slane %v2031, %v2909
        %v2912 = vadd.f32 %v2778, %v2910
        %v2913 = vadd.f32 %v2779, %v2910
        %v2914 = vadd.f32 %v2780, %v2910
        %v2915 = vadd.f32 %v2781, %v2910
        %v2916 = vadd.f32 %v2782, %v2910
        %v2917 = vadd.f32 %v2783, %v2910
        %v2918 = vadd.f32 %v2784, %v2910
        %v2919 = vadd.f32 %v2785, %v2910
        %v2920 = vadd.f32 %v2786, %v2910
        %v2921 = vadd.f32 %v2787, %v2910
        %v2922 = vadd.f32 %v2788, %v2910
        %v2923 = vadd.f32 %v2789, %v2910
        %v2924 = vadd.f32 %v2790, %v2910
        %v2925 = vadd.f32 %v2791, %v2910
        %v2926 = vadd.f32 %v2792, %v2910
        %v2927 = vadd.f32 %v2793, %v2910
        %v2928 = vadd.f32 %v2794, %v2910
        %v2929 = vadd.f32 %v2795, %v2910
        %v2930 = vadd.f32 %v2796, %v2910
        %v2931 = vadd.f32 %v2797, %v2910
        %v2932 = vadd.f32 %v2798, %v2910
        %v2933 = vadd.f32 %v2799, %v2910
        %v2934 = vadd.f32 %v2800, %v2910
        %v2935 = vadd.f32 %v2801, %v2910
        %v2936 = vadd.f32 %v2802, %v2910
        %v2937 = vadd.f32 %v2803, %v2910
        %v2938 = vadd.f32 %v2804, %v2910
        %v2939 = vadd.f32 %v2805, %v2910
        %v2940 = vadd.f32 %v2806, %v2910
        %v2941 = vadd.f32 %v2807, %v2910
        %v2942 = vadd.f32 %v2808, %v2910
        %v2943 = vadd.f32 %v2809, %v2910
        %v2944 = vadd.f32 %v2810, %v2910
        %v2945 = vadd.f32 %v2811, %v2910
        %v2946 = vadd.f32 %v2812, %v2910
        %v2947 = vadd.f32 %v2813, %v2910
        %v2948 = vadd.f32 %v2814, %v2910
        %v2949 = vadd.f32 %v2815, %v2910
        %v2950 = vadd.f32 %v2816, %v2910
        %v2951 = vadd.f32 %v2817, %v2910
        %v2952 = vadd.f32 %v2818, %v2910
        %v2953 = vadd.f32 %v2819, %v2910
        %v2954 = vadd.f32 %v2820, %v2910
        %v2955 = vadd.f32 %v2821, %v2910
        %v2956 = vadd.f32 %v2822, %v2910
        %v2957 = vadd.f32 %v2823, %v2910
        %v2958 = vadd.f32 %v2824, %v2910
        %v2959 = vadd.f32 %v2825, %v2910
        %v2960 = vadd.f32 %v2826, %v2910
        %v2961 = vadd.f32 %v2827, %v2910
        %v2962 = vadd.f32 %v2828, %v2910
        %v2963 = vadd.f32 %v2829, %v2910
        %v2964 = vadd.f32 %v2830, %v2910
        %v2965 = vadd.f32 %v2831, %v2910
        %v2966 = vadd.f32 %v2832, %v2910
        %v2967 = vadd.f32 %v2833, %v2910
        %v2968 = vadd.f32 %v2834, %v2910
        %v2969 = vadd.f32 %v2835, %v2910
        %v2970 = vadd.f32 %v2836, %v2910
        %v2971 = vadd.f32 %v2837, %v2910
        %v2972 = vadd.f32 %v2838, %v2910
        %v2973 = vadd.f32 %v2839, %v2910
        %v2974 = vadd.f32 %v2840, %v2910
        %v2975 = vadd.f32 %v2841, %v2910
        %v2976 = vadd.f32 %v2842, %v2910
        %v2977 = vadd.f32 %v2843, %v2910
        %v2978 = vadd.f32 %v2844, %v2910
        %v2979 = vadd.f32 %v2845, %v2910
        %v2980 = vadd.f32 %v2846, %v2910
        %v2981 = vadd.f32 %v2847, %v2910
        %v2982 = vadd.f32 %v2848, %v2910
        %v2983 = vadd.f32 %v2849, %v2910
        %v2984 = vadd.f32 %v2850, %v2910
        %v2985 = vadd.f32 %v2851, %v2910
        %v2986 = vadd.f32 %v2852, %v2910
        %v2987 = vadd.f32 %v2853, %v2910
        %v2988 = vadd.f32 %v2854, %v2910
        %v2989 = vadd.f32 %v2855, %v2910
        %v2990 = vadd.f32 %v2856, %v2910
        %v2991 = vadd.f32 %v2857, %v2910
        %v2992 = vadd.f32 %v2858, %v2910
        %v2993 = vadd.f32 %v2859, %v2910
        %v2994 = vadd.f32 %v2860, %v2910
        %v2995 = vadd.f32 %v2861, %v2910
        %v2996 = vadd.f32 %v2862, %v2910
        %v2997 = vadd.f32 %v2863, %v2910
        %v2998 = vadd.f32 %v2864, %v2910
        %v2999 = vadd.f32 %v2865, %v2910
        %v3000 = vadd.f32 %v2866, %v2910
        %v3001 = vadd.f32 %v2867, %v2910
        %v3002 = vadd.f32 %v2868, %v2910
        %v3003 = vadd.f32 %v2869, %v2910
        %v3004 = vadd.f32 %v2870, %v2910
        %v3005 = vadd.f32 %v2871, %v2910
        %v3006 = vadd.f32 %v2872, %v2910
        %v3007 = vadd.f32 %v2873, %v2910
        %v3008 = vadd.f32 %v2874, %v2910
        %v3009 = vadd.f32 %v2875, %v2910
        %v3010 = vadd.f32 %v2876, %v2910
        %v3011 = vadd.f32 %v2877, %v2910
        %v3012 = vadd.f32 %v2878, %v2910
        %v3013 = vadd.f32 %v2879, %v2910
        %v3014 = vadd.f32 %v2880, %v2910
        %v3015 = vadd.f32 %v2881, %v2910
        %v3016 = vadd.f32 %v2882, %v2910
        %v3017 = vadd.f32 %v2883, %v2910
        %v3018 = vadd.f32 %v2884, %v2910
        %v3019 = vadd.f32 %v2885, %v2910
        %v3020 = vadd.f32 %v2886, %v2910
        %v3021 = vadd.f32 %v2887, %v2910
        %v3022 = vadd.f32 %v2888, %v2910
        %v3023 = vadd.f32 %v2889, %v2910
        %v3024 = vadd.f32 %v2890, %v2910
        %v3025 = vadd.f32 %v2891, %v2910
        %v3026 = vadd.f32 %v2892, %v2910
        %v3027 = vadd.f32 %v2893, %v2910
        %v3028 = vadd.f32 %v2894, %v2910
        %v3029 = vadd.f32 %v2895, %v2910
        %v3030 = vadd.f32 %v2896, %v2910
        %v3031 = vadd.f32 %v2897, %v2910
        %v3032 = vadd.f32 %v2898, %v2910
        %v3033 = vadd.f32 %v2899, %v2910
        %v3034 = vadd.f32 %v2900, %v2910
        %v3035 = vadd.f32 %v2901, %v2910
        %v3036 = vadd.f32 %v2902, %v2910
        %v3037 = vadd.f32 %v2903, %v2910
        %v3038 = vadd.f32 %v2904, %v2910
        %v3039 = vadd.f32 %v2905, %v2910
        %v3040 = vmax.f32 %v2912, 0.0
        %v3041 = vmax.f32 %v2913, 0.0
        %v3042 = vmax.f32 %v2914, 0.0
        %v3043 = vmax.f32 %v2915, 0.0
        %v3044 = vmax.f32 %v2916, 0.0
        %v3045 = vmax.f32 %v2917, 0.0
        %v3046 = vmax.f32 %v2918, 0.0
        %v3047 = vmax.f32 %v2919, 0.0
        %v3048 = vmax.f32 %v2920, 0.0
        %v3049 = vmax.f32 %v2921, 0.0
        %v3050 = vmax.f32 %v2922, 0.0
        %v3051 = vmax.f32 %v2923, 0.0
        %v3052 = vmax.f32 %v2924, 0.0
        %v3053 = vmax.f32 %v2925, 0.0
        %v3054 = vmax.f32 %v2926, 0.0
        %v3055 = vmax.f32 %v2927, 0.0
        %v3056 = vmax.f32 %v2928, 0.0
        %v3057 = vmax.f32 %v2929, 0.0
        %v3058 = vmax.f32 %v2930, 0.0
        %v3059 = vmax.f32 %v2931, 0.0
        %v3060 = vmax.f32 %v2932, 0.0
        %v3061 = vmax.f32 %v2933, 0.0
        %v3062 = vmax.f32 %v2934, 0.0
        %v3063 = vmax.f32 %v2935, 0.0
        %v3064 = vmax.f32 %v2936, 0.0
        %v3065 = vmax.f32 %v2937, 0.0
        %v3066 = vmax.f32 %v2938, 0.0
        %v3067 = vmax.f32 %v2939, 0.0
        %v3068 = vmax.f32 %v2940, 0.0
        %v3069 = vmax.f32 %v2941, 0.0
        %v3070 = vmax.f32 %v2942, 0.0
        %v3071 = vmax.f32 %v2943, 0.0
        %v3072 = vmax.f32 %v2944, 0.0
        %v3073 = vmax.f32 %v2945, 0.0
        %v3074 = vmax.f32 %v2946, 0.0
        %v3075 = vmax.f32 %v2947, 0.0
        %v3076 = vmax.f32 %v2948, 0.0
        %v3077 = vmax.f32 %v2949, 0.0
        %v3078 = vmax.f32 %v2950, 0.0
        %v3079 = vmax.f32 %v2951, 0.0
        %v3080 = vmax.f32 %v2952, 0.0
        %v3081 = vmax.f32 %v2953, 0.0
        %v3082 = vmax.f32 %v2954, 0.0
        %v3083 = vmax.f32 %v2955, 0.0
        %v3084 = vmax.f32 %v2956, 0.0
        %v3085 = vmax.f32 %v2957, 0.0
        %v3086 = vmax.f32 %v2958, 0.0
        %v3087 = vmax.f32 %v2959, 0.0
        %v3088 = vmax.f32 %v2960, 0.0
        %v3089 = vmax.f32 %v2961, 0.0
        %v3090 = vmax.f32 %v2962, 0.0
        %v3091 = vmax.f32 %v2963, 0.0
        %v3092 = vmax.f32 %v2964, 0.0
        %v3093 = vmax.f32 %v2965, 0.0
        %v3094 = vmax.f32 %v2966, 0.0
        %v3095 = vmax.f32 %v2967, 0.0
        %v3096 = vmax.f32 %v2968, 0.0
        %v3097 = vmax.f32 %v2969, 0.0
        %v3098 = vmax.f32 %v2970, 0.0
        %v3099 = vmax.f32 %v2971, 0.0
        %v3100 = vmax.f32 %v2972, 0.0
        %v3101 = vmax.f32 %v2973, 0.0
        %v3102 = vmax.f32 %v2974, 0.0
        %v3103 = vmax.f32 %v2975, 0.0
        %v3104 = vmax.f32 %v2976, 0.0
        %v3105 = vmax.f32 %v2977, 0.0
        %v3106 = vmax.f32 %v2978, 0.0
        %v3107 = vmax.f32 %v2979, 0.0
        %v3108 = vmax.f32 %v2980, 0.0
        %v3109 = vmax.f32 %v2981, 0.0
        %v3110 = vmax.f32 %v2982, 0.0
        %v3111 = vmax.f32 %v2983, 0.0
        %v3112 = vmax.f32 %v2984, 0.0
        %v3113 = vmax.f32 %v2985, 0.0
        %v3114 = vmax.f32 %v2986, 0.0
        %v3115 = vmax.f32 %v2987, 0.0
        %v3116 = vmax.f32 %v2988, 0.0
        %v3117 = vmax.f32 %v2989, 0.0
        %v3118 = vmax.f32 %v2990, 0.0
        %v3119 = vmax.f32 %v2991, 0.0
        %v3120 = vmax.f32 %v2992, 0.0
        %v3121 = vmax.f32 %v2993, 0.0
        %v3122 = vmax.f32 %v2994, 0.0
        %v3123 = vmax.f32 %v2995, 0.0
        %v3124 = vmax.f32 %v2996, 0.0
        %v3125 = vmax.f32 %v2997, 0.0
        %v3126 = vmax.f32 %v2998, 0.0
        %v3127 = vmax.f32 %v2999, 0.0
        %v3128 = vmax.f32 %v3000, 0.0
        %v3129 = vmax.f32 %v3001, 0.0
        %v3130 = vmax.f32 %v3002, 0.0
        %v3131 = vmax.f32 %v3003, 0.0
        %v3132 = vmax.f32 %v3004, 0.0
        %v3133 = vmax.f32 %v3005, 0.0
        %v3134 = vmax.f32 %v3006, 0.0
        %v3135 = vmax.f32 %v3007, 0.0
        %v3136 = vmax.f32 %v3008, 0.0
        %v3137 = vmax.f32 %v3009, 0.0
        %v3138 = vmax.f32 %v3010, 0.0
        %v3139 = vmax.f32 %v3011, 0.0
        %v3140 = vmax.f32 %v3012, 0.0
        %v3141 = vmax.f32 %v3013, 0.0
        %v3142 = vmax.f32 %v3014, 0.0
        %v3143 = vmax.f32 %v3015, 0.0
        %v3144 = vmax.f32 %v3016, 0.0
        %v3145 = vmax.f32 %v3017, 0.0
        %v3146 = vmax.f32 %v3018, 0.0
        %v3147 = vmax.f32 %v3019, 0.0
        %v3148 = vmax.f32 %v3020, 0.0
        %v3149 = vmax.f32 %v3021, 0.0
        %v3150 = vmax.f32 %v3022, 0.0
        %v3151 = vmax.f32 %v3023, 0.0
        %v3152 = vmax.f32 %v3024, 0.0
        %v3153 = vmax.f32 %v3025, 0.0
        %v3154 = vmax.f32 %v3026, 0.0
        %v3155 = vmax.f32 %v3027, 0.0
        %v3156 = vmax.f32 %v3028, 0.0
        %v3157 = vmax.f32 %v3029, 0.0
        %v3158 = vmax.f32 %v3030, 0.0
        %v3159 = vmax.f32 %v3031, 0.0
        %v3160 = vmax.f32 %v3032, 0.0
        %v3161 = vmax.f32 %v3033, 0.0
        %v3162 = vmax.f32 %v3034, 0.0
        %v3163 = vmax.f32 %v3035, 0.0
        %v3164 = vmax.f32 %v3036, 0.0
        %v3165 = vmax.f32 %v3037, 0.0
        %v3166 = vmax.f32 %v3038, 0.0
        %v3167 = vmax.f32 %v3039, 0.0
        %v3168 = vld [vmem:[#allocation11] sm:$0xff]
        %v3169 = vld [vmem:[#allocation11 + $0x8] sm:$0xff]
        %v3170 = vld [vmem:[#allocation11 + $0x10] sm:$0xff]
        %v3171 = vld [vmem:[#allocation11 + $0x18] sm:$0xff]
        %v3172 = vld [vmem:[#allocation13] sm:$0x1]
        %v3174 = vlaneseq
        %v3175 = vshrl.u32 %v3174, 7
        %v3176 = vsub.s32 0, %v3175
        %v3177 = vrot.slane %v3172, %v3176
        %v3180 = vsel %vm455, %v3040, 0
        %v3183 = vsel %vm455, %v3041, 0
        %v3186 = vsel %vm455, %v3042, 0
        %v3189 = vsel %vm455, %v3043, 0
        %v3192 = vsel %vm455, %v3044, 0
        %v3195 = vsel %vm455, %v3045, 0
        %v3198 = vsel %vm455, %v3046, 0
        %v3201 = vsel %vm455, %v3047, 0
        %v3204 = vsel %vm455, %v3048, 0
        %v3207 = vsel %vm455, %v3049, 0
        %v3210 = vsel %vm455, %v3050, 0
        %v3213 = vsel %vm455, %v3051, 0
        %v3216 = vsel %vm455, %v3052, 0
        %v3219 = vsel %vm455, %v3053, 0
        %v3222 = vsel %vm455, %v3054, 0
        %v3225 = vsel %vm455, %v3055, 0
        %v3228 = vsel %vm455, %v3056, 0
        %v3231 = vsel %vm455, %v3057, 0
        %v3234 = vsel %vm455, %v3058, 0
        %v3237 = vsel %vm455, %v3059, 0
        %v3240 = vsel %vm455, %v3060, 0
        %v3243 = vsel %vm455, %v3061, 0
        %v3246 = vsel %vm455, %v3062, 0
        %v3249 = vsel %vm455, %v3063, 0
        %v3252 = vsel %vm455, %v3064, 0
        %v3255 = vsel %vm455, %v3065, 0
        %v3258 = vsel %vm455, %v3066, 0
        %v3261 = vsel %vm455, %v3067, 0
        %v3264 = vsel %vm455, %v3068, 0
        %v3267 = vsel %vm455, %v3069, 0
        %v3270 = vsel %vm455, %v3070, 0
        %v3273 = vsel %vm455, %v3071, 0
        %v3276 = vsel %vm455, %v3072, 0
        %v3279 = vsel %vm455, %v3073, 0
        %v3282 = vsel %vm455, %v3074, 0
        %v3285 = vsel %vm455, %v3075, 0
        %v3288 = vsel %vm455, %v3076, 0
        %v3291 = vsel %vm455, %v3077, 0
        %v3294 = vsel %vm455, %v3078, 0
        %v3297 = vsel %vm455, %v3079, 0
        %v3300 = vsel %vm455, %v3080, 0
        %v3303 = vsel %vm455, %v3081, 0
        %v3306 = vsel %vm455, %v3082, 0
        %v3309 = vsel %vm455, %v3083, 0
        %v3312 = vsel %vm455, %v3084, 0
        %v3315 = vsel %vm455, %v3085, 0
        %v3318 = vsel %vm455, %v3086, 0
        %v3321 = vsel %vm455, %v3087, 0
        %v3324 = vsel %vm455, %v3088, 0
        %v3327 = vsel %vm455, %v3089, 0
        %v3330 = vsel %vm455, %v3090, 0
        %v3333 = vsel %vm455, %v3091, 0
        %v3336 = vsel %vm455, %v3092, 0
        %v3339 = vsel %vm455, %v3093, 0
        %v3342 = vsel %vm455, %v3094, 0
        %v3345 = vsel %vm455, %v3095, 0
        %v3348 = vsel %vm455, %v3096, 0
        %v3351 = vsel %vm455, %v3097, 0
        %v3354 = vsel %vm455, %v3098, 0
        %v3357 = vsel %vm455, %v3099, 0
        %v3360 = vsel %vm455, %v3100, 0
        %v3363 = vsel %vm455, %v3101, 0
        %v3366 = vsel %vm455, %v3102, 0
        %v3369 = vsel %vm455, %v3103, 0
        %v3372 = vsel %vm455, %v3104, 0
        %v3375 = vsel %vm455, %v3105, 0
        %v3378 = vsel %vm455, %v3106, 0
        %v3381 = vsel %vm455, %v3107, 0
        %v3384 = vsel %vm455, %v3108, 0
        %v3387 = vsel %vm455, %v3109, 0
        %v3390 = vsel %vm455, %v3110, 0
        %v3393 = vsel %vm455, %v3111, 0
        %v3396 = vsel %vm455, %v3112, 0
        %v3399 = vsel %vm455, %v3113, 0
        %v3402 = vsel %vm455, %v3114, 0
        %v3405 = vsel %vm455, %v3115, 0
        %v3408 = vsel %vm455, %v3116, 0
        %v3411 = vsel %vm455, %v3117, 0
        %v3414 = vsel %vm455, %v3118, 0
        %v3417 = vsel %vm455, %v3119, 0
        %v3420 = vsel %vm455, %v3120, 0
        %v3423 = vsel %vm455, %v3121, 0
        %v3426 = vsel %vm455, %v3122, 0
        %v3429 = vsel %vm455, %v3123, 0
        %v3432 = vsel %vm455, %v3124, 0
        %v3435 = vsel %vm455, %v3125, 0
        %v3438 = vsel %vm455, %v3126, 0
        %v3441 = vsel %vm455, %v3127, 0
        %v3444 = vsel %vm455, %v3128, 0
        %v3447 = vsel %vm455, %v3129, 0
        %v3450 = vsel %vm455, %v3130, 0
        %v3453 = vsel %vm455, %v3131, 0
        %v3456 = vsel %vm455, %v3132, 0
        %v3459 = vsel %vm455, %v3133, 0
        %v3462 = vsel %vm455, %v3134, 0
        %v3465 = vsel %vm455, %v3135, 0
        %v3468 = vsel %vm455, %v3136, 0
        %v3471 = vsel %vm455, %v3137, 0
        %v3474 = vsel %vm455, %v3138, 0
        %v3477 = vsel %vm455, %v3139, 0
        %v3480 = vsel %vm455, %v3140, 0
        %v3483 = vsel %vm455, %v3141, 0
        %v3486 = vsel %vm455, %v3142, 0
        %v3489 = vsel %vm455, %v3143, 0
        %v3492 = vsel %vm455, %v3144, 0
        %v3495 = vsel %vm455, %v3145, 0
        %v3498 = vsel %vm455, %v3146, 0
        %v3501 = vsel %vm455, %v3147, 0
        %v3504 = vsel %vm455, %v3148, 0
        %v3507 = vsel %vm455, %v3149, 0
        %v3510 = vsel %vm455, %v3150, 0
        %v3513 = vsel %vm455, %v3151, 0
        %v3516 = vsel %vm455, %v3152, 0
        %v3519 = vsel %vm455, %v3153, 0
        %v3522 = vsel %vm455, %v3154, 0
        %v3525 = vsel %vm455, %v3155, 0
        %v3528 = vsel %vm455, %v3156, 0
        %v3531 = vsel %vm455, %v3157, 0
        %v3534 = vsel %vm455, %v3158, 0
        %v3537 = vsel %vm455, %v3159, 0
        %v3540 = vsel %vm455, %v3160, 0
        %v3543 = vsel %vm455, %v3161, 0
        %v3546 = vsel %vm455, %v3162, 0
        %v3549 = vsel %vm455, %v3163, 0
        %v3552 = vsel %vm455, %v3164, 0
        %v3555 = vsel %vm455, %v3165, 0
        %v3558 = vsel %vm455, %v3166, 0
        %v3561 = vsel %vm455, %v3167, 0
        %3563 = vmatprep.subr.mxu0 0.0
        %3564 = vmatpush1.msra.mxu0 %v3168
        %3565 = vmatprep.subr.mxu0 0.0
        %3566 = vmatpush1.msra.mxu0 %v3169
        %3567 = vmatprep.subr.mxu0 0.0
        %3568 = vmatpush1.msra.mxu0 %v3170
        %3569 = vmatprep.subr.mxu0 0.0
        %3570 = vmatpush1.msra.mxu0 %v3171
        %3571 = vmatprep.subr.mxu0 0.0
        %3572 = vmatpush1.msra.mxu0 0.0
        %3573 = vmatprep.subr.mxu0 0.0
        %3574 = vmatpush1.msra.mxu0 0.0
        %3575 = vmatprep.subr.mxu0 0.0
        %3576 = vmatpush1.msra.mxu0 0.0
        %3577 = vmatprep.subr.mxu0 0.0
        %3578 = vmatpush1.msra.mxu0 0.0
        %3579 = vmatprep.subr.mxu0 0.0
        %3580 = vmatpush1.msra.mxu0 0.0
        %3581 = vmatprep.subr.mxu0 0.0
        %3582 = vmatpush1.msra.mxu0 0.0
        %3583 = vmatprep.subr.mxu0 0.0
        %3584 = vmatpush1.msra.mxu0 0.0
        %3585 = vmatprep.subr.mxu0 0.0
        %3586 = vmatpush1.msra.mxu0 0.0
        %3587 = vmatprep.subr.mxu0 0.0
        %3588 = vmatpush1.msra.mxu0 0.0
        %3589 = vmatprep.subr.mxu0 0.0
        %3590 = vmatpush1.msra.mxu0 0.0
        %3591 = vmatprep.subr.mxu0 0.0
        %3592 = vmatpush1.msra.mxu0 0.0
        %3593 = vmatprep.subr.mxu0 0.0
        %3594 = vmatpush1.msra.mxu0 0.0
        %3595 = vmatprep.subr.mxu0 0.0
        %3596 = vmatpush1.msra.mxu0 0.0
        %3597 = vmatprep.subr.mxu0 0.0
        %3598 = vmatpush1.msra.mxu0 0.0
        %3599 = vmatprep.subr.mxu0 0.0
        %3600 = vmatpush1.msra.mxu0 0.0
        %3601 = vmatprep.subr.mxu0 0.0
        %3602 = vmatpush1.msra.mxu0 0.0
        %3603 = vmatprep.subr.mxu0 0.0
        %3604 = vmatpush1.msra.mxu0 0.0
        %3605 = vmatprep.subr.mxu0 0.0
        %3606 = vmatpush1.msra.mxu0 0.0
        %3607 = vmatprep.subr.mxu0 0.0
        %3608 = vmatpush1.msra.mxu0 0.0
        %3609 = vmatprep.subr.mxu0 0.0
        %3610 = vmatpush1.msra.mxu0 0.0
        %3611 = vmatprep.subr.mxu0 0.0
        %3612 = vmatpush1.msra.mxu0 0.0
        %3613 = vmatprep.subr.mxu0 0.0
        %3614 = vmatpush1.msra.mxu0 0.0
        %3615 = vmatprep.subr.mxu0 0.0
        %3616 = vmatpush1.msra.mxu0 0.0
        %3617 = vmatprep.subr.mxu0 0.0
        %3618 = vmatpush1.msra.mxu0 0.0
        %3619 = vmatprep.subr.mxu0 0.0
        %3620 = vmatpush1.msra.mxu0 0.0
        %3621 = vmatprep.subr.mxu0 0.0
        %3622 = vmatpush1.msra.mxu0 0.0
        %3623 = vmatprep.subr.mxu0 0.0
        %3624 = vmatpush1.msra.mxu0 0.0
        %3625 = vmatprep.subr.mxu0 0.0
        %3626 = vmatpush1.msra.mxu0 0.0
        %3627 = vmatprep.mubr.f32.mxu0 0.0
        %3628 = vmatmul.mubr.f32.gmra.mrb[0].mxu0 %v3180
        %v3629 = vpop.f32.mrb[0].mxu0
        %v3630 = vadd.f32 %v3177, %v3629
        %v3631 = vpop.f32.mrb[0].mxu0
        %3632 = vmatprep.mubr.f32.mxu0 0.0
        %3633 = vmatmul.mubr.f32.gmra.mrb[0].mxu0 %v3183
        %v3634 = vpop.f32.mrb[0].mxu0
        %v3635 = vadd.f32 %v3177, %v3634
        %v3636 = vpop.f32.mrb[0].mxu0
        %3637 = vmatprep.mubr.f32.mxu0 0.0
        %3638 = vmatmul.mubr.f32.gmra.mrb[0].mxu0 %v3186
        %v3639 = vpop.f32.mrb[0].mxu0
        %v3640 = vadd.f32 %v3177, %v3639
        %v3641 = vpop.f32.mrb[0].mxu0
        %3642 = vmatprep.mubr.f32.mxu0 0.0
        %3643 = vmatmul.mubr.f32.gmra.mrb[0].mxu0 %v3189
        %v3644 = vpop.f32.mrb[0].mxu0
        %v3645 = vadd.f32 %v3177, %v3644
        %v3646 = vpop.f32.mrb[0].mxu0
        %3647 = vmatprep.mubr.f32.mxu0 0.0
        %3648 = vmatmul.mubr.f32.gmra.mrb[0].mxu0 %v3192
        %v3649 = vpop.f32.mrb[0].mxu0
        %v3650 = vadd.f32 %v3177, %v3649
        %v3651 = vpop.f32.mrb[0].mxu0
        %3652 = vmatprep.mubr.f32.mxu0 0.0
        %3653 = vmatmul.mubr.f32.gmra.mrb[0].mxu0 %v3195
        %v3654 = vpop.f32.mrb[0].mxu0
        %v3655 = vadd.f32 %v3177, %v3654
        %v3656 = vpop.f32.mrb[0].mxu0
        %3657 = vmatprep.mubr.f32.mxu0 0.0
        %3658 = vmatmul.mubr.f32.gmra.mrb[0].mxu0 %v3198
        %v3659 = vpop.f32.mrb[0].mxu0
        %v3660 = vadd.f32 %v3177, %v3659
        %v3661 = vpop.f32.mrb[0].mxu0
        %3662 = vmatprep.mubr.f32.mxu0 0.0
        %3663 = vmatmul.mubr.f32.gmra.mrb[0].mxu0 %v3201
        %v3664 = vpop.f32.mrb[0].mxu0
        %v3665 = vadd.f32 %v3177, %v3664
        %v3666 = vpop.f32.mrb[0].mxu0
        %3667 = vmatprep.mubr.f32.mxu0 0.0
        %3668 = vmatmul.mubr.f32.gmra.mrb[0].mxu0 %v3204
        %v3669 = vpop.f32.mrb[0].mxu0
        %v3670 = vadd.f32 %v3177, %v3669
        %v3671 = vpop.f32.mrb[0].mxu0
        %3672 = vmatprep.mubr.f32.mxu0 0.0
        %3673 = vmatmul.mubr.f32.gmra.mrb[0].mxu0 %v3207
        %v3674 = vpop.f32.mrb[0].mxu0
        %v3675 = vadd.f32 %v3177, %v3674
        %v3676 = vpop.f32.mrb[0].mxu0
        %3677 = vmatprep.mubr.f32.mxu0 0.0
        %3678 = vmatmul.mubr.f32.gmra.mrb[0].mxu0 %v3210
        %v3679 = vpop.f32.mrb[0].mxu0
        %v3680 = vadd.f32 %v3177, %v3679
        %v3681 = vpop.f32.mrb[0].mxu0
        %3682 = vmatprep.mubr.f32.mxu0 0.0
        %3683 = vmatmul.mubr.f32.gmra.mrb[0].mxu0 %v3213
        %v3684 = vpop.f32.mrb[0].mxu0
        %v3685 = vadd.f32 %v3177, %v3684
        %v3686 = vpop.f32.mrb[0].mxu0
        %3687 = vmatprep.mubr.f32.mxu0 0.0
        %3688 = vmatmul.mubr.f32.gmra.mrb[0].mxu0 %v3216
        %v3689 = vpop.f32.mrb[0].mxu0
        %v3690 = vadd.f32 %v3177, %v3689
        %v3691 = vpop.f32.mrb[0].mxu0
        %3692 = vmatprep.mubr.f32.mxu0 0.0
        %3693 = vmatmul.mubr.f32.gmra.mrb[0].mxu0 %v3219
        %v3694 = vpop.f32.mrb[0].mxu0
        %v3695 = vadd.f32 %v3177, %v3694
        %v3696 = vpop.f32.mrb[0].mxu0
        %3697 = vmatprep.mubr.f32.mxu0 0.0
        %3698 = vmatmul.mubr.f32.gmra.mrb[0].mxu0 %v3222
        %v3699 = vpop.f32.mrb[0].mxu0
        %v3700 = vadd.f32 %v3177, %v3699
        %v3701 = vpop.f32.mrb[0].mxu0
        %3702 = vmatprep.mubr.f32.mxu0 0.0
        %3703 = vmatmul.mubr.f32.gmra.mrb[0].mxu0 %v3225
        %v3704 = vpop.f32.mrb[0].mxu0
        %v3705 = vadd.f32 %v3177, %v3704
        %v3706 = vpop.f32.mrb[0].mxu0
        %3707 = vmatprep.mubr.f32.mxu0 0.0
        %3708 = vmatmul.mubr.f32.gmra.mrb[0].mxu0 %v3228
        %v3709 = vpop.f32.mrb[0].mxu0
        %v3710 = vadd.f32 %v3177, %v3709
        %v3711 = vpop.f32.mrb[0].mxu0
        %3712 = vmatprep.mubr.f32.mxu0 0.0
        %3713 = vmatmul.mubr.f32.gmra.mrb[0].mxu0 %v3231
        %v3714 = vpop.f32.mrb[0].mxu0
        %v3715 = vadd.f32 %v3177, %v3714
        %v3716 = vpop.f32.mrb[0].mxu0
        %3717 = vmatprep.mubr.f32.mxu0 0.0
        %3718 = vmatmul.mubr.f32.gmra.mrb[0].mxu0 %v3234
        %v3719 = vpop.f32.mrb[0].mxu0
        %v3720 = vadd.f32 %v3177, %v3719
        %v3721 = vpop.f32.mrb[0].mxu0
        %3722 = vmatprep.mubr.f32.mxu0 0.0
        %3723 = vmatmul.mubr.f32.gmra.mrb[0].mxu0 %v3237
        %v3724 = vpop.f32.mrb[0].mxu0
        %v3725 = vadd.f32 %v3177, %v3724
        %v3726 = vpop.f32.mrb[0].mxu0
        %3727 = vmatprep.mubr.f32.mxu0 0.0
        %3728 = vmatmul.mubr.f32.gmra.mrb[0].mxu0 %v3240
        %v3729 = vpop.f32.mrb[0].mxu0
        %v3730 = vadd.f32 %v3177, %v3729
        %v3731 = vpop.f32.mrb[0].mxu0
        %3732 = vmatprep.mubr.f32.mxu0 0.0
        %3733 = vmatmul.mubr.f32.gmra.mrb[0].mxu0 %v3243
        %v3734 = vpop.f32.mrb[0].mxu0
        %v3735 = vadd.f32 %v3177, %v3734
        %v3736 = vpop.f32.mrb[0].mxu0
        %3737 = vmatprep.mubr.f32.mxu0 0.0
        %3738 = vmatmul.mubr.f32.gmra.mrb[0].mxu0 %v3246
        %v3739 = vpop.f32.mrb[0].mxu0
        %v3740 = vadd.f32 %v3177, %v3739
        %v3741 = vpop.f32.mrb[0].mxu0
        %3742 = vmatprep.mubr.f32.mxu0 0.0
        %3743 = vmatmul.mubr.f32.gmra.mrb[0].mxu0 %v3249
        %v3744 = vpop.f32.mrb[0].mxu0
        %v3745 = vadd.f32 %v3177, %v3744
        %v3746 = vpop.f32.mrb[0].mxu0
        %3747 = vmatprep.mubr.f32.mxu0 0.0
        %3748 = vmatmul.mubr.f32.gmra.mrb[0].mxu0 %v3252
        %v3749 = vpop.f32.mrb[0].mxu0
        %v3750 = vadd.f32 %v3177, %v3749
        %v3751 = vpop.f32.mrb[0].mxu0
        %3752 = vmatprep.mubr.f32.mxu0 0.0
        %3753 = vmatmul.mubr.f32.gmra.mrb[0].mxu0 %v3255
        %v3754 = vpop.f32.mrb[0].mxu0
        %v3755 = vadd.f32 %v3177, %v3754
        %v3756 = vpop.f32.mrb[0].mxu0
        %3757 = vmatprep.mubr.f32.mxu0 0.0
        %3758 = vmatmul.mubr.f32.gmra.mrb[0].mxu0 %v3258
        %v3759 = vpop.f32.mrb[0].mxu0
        %v3760 = vadd.f32 %v3177, %v3759
        %v3761 = vpop.f32.mrb[0].mxu0
        %3762 = vmatprep.mubr.f32.mxu0 0.0
        %3763 = vmatmul.mubr.f32.gmra.mrb[0].mxu0 %v3261
        %v3764 = vpop.f32.mrb[0].mxu0
        %v3765 = vadd.f32 %v3177, %v3764
        %v3766 = vpop.f32.mrb[0].mxu0
        %3767 = vmatprep.mubr.f32.mxu0 0.0
        %3768 = vmatmul.mubr.f32.gmra.mrb[0].mxu0 %v3264
        %v3769 = vpop.f32.mrb[0].mxu0
        %v3770 = vadd.f32 %v3177, %v3769
        %v3771 = vpop.f32.mrb[0].mxu0
        %3772 = vmatprep.mubr.f32.mxu0 0.0
        %3773 = vmatmul.mubr.f32.gmra.mrb[0].mxu0 %v3267
        %v3774 = vpop.f32.mrb[0].mxu0
        %v3775 = vadd.f32 %v3177, %v3774
        %v3776 = vpop.f32.mrb[0].mxu0
        %3777 = vmatprep.mubr.f32.mxu0 0.0
        %3778 = vmatmul.mubr.f32.gmra.mrb[0].mxu0 %v3270
        %v3779 = vpop.f32.mrb[0].mxu0
        %v3780 = vadd.f32 %v3177, %v3779
        %v3781 = vpop.f32.mrb[0].mxu0
        %3782 = vmatprep.mubr.f32.mxu0 0.0
        %3783 = vmatmul.mubr.f32.gmra.mrb[0].mxu0 %v3273
        %v3784 = vpop.f32.mrb[0].mxu0
        %v3785 = vadd.f32 %v3177, %v3784
        %v3786 = vpop.f32.mrb[0].mxu0
        %3787 = vmatprep.mubr.f32.mxu0 0.0
        %3788 = vmatmul.mubr.f32.gmra.mrb[0].mxu0 %v3276
        %v3789 = vpop.f32.mrb[0].mxu0
        %v3790 = vadd.f32 %v3177, %v3789
        %v3791 = vpop.f32.mrb[0].mxu0
        %3792 = vmatprep.mubr.f32.mxu0 0.0
        %3793 = vmatmul.mubr.f32.gmra.mrb[0].mxu0 %v3279
        %v3794 = vpop.f32.mrb[0].mxu0
        %v3795 = vadd.f32 %v3177, %v3794
        %v3796 = vpop.f32.mrb[0].mxu0
        %3797 = vmatprep.mubr.f32.mxu0 0.0
        %3798 = vmatmul.mubr.f32.gmra.mrb[0].mxu0 %v3282
        %v3799 = vpop.f32.mrb[0].mxu0
        %v3800 = vadd.f32 %v3177, %v3799
        %v3801 = vpop.f32.mrb[0].mxu0
        %3802 = vmatprep.mubr.f32.mxu0 0.0
        %3803 = vmatmul.mubr.f32.gmra.mrb[0].mxu0 %v3285
        %v3804 = vpop.f32.mrb[0].mxu0
        %v3805 = vadd.f32 %v3177, %v3804
        %v3806 = vpop.f32.mrb[0].mxu0
        %3807 = vmatprep.mubr.f32.mxu0 0.0
        %3808 = vmatmul.mubr.f32.gmra.mrb[0].mxu0 %v3288
        %v3809 = vpop.f32.mrb[0].mxu0
        %v3810 = vadd.f32 %v3177, %v3809
        %v3811 = vpop.f32.mrb[0].mxu0
        %3812 = vmatprep.mubr.f32.mxu0 0.0
        %3813 = vmatmul.mubr.f32.gmra.mrb[0].mxu0 %v3291
        %v3814 = vpop.f32.mrb[0].mxu0
        %v3815 = vadd.f32 %v3177, %v3814
        %v3816 = vpop.f32.mrb[0].mxu0
        %3817 = vmatprep.mubr.f32.mxu0 0.0
        %3818 = vmatmul.mubr.f32.gmra.mrb[0].mxu0 %v3294
        %v3819 = vpop.f32.mrb[0].mxu0
        %v3820 = vadd.f32 %v3177, %v3819
        %v3821 = vpop.f32.mrb[0].mxu0
        %3822 = vmatprep.mubr.f32.mxu0 0.0
        %3823 = vmatmul.mubr.f32.gmra.mrb[0].mxu0 %v3297
        %v3824 = vpop.f32.mrb[0].mxu0
        %v3825 = vadd.f32 %v3177, %v3824
        %v3826 = vpop.f32.mrb[0].mxu0
        %3827 = vmatprep.mubr.f32.mxu0 0.0
        %3828 = vmatmul.mubr.f32.gmra.mrb[0].mxu0 %v3300
        %v3829 = vpop.f32.mrb[0].mxu0
        %v3830 = vadd.f32 %v3177, %v3829
        %v3831 = vpop.f32.mrb[0].mxu0
        %3832 = vmatprep.mubr.f32.mxu0 0.0
        %3833 = vmatmul.mubr.f32.gmra.mrb[0].mxu0 %v3303
        %v3834 = vpop.f32.mrb[0].mxu0
        %v3835 = vadd.f32 %v3177, %v3834
        %v3836 = vpop.f32.mrb[0].mxu0
        %3837 = vmatprep.mubr.f32.mxu0 0.0
        %3838 = vmatmul.mubr.f32.gmra.mrb[0].mxu0 %v3306
        %v3839 = vpop.f32.mrb[0].mxu0
        %v3840 = vadd.f32 %v3177, %v3839
        %v3841 = vpop.f32.mrb[0].mxu0
        %3842 = vmatprep.mubr.f32.mxu0 0.0
        %3843 = vmatmul.mubr.f32.gmra.mrb[0].mxu0 %v3309
        %v3844 = vpop.f32.mrb[0].mxu0
        %v3845 = vadd.f32 %v3177, %v3844
        %v3846 = vpop.f32.mrb[0].mxu0
        %3847 = vmatprep.mubr.f32.mxu0 0.0
        %3848 = vmatmul.mubr.f32.gmra.mrb[0].mxu0 %v3312
        %v3849 = vpop.f32.mrb[0].mxu0
        %v3850 = vadd.f32 %v3177, %v3849
        %v3851 = vpop.f32.mrb[0].mxu0
        %3852 = vmatprep.mubr.f32.mxu0 0.0
        %3853 = vmatmul.mubr.f32.gmra.mrb[0].mxu0 %v3315
        %v3854 = vpop.f32.mrb[0].mxu0
        %v3855 = vadd.f32 %v3177, %v3854
        %v3856 = vpop.f32.mrb[0].mxu0
        %3857 = vmatprep.mubr.f32.mxu0 0.0
        %3858 = vmatmul.mubr.f32.gmra.mrb[0].mxu0 %v3318
        %v3859 = vpop.f32.mrb[0].mxu0
        %v3860 = vadd.f32 %v3177, %v3859
        %v3861 = vpop.f32.mrb[0].mxu0
        %3862 = vmatprep.mubr.f32.mxu0 0.0
        %3863 = vmatmul.mubr.f32.gmra.mrb[0].mxu0 %v3321
        %v3864 = vpop.f32.mrb[0].mxu0
        %v3865 = vadd.f32 %v3177, %v3864
        %v3866 = vpop.f32.mrb[0].mxu0
        %3867 = vmatprep.mubr.f32.mxu0 0.0
        %3868 = vmatmul.mubr.f32.gmra.mrb[0].mxu0 %v3324
        %v3869 = vpop.f32.mrb[0].mxu0
        %v3870 = vadd.f32 %v3177, %v3869
        %v3871 = vpop.f32.mrb[0].mxu0
        %3872 = vmatprep.mubr.f32.mxu0 0.0
        %3873 = vmatmul.mubr.f32.gmra.mrb[0].mxu0 %v3327
        %v3874 = vpop.f32.mrb[0].mxu0
        %v3875 = vadd.f32 %v3177, %v3874
        %v3876 = vpop.f32.mrb[0].mxu0
        %3877 = vmatprep.mubr.f32.mxu0 0.0
        %3878 = vmatmul.mubr.f32.gmra.mrb[0].mxu0 %v3330
        %v3879 = vpop.f32.mrb[0].mxu0
        %v3880 = vadd.f32 %v3177, %v3879
        %v3881 = vpop.f32.mrb[0].mxu0
        %3882 = vmatprep.mubr.f32.mxu0 0.0
        %3883 = vmatmul.mubr.f32.gmra.mrb[0].mxu0 %v3333
        %v3884 = vpop.f32.mrb[0].mxu0
        %v3885 = vadd.f32 %v3177, %v3884
        %v3886 = vpop.f32.mrb[0].mxu0
        %3887 = vmatprep.mubr.f32.mxu0 0.0
        %3888 = vmatmul.mubr.f32.gmra.mrb[0].mxu0 %v3336
        %v3889 = vpop.f32.mrb[0].mxu0
        %v3890 = vadd.f32 %v3177, %v3889
        %v3891 = vpop.f32.mrb[0].mxu0
        %3892 = vmatprep.mubr.f32.mxu0 0.0
        %3893 = vmatmul.mubr.f32.gmra.mrb[0].mxu0 %v3339
        %v3894 = vpop.f32.mrb[0].mxu0
        %v3895 = vadd.f32 %v3177, %v3894
        %v3896 = vpop.f32.mrb[0].mxu0
        %3897 = vmatprep.mubr.f32.mxu0 0.0
        %3898 = vmatmul.mubr.f32.gmra.mrb[0].mxu0 %v3342
        %v3899 = vpop.f32.mrb[0].mxu0
        %v3900 = vadd.f32 %v3177, %v3899
        %v3901 = vpop.f32.mrb[0].mxu0
        %3902 = vmatprep.mubr.f32.mxu0 0.0
        %3903 = vmatmul.mubr.f32.gmra.mrb[0].mxu0 %v3345
        %v3904 = vpop.f32.mrb[0].mxu0
        %v3905 = vadd.f32 %v3177, %v3904
        %v3906 = vpop.f32.mrb[0].mxu0
        %3907 = vmatprep.mubr.f32.mxu0 0.0
        %3908 = vmatmul.mubr.f32.gmra.mrb[0].mxu0 %v3348
        %v3909 = vpop.f32.mrb[0].mxu0
        %v3910 = vadd.f32 %v3177, %v3909
        %v3911 = vpop.f32.mrb[0].mxu0
        %3912 = vmatprep.mubr.f32.mxu0 0.0
        %3913 = vmatmul.mubr.f32.gmra.mrb[0].mxu0 %v3351
        %v3914 = vpop.f32.mrb[0].mxu0
        %v3915 = vadd.f32 %v3177, %v3914
        %v3916 = vpop.f32.mrb[0].mxu0
        %3917 = vmatprep.mubr.f32.mxu0 0.0
        %3918 = vmatmul.mubr.f32.gmra.mrb[0].mxu0 %v3354
        %v3919 = vpop.f32.mrb[0].mxu0
        %v3920 = vadd.f32 %v3177, %v3919
        %v3921 = vpop.f32.mrb[0].mxu0
        %3922 = vmatprep.mubr.f32.mxu0 0.0
        %3923 = vmatmul.mubr.f32.gmra.mrb[0].mxu0 %v3357
        %v3924 = vpop.f32.mrb[0].mxu0
        %v3925 = vadd.f32 %v3177, %v3924
        %v3926 = vpop.f32.mrb[0].mxu0
        %3927 = vmatprep.mubr.f32.mxu0 0.0
        %3928 = vmatmul.mubr.f32.gmra.mrb[0].mxu0 %v3360
        %v3929 = vpop.f32.mrb[0].mxu0
        %v3930 = vadd.f32 %v3177, %v3929
        %v3931 = vpop.f32.mrb[0].mxu0
        %3932 = vmatprep.mubr.f32.mxu0 0.0
        %3933 = vmatmul.mubr.f32.gmra.mrb[0].mxu0 %v3363
        %v3934 = vpop.f32.mrb[0].mxu0
        %v3935 = vadd.f32 %v3177, %v3934
        %v3936 = vpop.f32.mrb[0].mxu0
        %3937 = vmatprep.mubr.f32.mxu0 0.0
        %3938 = vmatmul.mubr.f32.gmra.mrb[0].mxu0 %v3366
        %v3939 = vpop.f32.mrb[0].mxu0
        %v3940 = vadd.f32 %v3177, %v3939
        %v3941 = vpop.f32.mrb[0].mxu0
        %3942 = vmatprep.mubr.f32.mxu0 0.0
        %3943 = vmatmul.mubr.f32.gmra.mrb[0].mxu0 %v3369
        %v3944 = vpop.f32.mrb[0].mxu0
        %v3945 = vadd.f32 %v3177, %v3944
        %v3946 = vpop.f32.mrb[0].mxu0
        %3947 = vmatprep.mubr.f32.mxu0 0.0
        %3948 = vmatmul.mubr.f32.gmra.mrb[0].mxu0 %v3372
        %v3949 = vpop.f32.mrb[0].mxu0
        %v3950 = vadd.f32 %v3177, %v3949
        %v3951 = vpop.f32.mrb[0].mxu0
        %3952 = vmatprep.mubr.f32.mxu0 0.0
        %3953 = vmatmul.mubr.f32.gmra.mrb[0].mxu0 %v3375
        %v3954 = vpop.f32.mrb[0].mxu0
        %v3955 = vadd.f32 %v3177, %v3954
        %v3956 = vpop.f32.mrb[0].mxu0
        %3957 = vmatprep.mubr.f32.mxu0 0.0
        %3958 = vmatmul.mubr.f32.gmra.mrb[0].mxu0 %v3378
        %v3959 = vpop.f32.mrb[0].mxu0
        %v3960 = vadd.f32 %v3177, %v3959
        %v3961 = vpop.f32.mrb[0].mxu0
        %3962 = vmatprep.mubr.f32.mxu0 0.0
        %3963 = vmatmul.mubr.f32.gmra.mrb[0].mxu0 %v3381
        %v3964 = vpop.f32.mrb[0].mxu0
        %v3965 = vadd.f32 %v3177, %v3964
        %v3966 = vpop.f32.mrb[0].mxu0
        %3967 = vmatprep.mubr.f32.mxu0 0.0
        %3968 = vmatmul.mubr.f32.gmra.mrb[0].mxu0 %v3384
        %v3969 = vpop.f32.mrb[0].mxu0
        %v3970 = vadd.f32 %v3177, %v3969
        %v3971 = vpop.f32.mrb[0].mxu0
        %3972 = vmatprep.mubr.f32.mxu0 0.0
        %3973 = vmatmul.mubr.f32.gmra.mrb[0].mxu0 %v3387
        %v3974 = vpop.f32.mrb[0].mxu0
        %v3975 = vadd.f32 %v3177, %v3974
        %v3976 = vpop.f32.mrb[0].mxu0
        %3977 = vmatprep.mubr.f32.mxu0 0.0
        %3978 = vmatmul.mubr.f32.gmra.mrb[0].mxu0 %v3390
        %v3979 = vpop.f32.mrb[0].mxu0
        %v3980 = vadd.f32 %v3177, %v3979
        %v3981 = vpop.f32.mrb[0].mxu0
        %3982 = vmatprep.mubr.f32.mxu0 0.0
        %3983 = vmatmul.mubr.f32.gmra.mrb[0].mxu0 %v3393
        %v3984 = vpop.f32.mrb[0].mxu0
        %v3985 = vadd.f32 %v3177, %v3984
        %v3986 = vpop.f32.mrb[0].mxu0
        %3987 = vmatprep.mubr.f32.mxu0 0.0
        %3988 = vmatmul.mubr.f32.gmra.mrb[0].mxu0 %v3396
        %v3989 = vpop.f32.mrb[0].mxu0
        %v3990 = vadd.f32 %v3177, %v3989
        %v3991 = vpop.f32.mrb[0].mxu0
        %3992 = vmatprep.mubr.f32.mxu0 0.0
        %3993 = vmatmul.mubr.f32.gmra.mrb[0].mxu0 %v3399
        %v3994 = vpop.f32.mrb[0].mxu0
        %v3995 = vadd.f32 %v3177, %v3994
        %v3996 = vpop.f32.mrb[0].mxu0
        %3997 = vmatprep.mubr.f32.mxu0 0.0
        %3998 = vmatmul.mubr.f32.gmra.mrb[0].mxu0 %v3402
        %v3999 = vpop.f32.mrb[0].mxu0
        %v4000 = vadd.f32 %v3177, %v3999
        %v4001 = vpop.f32.mrb[0].mxu0
        %4002 = vmatprep.mubr.f32.mxu0 0.0
        %4003 = vmatmul.mubr.f32.gmra.mrb[0].mxu0 %v3405
        %v4004 = vpop.f32.mrb[0].mxu0
        %v4005 = vadd.f32 %v3177, %v4004
        %v4006 = vpop.f32.mrb[0].mxu0
        %4007 = vmatprep.mubr.f32.mxu0 0.0
        %4008 = vmatmul.mubr.f32.gmra.mrb[0].mxu0 %v3408
        %v4009 = vpop.f32.mrb[0].mxu0
        %v4010 = vadd.f32 %v3177, %v4009
        %v4011 = vpop.f32.mrb[0].mxu0
        %4012 = vmatprep.mubr.f32.mxu0 0.0
        %4013 = vmatmul.mubr.f32.gmra.mrb[0].mxu0 %v3411
        %v4014 = vpop.f32.mrb[0].mxu0
        %v4015 = vadd.f32 %v3177, %v4014
        %v4016 = vpop.f32.mrb[0].mxu0
        %4017 = vmatprep.mubr.f32.mxu0 0.0
        %4018 = vmatmul.mubr.f32.gmra.mrb[0].mxu0 %v3414
        %v4019 = vpop.f32.mrb[0].mxu0
        %v4020 = vadd.f32 %v3177, %v4019
        %v4021 = vpop.f32.mrb[0].mxu0
        %4022 = vmatprep.mubr.f32.mxu0 0.0
        %4023 = vmatmul.mubr.f32.gmra.mrb[0].mxu0 %v3417
        %v4024 = vpop.f32.mrb[0].mxu0
        %v4025 = vadd.f32 %v3177, %v4024
        %v4026 = vpop.f32.mrb[0].mxu0
        %4027 = vmatprep.mubr.f32.mxu0 0.0
        %4028 = vmatmul.mubr.f32.gmra.mrb[0].mxu0 %v3420
        %v4029 = vpop.f32.mrb[0].mxu0
        %v4030 = vadd.f32 %v3177, %v4029
        %v4031 = vpop.f32.mrb[0].mxu0
        %4032 = vmatprep.mubr.f32.mxu0 0.0
        %4033 = vmatmul.mubr.f32.gmra.mrb[0].mxu0 %v3423
        %v4034 = vpop.f32.mrb[0].mxu0
        %v4035 = vadd.f32 %v3177, %v4034
        %v4036 = vpop.f32.mrb[0].mxu0
        %4037 = vmatprep.mubr.f32.mxu0 0.0
        %4038 = vmatmul.mubr.f32.gmra.mrb[0].mxu0 %v3426
        %v4039 = vpop.f32.mrb[0].mxu0
        %v4040 = vadd.f32 %v3177, %v4039
        %v4041 = vpop.f32.mrb[0].mxu0
        %4042 = vmatprep.mubr.f32.mxu0 0.0
        %4043 = vmatmul.mubr.f32.gmra.mrb[0].mxu0 %v3429
        %v4044 = vpop.f32.mrb[0].mxu0
        %v4045 = vadd.f32 %v3177, %v4044
        %v4046 = vpop.f32.mrb[0].mxu0
        %4047 = vmatprep.mubr.f32.mxu0 0.0
        %4048 = vmatmul.mubr.f32.gmra.mrb[0].mxu0 %v3432
        %v4049 = vpop.f32.mrb[0].mxu0
        %v4050 = vadd.f32 %v3177, %v4049
        %v4051 = vpop.f32.mrb[0].mxu0
        %4052 = vmatprep.mubr.f32.mxu0 0.0
        %4053 = vmatmul.mubr.f32.gmra.mrb[0].mxu0 %v3435
        %v4054 = vpop.f32.mrb[0].mxu0
        %v4055 = vadd.f32 %v3177, %v4054
        %v4056 = vpop.f32.mrb[0].mxu0
        %4057 = vmatprep.mubr.f32.mxu0 0.0
        %4058 = vmatmul.mubr.f32.gmra.mrb[0].mxu0 %v3438
        %v4059 = vpop.f32.mrb[0].mxu0
        %v4060 = vadd.f32 %v3177, %v4059
        %v4061 = vpop.f32.mrb[0].mxu0
        %4062 = vmatprep.mubr.f32.mxu0 0.0
        %4063 = vmatmul.mubr.f32.gmra.mrb[0].mxu0 %v3441
        %v4064 = vpop.f32.mrb[0].mxu0
        %v4065 = vadd.f32 %v3177, %v4064
        %v4066 = vpop.f32.mrb[0].mxu0
        %4067 = vmatprep.mubr.f32.mxu0 0.0
        %4068 = vmatmul.mubr.f32.gmra.mrb[0].mxu0 %v3444
        %v4069 = vpop.f32.mrb[0].mxu0
        %v4070 = vadd.f32 %v3177, %v4069
        %v4071 = vpop.f32.mrb[0].mxu0
        %4072 = vmatprep.mubr.f32.mxu0 0.0
        %4073 = vmatmul.mubr.f32.gmra.mrb[0].mxu0 %v3447
        %v4074 = vpop.f32.mrb[0].mxu0
        %v4075 = vadd.f32 %v3177, %v4074
        %v4076 = vpop.f32.mrb[0].mxu0
        %4077 = vmatprep.mubr.f32.mxu0 0.0
        %4078 = vmatmul.mubr.f32.gmra.mrb[0].mxu0 %v3450
        %v4079 = vpop.f32.mrb[0].mxu0
        %v4080 = vadd.f32 %v3177, %v4079
        %v4081 = vpop.f32.mrb[0].mxu0
        %4082 = vmatprep.mubr.f32.mxu0 0.0
        %4083 = vmatmul.mubr.f32.gmra.mrb[0].mxu0 %v3453
        %v4084 = vpop.f32.mrb[0].mxu0
        %v4085 = vadd.f32 %v3177, %v4084
        %v4086 = vpop.f32.mrb[0].mxu0
        %4087 = vmatprep.mubr.f32.mxu0 0.0
        %4088 = vmatmul.mubr.f32.gmra.mrb[0].mxu0 %v3456
        %v4089 = vpop.f32.mrb[0].mxu0
        %v4090 = vadd.f32 %v3177, %v4089
        %v4091 = vpop.f32.mrb[0].mxu0
        %4092 = vmatprep.mubr.f32.mxu0 0.0
        %4093 = vmatmul.mubr.f32.gmra.mrb[0].mxu0 %v3459
        %v4094 = vpop.f32.mrb[0].mxu0
        %v4095 = vadd.f32 %v3177, %v4094
        %v4096 = vpop.f32.mrb[0].mxu0
        %4097 = vmatprep.mubr.f32.mxu0 0.0
        %4098 = vmatmul.mubr.f32.gmra.mrb[0].mxu0 %v3462
        %v4099 = vpop.f32.mrb[0].mxu0
        %v4100 = vadd.f32 %v3177, %v4099
        %v4101 = vpop.f32.mrb[0].mxu0
        %4102 = vmatprep.mubr.f32.mxu0 0.0
        %4103 = vmatmul.mubr.f32.gmra.mrb[0].mxu0 %v3465
        %v4104 = vpop.f32.mrb[0].mxu0
        %v4105 = vadd.f32 %v3177, %v4104
        %v4106 = vpop.f32.mrb[0].mxu0
        %4107 = vmatprep.mubr.f32.mxu0 0.0
        %4108 = vmatmul.mubr.f32.gmra.mrb[0].mxu0 %v3468
        %v4109 = vpop.f32.mrb[0].mxu0
        %v4110 = vadd.f32 %v3177, %v4109
        %v4111 = vpop.f32.mrb[0].mxu0
        %4112 = vmatprep.mubr.f32.mxu0 0.0
        %4113 = vmatmul.mubr.f32.gmra.mrb[0].mxu0 %v3471
        %v4114 = vpop.f32.mrb[0].mxu0
        %v4115 = vadd.f32 %v3177, %v4114
        %v4116 = vpop.f32.mrb[0].mxu0
        %4117 = vmatprep.mubr.f32.mxu0 0.0
        %4118 = vmatmul.mubr.f32.gmra.mrb[0].mxu0 %v3474
        %v4119 = vpop.f32.mrb[0].mxu0
        %v4120 = vadd.f32 %v3177, %v4119
        %v4121 = vpop.f32.mrb[0].mxu0
        %4122 = vmatprep.mubr.f32.mxu0 0.0
        %4123 = vmatmul.mubr.f32.gmra.mrb[0].mxu0 %v3477
        %v4124 = vpop.f32.mrb[0].mxu0
        %v4125 = vadd.f32 %v3177, %v4124
        %v4126 = vpop.f32.mrb[0].mxu0
        %4127 = vmatprep.mubr.f32.mxu0 0.0
        %4128 = vmatmul.mubr.f32.gmra.mrb[0].mxu0 %v3480
        %v4129 = vpop.f32.mrb[0].mxu0
        %v4130 = vadd.f32 %v3177, %v4129
        %v4131 = vpop.f32.mrb[0].mxu0
        %4132 = vmatprep.mubr.f32.mxu0 0.0
        %4133 = vmatmul.mubr.f32.gmra.mrb[0].mxu0 %v3483
        %v4134 = vpop.f32.mrb[0].mxu0
        %v4135 = vadd.f32 %v3177, %v4134
        %v4136 = vpop.f32.mrb[0].mxu0
        %4137 = vmatprep.mubr.f32.mxu0 0.0
        %4138 = vmatmul.mubr.f32.gmra.mrb[0].mxu0 %v3486
        %v4139 = vpop.f32.mrb[0].mxu0
        %v4140 = vadd.f32 %v3177, %v4139
        %v4141 = vpop.f32.mrb[0].mxu0
        %4142 = vmatprep.mubr.f32.mxu0 0.0
        %4143 = vmatmul.mubr.f32.gmra.mrb[0].mxu0 %v3489
        %v4144 = vpop.f32.mrb[0].mxu0
        %v4145 = vadd.f32 %v3177, %v4144
        %v4146 = vpop.f32.mrb[0].mxu0
        %4147 = vmatprep.mubr.f32.mxu0 0.0
        %4148 = vmatmul.mubr.f32.gmra.mrb[0].mxu0 %v3492
        %v4149 = vpop.f32.mrb[0].mxu0
        %v4150 = vadd.f32 %v3177, %v4149
        %v4151 = vpop.f32.mrb[0].mxu0
        %4152 = vmatprep.mubr.f32.mxu0 0.0
        %4153 = vmatmul.mubr.f32.gmra.mrb[0].mxu0 %v3495
        %v4154 = vpop.f32.mrb[0].mxu0
        %v4155 = vadd.f32 %v3177, %v4154
        %v4156 = vpop.f32.mrb[0].mxu0
        %4157 = vmatprep.mubr.f32.mxu0 0.0
        %4158 = vmatmul.mubr.f32.gmra.mrb[0].mxu0 %v3498
        %v4159 = vpop.f32.mrb[0].mxu0
        %v4160 = vadd.f32 %v3177, %v4159
        %v4161 = vpop.f32.mrb[0].mxu0
        %4162 = vmatprep.mubr.f32.mxu0 0.0
        %4163 = vmatmul.mubr.f32.gmra.mrb[0].mxu0 %v3501
        %v4164 = vpop.f32.mrb[0].mxu0
        %v4165 = vadd.f32 %v3177, %v4164
        %v4166 = vpop.f32.mrb[0].mxu0
        %4167 = vmatprep.mubr.f32.mxu0 0.0
        %4168 = vmatmul.mubr.f32.gmra.mrb[0].mxu0 %v3504
        %v4169 = vpop.f32.mrb[0].mxu0
        %v4170 = vadd.f32 %v3177, %v4169
        %v4171 = vpop.f32.mrb[0].mxu0
        %4172 = vmatprep.mubr.f32.mxu0 0.0
        %4173 = vmatmul.mubr.f32.gmra.mrb[0].mxu0 %v3507
        %v4174 = vpop.f32.mrb[0].mxu0
        %v4175 = vadd.f32 %v3177, %v4174
        %v4176 = vpop.f32.mrb[0].mxu0
        %4177 = vmatprep.mubr.f32.mxu0 0.0
        %4178 = vmatmul.mubr.f32.gmra.mrb[0].mxu0 %v3510
        %v4179 = vpop.f32.mrb[0].mxu0
        %v4180 = vadd.f32 %v3177, %v4179
        %v4181 = vpop.f32.mrb[0].mxu0
        %4182 = vmatprep.mubr.f32.mxu0 0.0
        %4183 = vmatmul.mubr.f32.gmra.mrb[0].mxu0 %v3513
        %v4184 = vpop.f32.mrb[0].mxu0
        %v4185 = vadd.f32 %v3177, %v4184
        %v4186 = vpop.f32.mrb[0].mxu0
        %4187 = vmatprep.mubr.f32.mxu0 0.0
        %4188 = vmatmul.mubr.f32.gmra.mrb[0].mxu0 %v3516
        %v4189 = vpop.f32.mrb[0].mxu0
        %v4190 = vadd.f32 %v3177, %v4189
        %v4191 = vpop.f32.mrb[0].mxu0
        %4192 = vmatprep.mubr.f32.mxu0 0.0
        %4193 = vmatmul.mubr.f32.gmra.mrb[0].mxu0 %v3519
        %v4194 = vpop.f32.mrb[0].mxu0
        %v4195 = vadd.f32 %v3177, %v4194
        %v4196 = vpop.f32.mrb[0].mxu0
        %4197 = vmatprep.mubr.f32.mxu0 0.0
        %4198 = vmatmul.mubr.f32.gmra.mrb[0].mxu0 %v3522
        %v4199 = vpop.f32.mrb[0].mxu0
        %v4200 = vadd.f32 %v3177, %v4199
        %v4201 = vpop.f32.mrb[0].mxu0
        %4202 = vmatprep.mubr.f32.mxu0 0.0
        %4203 = vmatmul.mubr.f32.gmra.mrb[0].mxu0 %v3525
        %v4204 = vpop.f32.mrb[0].mxu0
        %v4205 = vadd.f32 %v3177, %v4204
        %v4206 = vpop.f32.mrb[0].mxu0
        %4207 = vmatprep.mubr.f32.mxu0 0.0
        %4208 = vmatmul.mubr.f32.gmra.mrb[0].mxu0 %v3528
        %v4209 = vpop.f32.mrb[0].mxu0
        %v4210 = vadd.f32 %v3177, %v4209
        %v4211 = vpop.f32.mrb[0].mxu0
        %4212 = vmatprep.mubr.f32.mxu0 0.0
        %4213 = vmatmul.mubr.f32.gmra.mrb[0].mxu0 %v3531
        %v4214 = vpop.f32.mrb[0].mxu0
        %v4215 = vadd.f32 %v3177, %v4214
        %v4216 = vpop.f32.mrb[0].mxu0
        %4217 = vmatprep.mubr.f32.mxu0 0.0
        %4218 = vmatmul.mubr.f32.gmra.mrb[0].mxu0 %v3534
        %v4219 = vpop.f32.mrb[0].mxu0
        %v4220 = vadd.f32 %v3177, %v4219
        %v4221 = vpop.f32.mrb[0].mxu0
        %4222 = vmatprep.mubr.f32.mxu0 0.0
        %4223 = vmatmul.mubr.f32.gmra.mrb[0].mxu0 %v3537
        %v4224 = vpop.f32.mrb[0].mxu0
        %v4225 = vadd.f32 %v3177, %v4224
        %v4226 = vpop.f32.mrb[0].mxu0
        %4227 = vmatprep.mubr.f32.mxu0 0.0
        %4228 = vmatmul.mubr.f32.gmra.mrb[0].mxu0 %v3540
        %v4229 = vpop.f32.mrb[0].mxu0
        %v4230 = vadd.f32 %v3177, %v4229
        %v4231 = vpop.f32.mrb[0].mxu0
        %4232 = vmatprep.mubr.f32.mxu0 0.0
        %4233 = vmatmul.mubr.f32.gmra.mrb[0].mxu0 %v3543
        %v4234 = vpop.f32.mrb[0].mxu0
        %v4235 = vadd.f32 %v3177, %v4234
        %v4236 = vpop.f32.mrb[0].mxu0
        %4237 = vmatprep.mubr.f32.mxu0 0.0
        %4238 = vmatmul.mubr.f32.gmra.mrb[0].mxu0 %v3546
        %v4239 = vpop.f32.mrb[0].mxu0
        %v4240 = vadd.f32 %v3177, %v4239
        %v4241 = vpop.f32.mrb[0].mxu0
        %4242 = vmatprep.mubr.f32.mxu0 0.0
        %4243 = vmatmul.mubr.f32.gmra.mrb[0].mxu0 %v3549
        %v4244 = vpop.f32.mrb[0].mxu0
        %v4245 = vadd.f32 %v3177, %v4244
        %v4246 = vpop.f32.mrb[0].mxu0
        %4247 = vmatprep.mubr.f32.mxu0 0.0
        %4248 = vmatmul.mubr.f32.gmra.mrb[0].mxu0 %v3552
        %v4249 = vpop.f32.mrb[0].mxu0
        %v4250 = vadd.f32 %v3177, %v4249
        %v4251 = vpop.f32.mrb[0].mxu0
        %4252 = vmatprep.mubr.f32.mxu0 0.0
        %4253 = vmatmul.mubr.f32.gmra.mrb[0].mxu0 %v3555
        %v4254 = vpop.f32.mrb[0].mxu0
        %v4255 = vadd.f32 %v3177, %v4254
        %v4256 = vpop.f32.mrb[0].mxu0
        %4257 = vmatprep.mubr.f32.mxu0 0.0
        %4258 = vmatmul.mubr.f32.gmra.mrb[0].mxu0 %v3558
        %v4259 = vpop.f32.mrb[0].mxu0
        %v4260 = vadd.f32 %v3177, %v4259
        %v4261 = vpop.f32.mrb[0].mxu0
        %4262 = vmatprep.mubr.f32.mxu0 0.0
        %4263 = vmatmul.mubr.f32.gmra.mrb[0].mxu0 %v3561
        %v4264 = vpop.f32.mrb[0].mxu0
        %v4265 = vadd.f32 %v3177, %v4264
        %v4266 = vpop.f32.mrb[0].mxu0
        %4267 = vdwg.mxu0
        %vm4268 = vcmask 64512
        %4269 = vst.msk [vmem:[%s431] sm:$0xff] %vm4268, %v3630
        %4270 = vst.msk [vmem:[%s431 + $0x8] sm:$0xff] %vm4268, %v3635
        %4271 = vst.msk [vmem:[%s431 + $0x10] sm:$0xff] %vm4268, %v3640
        %4272 = vst.msk [vmem:[%s431 + $0x18] sm:$0xff] %vm4268, %v3645
        %4273 = vst.msk [vmem:[%s431 + $0x20] sm:$0xff] %vm4268, %v3650
        %4274 = vst.msk [vmem:[%s431 + $0x28] sm:$0xff] %vm4268, %v3655
        %4275 = vst.msk [vmem:[%s431 + $0x30] sm:$0xff] %vm4268, %v3660
        %4276 = vst.msk [vmem:[%s431 + $0x38] sm:$0xff] %vm4268, %v3665
        %4277 = vst.msk [vmem:[%s431 + $0x40] sm:$0xff] %vm4268, %v3670
        %4278 = vst.msk [vmem:[%s431 + $0x48] sm:$0xff] %vm4268, %v3675
        %4279 = vst.msk [vmem:[%s431 + $0x50] sm:$0xff] %vm4268, %v3680
        %4280 = vst.msk [vmem:[%s431 + $0x58] sm:$0xff] %vm4268, %v3685
        %4281 = vst.msk [vmem:[%s431 + $0x60] sm:$0xff] %vm4268, %v3690
        %4282 = vst.msk [vmem:[%s431 + $0x68] sm:$0xff] %vm4268, %v3695
        %4283 = vst.msk [vmem:[%s431 + $0x70] sm:$0xff] %vm4268, %v3700
        %4284 = vst.msk [vmem:[%s431 + $0x78] sm:$0xff] %vm4268, %v3705
        %4285 = vst.msk [vmem:[%s431 + $0x80] sm:$0xff] %vm4268, %v3710
        %4286 = vst.msk [vmem:[%s431 + $0x88] sm:$0xff] %vm4268, %v3715
        %4287 = vst.msk [vmem:[%s431 + $0x90] sm:$0xff] %vm4268, %v3720
        %4288 = vst.msk [vmem:[%s431 + $0x98] sm:$0xff] %vm4268, %v3725
        %4289 = vst.msk [vmem:[%s431 + $0xa0] sm:$0xff] %vm4268, %v3730
        %4290 = vst.msk [vmem:[%s431 + $0xa8] sm:$0xff] %vm4268, %v3735
        %4291 = vst.msk [vmem:[%s431 + $0xb0] sm:$0xff] %vm4268, %v3740
        %4292 = vst.msk [vmem:[%s431 + $0xb8] sm:$0xff] %vm4268, %v3745
        %4293 = vst.msk [vmem:[%s431 + $0xc0] sm:$0xff] %vm4268, %v3750
        %4294 = vst.msk [vmem:[%s431 + $0xc8] sm:$0xff] %vm4268, %v3755
        %4295 = vst.msk [vmem:[%s431 + $0xd0] sm:$0xff] %vm4268, %v3760
        %4296 = vst.msk [vmem:[%s431 + $0xd8] sm:$0xff] %vm4268, %v3765
        %4297 = vst.msk [vmem:[%s431 + $0xe0] sm:$0xff] %vm4268, %v3770
        %4298 = vst.msk [vmem:[%s431 + $0xe8] sm:$0xff] %vm4268, %v3775
        %4299 = vst.msk [vmem:[%s431 + $0xf0] sm:$0xff] %vm4268, %v3780
        %4300 = vst.msk [vmem:[%s431 + $0xf8] sm:$0xff] %vm4268, %v3785
        %4301 = vst.msk [vmem:[%s431 + $0x100] sm:$0xff] %vm4268, %v3790
        %4302 = vst.msk [vmem:[%s431 + $0x108] sm:$0xff] %vm4268, %v3795
        %4303 = vst.msk [vmem:[%s431 + $0x110] sm:$0xff] %vm4268, %v3800
        %4304 = vst.msk [vmem:[%s431 + $0x118] sm:$0xff] %vm4268, %v3805
        %4305 = vst.msk [vmem:[%s431 + $0x120] sm:$0xff] %vm4268, %v3810
        %4306 = vst.msk [vmem:[%s431 + $0x128] sm:$0xff] %vm4268, %v3815
        %4307 = vst.msk [vmem:[%s431 + $0x130] sm:$0xff] %vm4268, %v3820
        %4308 = vst.msk [vmem:[%s431 + $0x138] sm:$0xff] %vm4268, %v3825
        %4309 = vst.msk [vmem:[%s431 + $0x140] sm:$0xff] %vm4268, %v3830
        %4310 = vst.msk [vmem:[%s431 + $0x148] sm:$0xff] %vm4268, %v3835
        %4311 = vst.msk [vmem:[%s431 + $0x150] sm:$0xff] %vm4268, %v3840
        %4312 = vst.msk [vmem:[%s431 + $0x158] sm:$0xff] %vm4268, %v3845
        %4313 = vst.msk [vmem:[%s431 + $0x160] sm:$0xff] %vm4268, %v3850
        %4314 = vst.msk [vmem:[%s431 + $0x168] sm:$0xff] %vm4268, %v3855
        %4315 = vst.msk [vmem:[%s431 + $0x170] sm:$0xff] %vm4268, %v3860
        %4316 = vst.msk [vmem:[%s431 + $0x178] sm:$0xff] %vm4268, %v3865
        %4317 = vst.msk [vmem:[%s431 + $0x180] sm:$0xff] %vm4268, %v3870
        %4318 = vst.msk [vmem:[%s431 + $0x188] sm:$0xff] %vm4268, %v3875
        %4319 = vst.msk [vmem:[%s431 + $0x190] sm:$0xff] %vm4268, %v3880
        %4320 = vst.msk [vmem:[%s431 + $0x198] sm:$0xff] %vm4268, %v3885
        %4321 = vst.msk [vmem:[%s431 + $0x1a0] sm:$0xff] %vm4268, %v3890
        %4322 = vst.msk [vmem:[%s431 + $0x1a8] sm:$0xff] %vm4268, %v3895
        %4323 = vst.msk [vmem:[%s431 + $0x1b0] sm:$0xff] %vm4268, %v3900
        %4324 = vst.msk [vmem:[%s431 + $0x1b8] sm:$0xff] %vm4268, %v3905
        %4325 = vst.msk [vmem:[%s431 + $0x1c0] sm:$0xff] %vm4268, %v3910
        %4326 = vst.msk [vmem:[%s431 + $0x1c8] sm:$0xff] %vm4268, %v3915
        %4327 = vst.msk [vmem:[%s431 + $0x1d0] sm:$0xff] %vm4268, %v3920
        %4328 = vst.msk [vmem:[%s431 + $0x1d8] sm:$0xff] %vm4268, %v3925
        %4329 = vst.msk [vmem:[%s431 + $0x1e0] sm:$0xff] %vm4268, %v3930
        %4330 = vst.msk [vmem:[%s431 + $0x1e8] sm:$0xff] %vm4268, %v3935
        %4331 = vst.msk [vmem:[%s431 + $0x1f0] sm:$0xff] %vm4268, %v3940
        %4332 = vst.msk [vmem:[%s431 + $0x1f8] sm:$0xff] %vm4268, %v3945
        %4333 = vst.msk [vmem:[%s431 + $0x200] sm:$0xff] %vm4268, %v3950
        %4334 = vst.msk [vmem:[%s431 + $0x208] sm:$0xff] %vm4268, %v3955
        %4335 = vst.msk [vmem:[%s431 + $0x210] sm:$0xff] %vm4268, %v3960
        %4336 = vst.msk [vmem:[%s431 + $0x218] sm:$0xff] %vm4268, %v3965
        %4337 = vst.msk [vmem:[%s431 + $0x220] sm:$0xff] %vm4268, %v3970
        %4338 = vst.msk [vmem:[%s431 + $0x228] sm:$0xff] %vm4268, %v3975
        %4339 = vst.msk [vmem:[%s431 + $0x230] sm:$0xff] %vm4268, %v3980
        %4340 = vst.msk [vmem:[%s431 + $0x238] sm:$0xff] %vm4268, %v3985
        %4341 = vst.msk [vmem:[%s431 + $0x240] sm:$0xff] %vm4268, %v3990
        %4342 = vst.msk [vmem:[%s431 + $0x248] sm:$0xff] %vm4268, %v3995
        %4343 = vst.msk [vmem:[%s431 + $0x250] sm:$0xff] %vm4268, %v4000
        %4344 = vst.msk [vmem:[%s431 + $0x258] sm:$0xff] %vm4268, %v4005
        %4345 = vst.msk [vmem:[%s431 + $0x260] sm:$0xff] %vm4268, %v4010
        %4346 = vst.msk [vmem:[%s431 + $0x268] sm:$0xff] %vm4268, %v4015
        %4347 = vst.msk [vmem:[%s431 + $0x270] sm:$0xff] %vm4268, %v4020
        %4348 = vst.msk [vmem:[%s431 + $0x278] sm:$0xff] %vm4268, %v4025
        %4349 = vst.msk [vmem:[%s431 + $0x280] sm:$0xff] %vm4268, %v4030
        %4350 = vst.msk [vmem:[%s431 + $0x288] sm:$0xff] %vm4268, %v4035
        %4351 = vst.msk [vmem:[%s431 + $0x290] sm:$0xff] %vm4268, %v4040
        %4352 = vst.msk [vmem:[%s431 + $0x298] sm:$0xff] %vm4268, %v4045
        %4353 = vst.msk [vmem:[%s431 + $0x2a0] sm:$0xff] %vm4268, %v4050
        %4354 = vst.msk [vmem:[%s431 + $0x2a8] sm:$0xff] %vm4268, %v4055
        %4355 = vst.msk [vmem:[%s431 + $0x2b0] sm:$0xff] %vm4268, %v4060
        %4356 = vst.msk [vmem:[%s431 + $0x2b8] sm:$0xff] %vm4268, %v4065
        %4357 = vst.msk [vmem:[%s431 + $0x2c0] sm:$0xff] %vm4268, %v4070
        %4358 = vst.msk [vmem:[%s431 + $0x2c8] sm:$0xff] %vm4268, %v4075
        %4359 = vst.msk [vmem:[%s431 + $0x2d0] sm:$0xff] %vm4268, %v4080
        %4360 = vst.msk [vmem:[%s431 + $0x2d8] sm:$0xff] %vm4268, %v4085
        %4361 = vst.msk [vmem:[%s431 + $0x2e0] sm:$0xff] %vm4268, %v4090
        %4362 = vst.msk [vmem:[%s431 + $0x2e8] sm:$0xff] %vm4268, %v4095
        %4363 = vst.msk [vmem:[%s431 + $0x2f0] sm:$0xff] %vm4268, %v4100
        %4364 = vst.msk [vmem:[%s431 + $0x2f8] sm:$0xff] %vm4268, %v4105
        %4365 = vst.msk [vmem:[%s431 + $0x300] sm:$0xff] %vm4268, %v4110
        %4366 = vst.msk [vmem:[%s431 + $0x308] sm:$0xff] %vm4268, %v4115
        %4367 = vst.msk [vmem:[%s431 + $0x310] sm:$0xff] %vm4268, %v4120
        %4368 = vst.msk [vmem:[%s431 + $0x318] sm:$0xff] %vm4268, %v4125
        %4369 = vst.msk [vmem:[%s431 + $0x320] sm:$0xff] %vm4268, %v4130
        %4370 = vst.msk [vmem:[%s431 + $0x328] sm:$0xff] %vm4268, %v4135
        %4371 = vst.msk [vmem:[%s431 + $0x330] sm:$0xff] %vm4268, %v4140
        %4372 = vst.msk [vmem:[%s431 + $0x338] sm:$0xff] %vm4268, %v4145
        %4373 = vst.msk [vmem:[%s431 + $0x340] sm:$0xff] %vm4268, %v4150
        %4374 = vst.msk [vmem:[%s431 + $0x348] sm:$0xff] %vm4268, %v4155
        %4375 = vst.msk [vmem:[%s431 + $0x350] sm:$0xff] %vm4268, %v4160
        %4376 = vst.msk [vmem:[%s431 + $0x358] sm:$0xff] %vm4268, %v4165
        %4377 = vst.msk [vmem:[%s431 + $0x360] sm:$0xff] %vm4268, %v4170
        %4378 = vst.msk [vmem:[%s431 + $0x368] sm:$0xff] %vm4268, %v4175
        %4379 = vst.msk [vmem:[%s431 + $0x370] sm:$0xff] %vm4268, %v4180
        %4380 = vst.msk [vmem:[%s431 + $0x378] sm:$0xff] %vm4268, %v4185
        %4381 = vst.msk [vmem:[%s431 + $0x380] sm:$0xff] %vm4268, %v4190
        %4382 = vst.msk [vmem:[%s431 + $0x388] sm:$0xff] %vm4268, %v4195
        %4383 = vst.msk [vmem:[%s431 + $0x390] sm:$0xff] %vm4268, %v4200
        %4384 = vst.msk [vmem:[%s431 + $0x398] sm:$0xff] %vm4268, %v4205
        %4385 = vst.msk [vmem:[%s431 + $0x3a0] sm:$0xff] %vm4268, %v4210
        %4386 = vst.msk [vmem:[%s431 + $0x3a8] sm:$0xff] %vm4268, %v4215
        %4387 = vst.msk [vmem:[%s431 + $0x3b0] sm:$0xff] %vm4268, %v4220
        %4388 = vst.msk [vmem:[%s431 + $0x3b8] sm:$0xff] %vm4268, %v4225
        %4389 = vst.msk [vmem:[%s431 + $0x3c0] sm:$0xff] %vm4268, %v4230
        %4390 = vst.msk [vmem:[%s431 + $0x3c8] sm:$0xff] %vm4268, %v4235
        %4391 = vst.msk [vmem:[%s431 + $0x3d0] sm:$0xff] %vm4268, %v4240
        %4392 = vst.msk [vmem:[%s431 + $0x3d8] sm:$0xff] %vm4268, %v4245
        %4393 = vst.msk [vmem:[%s431 + $0x3e0] sm:$0xff] %vm4268, %v4250
        %4394 = vst.msk [vmem:[%s431 + $0x3e8] sm:$0xff] %vm4268, %v4255
        %4395 = vst.msk [vmem:[%s431 + $0x3f0] sm:$0xff] %vm4268, %v4260
        %4396 = vst.msk [vmem:[%s431 + $0x3f8] sm:$0xff] %vm4268, %v4265
        %s4397 = sand.u32 %s221, 1
        %s4398 = scalar_lea.sflag [#allocation4], %s4397
        %s4399 = sand.u32 %s221, 1
        %s4400 = smul.addr %s4399, 1024
        %s4401 = scalar_lea.vmem [#allocation14], %s4400
        // Predicated region
        $region77: #{batched_mlp_forward.1} parent=47 // pred_check
          %p4402 = pneg %p231
        $region78: #{batched_mlp_forward.1} parent=47 // pred_check_branch
          %4404 = sbr.rel (%p4402) target = $region80
        $region79: #{batched_mlp_forward.1} parent=47 // pred_region
          %s4405 = smul.u32 32, %s35
          %s4406 = smul.u32 4, %s36
          %s4408 = ssub.s32 16384, 16384
          %4409 = vsyncadd %s4398, %s4408
          %s4410 = smul.addr %s4405, 4
          %s4411 = sadd.s32 %s4406, %s4410
          %s4412 = smul.addr %s34, 128
          %s4413 = sadd.s32 %s4411, %s4412
          %s4414 = smul.addr %s4413, 128
          %s4415 = scalar_lea.hbm %s7, %s4414
          %s4416 = sshll.u32 %s4401, 4
          %s4417 = int_to_ptr.vmem [resolvable:$true] %s4416
          %4422 = dma.vmem_to_hbm [thread:$0]  %s4417, 16384, %s4415, %s4398, 128, 128, 8
        $region80: #{batched_mlp_forward.1} parent=47 // pred_fallthru
          _
      $region48: #{batched_mlp_forward.1} parent=5 // pred_fallthru
        _
      %p4423 = scmp.le.s32.totalorder 2, %s24
      // Predicated region
      $region81: #{batched_mlp_forward.1} parent=5 // pred_check
        %p4424 = pneg %p4423
      $region82: #{batched_mlp_forward.1} parent=5 // pred_check_branch
        %4426 = sbr.rel (%p4424) target = $region84
      $region83: #{batched_mlp_forward.1} parent=5 // pred_region
        %s4427 = ssub.s32 %s24, 2
        // Predicated region
        $region85: #{batched_mlp_forward.1} parent=83 // pred_check
          %p4428 = pneg %p237
        $region86: #{batched_mlp_forward.1} parent=83 // pred_check_branch
          %4430 = sbr.rel (%p4428) target = $region88
        $region87: #{batched_mlp_forward.1} parent=83 // pred_region
          %s4431 = sand.u32 %s222, 1
          %s4432 = scalar_lea.sflag [#allocation4], %s4431
          %s4433 = sand.u32 %s222, 1
          %s4434 = smul.addr %s4433, 1024
          %s4435 = scalar_lea.vmem [#allocation14], %s4434
          %4436 = dma.done %s4432, 16384
        $region88: #{batched_mlp_forward.1} parent=83 // pred_fallthru
          _
      $region84: #{batched_mlp_forward.1} parent=5 // pred_fallthru
        _
    $region6: #{batched_mlp_forward.1} parent=1 // loop_footer
      %s28 = sadd.s32 1, %s24
    $region7: #{batched_mlp_forward.1} parent=1 // loop_footer_branch
      %23 = sbr.rel target = $region3
    $region8: #{batched_mlp_forward.1} parent=1 // loop_exit
      _
    %4437 = vsyncpa [#allocation3], 1
    %s4438 = scalar_lea.sflag [#allocation3], 1
    %4439 = vsyncpa %s4438, 1
    %4440 = vsyncpa [#allocation6], 1
    %s4441 = scalar_lea.sflag [#allocation6], 1
    %4442 = vsyncpa %s4441, 1
    %4443 = vsyncpa [#allocation9], 1
    %4444 = vsyncpa [#allocation12], 1
    %4445 = vsyncpa [#allocation4], 1
    %s4446 = scalar_lea.sflag [#allocation4], 1
    %4447 = vsyncpa %s4446, 1

</llo_original>
